<compile_context>
chip_gen: v7x
topology: tpu7x:2x2x1
jax: 0.10.0
libtpu: 0.0.40
codegen_flags: <defaults>
</compile_context>

<pallas_src>
import functools

import jax
import jax.numpy as jnp
from jax import lax
from jax.experimental import pallas as pl
from jax.experimental.pallas import tpu as pltpu


def _round_up(x, m):
    return ((x + m - 1) // m) * m


def _cdiv(a, b):
    return -(-a // b)


# --------------------------------------------------------------------------- #
# Fused Pallas kernel: Conv2d(3x3, stride=2, pad=1) + bias + LeakyReLU(0.2)
# One grid step = one (batch, output-row-tile).  The slab holds the even-phase
# padded rows followed by the odd-phase padded rows of the tile's receptive
# field, with the three width taps already packed into the channel axis, so
# the 9-tap reduction becomes three K=3*Cin matmuls accumulated in f32.
# --------------------------------------------------------------------------- #
def _conv3x3s2_kernel(s_ref, w_ref, bias_ref, o_ref, *, th, wo8, cin, slope):
    k3 = 3 * cin
    m = th * wo8
    s = s_ref[...]          # (1, 2*th+1, wo8, 3*cin) bf16: [even rows | odd]
    w = w_ref[...]          # (9*cin, Np)  bf16, rows ordered (kh, kw, ci)

    def taps(row0, kh):
        a = s[0, row0:row0 + th].reshape(m, k3)          # (th*wo8, 3*cin)
        return jnp.dot(a, w[kh * k3:(kh + 1) * k3],
                       preferred_element_type=jnp.float32)

    acc = taps(0, 0)              # kh=0 -> even padded rows 2r
    acc += taps(th + 1, 1)        # kh=1 -> odd  padded rows 2r+1
    acc += taps(1, 2)             # kh=2 -> even padded rows 2r+2
    acc += bias_ref[...]          # f32 epilogue (v5e: no bf16 VPU)
    y = jnp.where(acc > 0, acc, slope * acc)
    o_ref[...] = y[None].astype(o_ref.dtype)             # lane-dense store


# --------------------------------------------------------------------------- #
# Weight pre-packing (done once, outside the forward)
# --------------------------------------------------------------------------- #
def _pack_conv3x3(w_oihw, bias):
    """(Cout,Cin,3,3) -> lane-dense (9*Cin, Np) bf16 operand + f32 bias."""
    cout, cin, kh, kw = w_oihw.shape
    assert (kh, kw) == (3, 3)
    npad = _round_up(cout, 128)                    # e.g. 320 -> 384
    wmat = jnp.transpose(w_oihw, (2, 3, 1, 0)).reshape(9 * cin, cout)
    wmat = jnp.pad(wmat, ((0, 0), (0, npad - cout))).astype(jnp.bfloat16)
    b = jnp.pad(bias, (0, npad - cout)).astype(jnp.float32).reshape(1, npad)
    return {"w": wmat, "b": b, "cin": cin, "cout": cout, "npad": npad}


def prepack_deap_params(params):
    return {
        "down1": _pack_conv3x3(params["down1_w"], params["down1_b"]),
        "down2": _pack_conv3x3(params["down2_w"], params["down2_b"]),
    }


# --------------------------------------------------------------------------- #
# Conv wrapper: slab restructuring (single ~1x XLA gather pass) + fused kernel
# --------------------------------------------------------------------------- #
def conv3x3_s2_lrelu(x, h, w, packed, *, slope=0.2, target_m=1024,
                     out_dtype=jnp.bfloat16):
    """Conv2d(k=3, s=2, p=1) + LeakyReLU(0.2), PyTorch semantics.

    x: (B, >=h, >=w, >=Cin) activation that may carry row/col/channel padding;
    (h, w) are the true spatial dims.  Returns (y, ho, wo) with
    y: (B, Ho_pad, Wo8, Np) bf16 — lane-dense padded channels and 16-aligned
    width are carried downstream; consumers slice only where they must.
    """
    B = x.shape[0]
    cin, npad = packed["cin"], packed["npad"]
    ho = (h + 1) // 2
    wo = (w + 1) // 2
    wo8 = _round_up(wo, 16)       # bf16-tile friendly sublane width

    # -- tile selection: ~target_m output positions per step (amortizes the
    #    ~0.35us/step pipeline overhead, big-M MXU feed); keep >=2 grid steps
    #    when possible so both v7x TensorCores get work.  Keep m a multiple of
    #    16 (128 whenever wo8 is) for v5e's MXU / packed stores.
    th = max(1, min(ho, target_m // wo8))
    if B * _cdiv(ho, th) < 2 and ho > 1:
        th = (ho + 1) // 2
    nt = _cdiv(ho, th)
    ho_pad = nt * th
    m = th * wo8

    # -- input restructuring (pad + width-tap packing + row-phase split +
    #    overlapping row-slab gather).  ~1.5x of the input, written once and
    #    read once by the kernel — vs the old 2.25x im2col written+read plus
    #    extra pad/cast copies.
    xt = x[:, :h, :w, :cin].astype(jnp.bfloat16)
    xp = jnp.pad(xt, ((0, 0), (1, 2 * ho_pad - h), (1, 2 * wo8 - w), (0, 0)))
    # width taps: last dim becomes [kw=0 | kw=1 | kw=2] x Cin
    cols = jnp.concatenate(
        [xp[:, :, kw:kw + 2 * wo8:2, :] for kw in range(3)], axis=-1)
    xe = cols[:, 0::2]            # (B, ho_pad+1, wo8, 3*cin) even padded rows
    xo = cols[:, 1::2]            # (B, ho_pad,   wo8, 3*cin) odd  padded rows
    ie = jnp.arange(nt)[:, None] * th + jnp.arange(th + 1)[None, :]
    io = jnp.arange(nt)[:, None] * th + jnp.arange(th)[None, :]
    slab = jnp.concatenate(
        [jnp.take(xe, ie, axis=1), jnp.take(xo, io, axis=1)], axis=2)
    slab = slab.reshape(B * nt, 2 * th + 1, wo8, 3 * cin)

    kernel = functools.partial(_conv3x3s2_kernel, th=th, wo8=wo8, cin=cin,
                               slope=slope)
    out = pl.pallas_call(
        kernel,
        out_shape=jax.ShapeDtypeStruct((B * nt, m, npad), out_dtype),
        grid_spec=pltpu.PrefetchScalarGridSpec(
            num_scalar_prefetch=0,
            grid=(B * nt,),
            in_specs=[
                pl.BlockSpec((1, 2 * th + 1, wo8, 3 * cin),
                             lambda i: (i, 0, 0, 0)),
                pl.BlockSpec((9 * cin, npad), lambda i: (0, 0)),
                pl.BlockSpec((1, npad), lambda i: (0, 0)),
            ],
            out_specs=pl.BlockSpec((1, m, npad), lambda i: (i, 0, 0)),
        ),
        compiler_params=pltpu.CompilerParams(
            dimension_semantics=("parallel",),
            # explicit budget: sized for v7x's 64 MiB physical VMEM; per-step
            # usage here is <~10 MiB even at target_m=1024.
            vmem_limit_bytes=32 * 1024 * 1024,
        ),
    )(slab, packed["w"], packed["b"])

    y = out.reshape(B, ho_pad, wo8, npad)      # contiguous, no copy
    return y, ho, wo


# --------------------------------------------------------------------------- #
# Tiny placeholder layers stay on XLA (Cout=3 / Cin=6 would be ~2% lane util)
# --------------------------------------------------------------------------- #
def _conv1x1_lrelu_xla(x_nhwc, w_oihw, bias, slope=0.2, out_dtype=jnp.float32):
    cout, cin = w_oihw.shape[:2]
    y = jnp.einsum("bhwc,oc->bhwo", x_nhwc.astype(jnp.bfloat16),
                   w_oihw.reshape(cout, cin).astype(jnp.bfloat16),
                   preferred_element_type=jnp.float32)
    y = y + bias.reshape(1, 1, 1, -1)
    return jnp.where(y > 0, y, slope * y).astype(out_dtype)


# --------------------------------------------------------------------------- #
# Deterministic parameter init (synthetic; module __init__ gives the shapes)
# --------------------------------------------------------------------------- #
def init_conv(key, cout, cin, kh, kw):
    k1, k2 = jax.random.split(key)
    fan_in = cin * kh * kw
    wgt = jax.random.normal(k1, (cout, cin, kh, kw), jnp.float32) / jnp.sqrt(fan_in)
    b = jax.random.normal(k2, (cout,), jnp.float32) * 0.01
    return wgt, b


def init_deap_params(key, in_ch=3):
    keys = jax.random.split(key, 6)
    p = {}
    # TODO(synk): MCFM definition not provided in the source; placeholder = 1x1
    # conv fusing concat(x_query, x_key) (2*in_ch) -> 64 channels + LeakyReLU.
    p["mcfm_w"], p["mcfm_b"] = init_conv(keys[0], 64, 2 * in_ch, 1, 1)
    # down1: Conv2d(64, 128, 3, stride=2, pad=1) + LeakyReLU(0.2)
    p["down1_w"], p["down1_b"] = init_conv(keys[1], 128, 64, 3, 3)
    # down2: Conv2d(128, 320, 3, stride=2, pad=1) + LeakyReLU(0.2)
    p["down2_w"], p["down2_b"] = init_conv(keys[2], 320, 128, 3, 3)
    # TODO(synk): Stripformer backbone definition not provided; placeholder
    # consumes (x_query, inter, inter_down1, inter_down2) via 1x1 projections
    # + nearest upsample + residual add.
    p["bb0_w"], p["bb0_b"] = init_conv(keys[3], in_ch, 64, 1, 1)
    p["bb1_w"], p["bb1_b"] = init_conv(keys[4], in_ch, 128, 1, 1)
    p["bb2_w"], p["bb2_b"] = init_conv(keys[5], in_ch, 320, 1, 1)
    return p


# --------------------------------------------------------------------------- #
# DeAP forward (eval mode: returns `restored`)
# --------------------------------------------------------------------------- #
def deap_forward(params, packed, x_query_nchw, x_key_nchw):
    B, C, H, W = x_query_nchw.shape
    xq = jnp.transpose(x_query_nchw, (0, 2, 3, 1))  # NCHW -> NHWC
    xk = jnp.transpose(x_key_nchw, (0, 2, 3, 1))

    # inter = self.MCFM(x_query, x_key)  (placeholder, 64ch) — emits bf16 so
    # the HBM-bound down1 path reads half the bytes.
    inter = _conv1x1_lrelu_xla(jnp.concatenate([xq, xk], axis=-1),
                               params["mcfm_w"], params["mcfm_b"],
                               out_dtype=jnp.bfloat16)

    # inter_down1 = self.down1(inter); inter_down2 = self.down2(inter_down1)
    # — fused Pallas conv3x3/s2 + bias + LeakyReLU(0.2), bf16 activations,
    #   padded (lane-dense) layout carried between the two convs.
    d1, h1, w1 = conv3x3_s2_lrelu(inter, H, W, packed["down1"])
    d2, h2, w2 = conv3x3_s2_lrelu(d1, h1, w1, packed["down2"])

    # restored = self.backbone(x_query, inter, inter_down1, inter_down2)
    # (placeholder backbone on XLA).  bb2's weights are padded with zero input
    # channels so d2's padded 384-channel layout is consumed without a slice.
    f0 = _conv1x1_lrelu_xla(inter, params["bb0_w"], params["bb0_b"])
    f1 = _conv1x1_lrelu_xla(d1[:, :h1, :w1, :], params["bb1_w"], params["bb1_b"])
    bb2_w = params["bb2_w"]
    pad_c = d2.shape[-1] - bb2_w.shape[1]
    if pad_c:
        bb2_w = jnp.pad(bb2_w, ((0, 0), (0, pad_c), (0, 0), (0, 0)))
    f2 = _conv1x1_lrelu_xla(d2[:, :h2, :w2, :], bb2_w, params["bb2_b"])
    f1_up = jnp.repeat(jnp.repeat(f1, 2, axis=1), 2, axis=2)[:, :H, :W]
    f2_up = jnp.repeat(jnp.repeat(f2, 4, axis=1), 4, axis=2)[:, :H, :W]
    restored = xq + f0 + f1_up + f2_up

    return jnp.transpose(restored, (0, 3, 1, 2))    # back to NCHW


# --------------------------------------------------------------------------- #
# Reference (plain JAX lax.conv) for the down-conv path, correctness check.
# Same bf16 operand rounding as the kernel, f32 accumulation.
# --------------------------------------------------------------------------- #
def _ref_conv3x3_s2_lrelu(x_nhwc, w_oihw, bias, slope=0.2):
    w_hwio = jnp.transpose(w_oihw, (2, 3, 1, 0)).astype(jnp.bfloat16)
    y = lax.conv_general_dilated(
        x_nhwc.astype(jnp.bfloat16), w_hwio, window_strides=(2, 2),
        padding=((1, 1), (1, 1)), dimension_numbers=("NHWC", "HWIO", "NHWC"),
        preferred_element_type=jnp.float32)
    y = y + bias.reshape(1, 1, 1, -1)
    return jnp.where(y > 0, y, slope * y)


if __name__ == "__main__":
    key = jax.random.PRNGKey(0)
    kq, kk, kp, ki = jax.random.split(key, 4)

    B, C, H, W = 2, 3, 16, 16
    x_query = jax.random.normal(kq, (B, C, H, W), jnp.float32)
    x_key = jax.random.normal(kk, (B, C, H, W), jnp.float32)
    params = init_deap_params(kp, in_ch=C)
    packed = prepack_deap_params(params)

    fwd = jax.jit(functools.partial(deap_forward, params, packed))
    restored = jax.block_until_ready(fwd(x_query, x_key))
    assert restored.shape == (B, C, H, W)
    assert bool(jnp.all(jnp.isfinite(restored)))

    # Correctness of the fused Pallas conv kernel vs lax.conv (both use bf16
    # operands + f32 accumulation; the kernel additionally stores bf16
    # activations, hence the loose tolerance).
    inter_test = jax.random.normal(ki, (B, H, W, 64), jnp.float32).astype(jnp.bfloat16)
    d1, h1, w1 = conv3x3_s2_lrelu(inter_test, H, W, packed["down1"])
    d2, h2, w2 = conv3x3_s2_lrelu(d1, h1, w1, packed["down2"])
    got1 = d1[:, :h1, :w1, :packed["down1"]["cout"]].astype(jnp.float32)
    got2 = d2[:, :h2, :w2, :packed["down2"]["cout"]].astype(jnp.float32)
    ref1 = _ref_conv3x3_s2_lrelu(inter_test, params["down1_w"], params["down1_b"])
    ref2 = _ref_conv3x3_s2_lrelu(ref1.astype(jnp.bfloat16),
                                 params["down2_w"], params["down2_b"])
    jax.block_until_ready((got1, got2))
    assert got1.shape == (B, 8, 8, 128) and got2.shape == (B, 4, 4, 320)
    assert jnp.allclose(got1, ref1, atol=5e-2, rtol=5e-2)
    assert jnp.allclose(got2, ref2, atol=5e-2, rtol=5e-2)

    print("KERNEL_OK")
</pallas_src>

<mosaic_0001>
module attributes {stable_mosaic.version = 11 : i64} {
  func.func @_conv3x3s2_kernel(%arg0: i32, %arg1: memref<1x17x16x192xbf16, #tpu.memory_space<vmem>>, %arg2: memref<576x128xbf16, #tpu.memory_space<vmem>>, %arg3: memref<1x128xf32, #tpu.memory_space<vmem>>, %arg4: memref<1x128x128xbf16, #tpu.memory_space<vmem>>) attributes {dimension_semantics = [#tpu.dimension_semantics<parallel>], iteration_bounds = array<i64: 2>, scalar_prefetch = 0 : i64, scratch_operands = 0 : i64, tpu.core_type = #tpu.core_type<tc>, window_params = [{transform_indices = @transform_0, window_bounds = array<i64: 1, 17, 16, 192>}, {pipeline_mode = #tpu.pipeline_mode<synchronous>, transform_indices = @transform_1, window_bounds = array<i64: 576, 128>}, {pipeline_mode = #tpu.pipeline_mode<synchronous>, transform_indices = @transform_2, window_bounds = array<i64: 1, 128>}, {transform_indices = @transform_3, window_bounds = array<i64: 1, 128, 128>}]} {
    %c0 = arith.constant 0 : index
    %c0_0 = arith.constant 0 : index
    %c0_1 = arith.constant 0 : index
    %c0_2 = arith.constant 0 : index
    %0 = vector.load %arg1[%c0, %c0_0, %c0_1, %c0_2] : memref<1x17x16x192xbf16, #tpu.memory_space<vmem>>, vector<1x17x16x192xbf16>
    %c0_3 = arith.constant 0 : index
    %c0_4 = arith.constant 0 : index
    %1 = vector.load %arg2[%c0_3, %c0_4] : memref<576x128xbf16, #tpu.memory_space<vmem>>, vector<576x128xbf16>
    %2 = vector.extract_strided_slice %0 {offsets = [0, 0, 0, 0], sizes = [1, 8, 16, 192], strides = [1, 1, 1, 1]} : vector<1x17x16x192xbf16> to vector<1x8x16x192xbf16>
    %3 = vector.shape_cast %2 : vector<1x8x16x192xbf16> to vector<8x16x192xbf16>
    %4 = vector.shape_cast %3 : vector<8x16x192xbf16> to vector<128x192xbf16>
    %5 = vector.extract_strided_slice %1 {offsets = [0, 0], sizes = [192, 128], strides = [1, 1]} : vector<576x128xbf16> to vector<192x128xbf16>
    %cst = arith.constant dense<0.000000e+00> : vector<128x128xf32>
    %6 = tpu.matmul %4, %5, %cst {dimension_numbers = #tpu.dot_dimension_numbers<[1], [0], [0], [1], [0, 0, 1, 1], [], []>} : vector<128x192xbf16>, vector<192x128xbf16>, vector<128x128xf32> -> vector<128x128xf32>
    %7 = vector.extract_strided_slice %0 {offsets = [0, 9, 0, 0], sizes = [1, 8, 16, 192], strides = [1, 1, 1, 1]} : vector<1x17x16x192xbf16> to vector<1x8x16x192xbf16>
    %8 = vector.shape_cast %7 : vector<1x8x16x192xbf16> to vector<8x16x192xbf16>
    %9 = vector.shape_cast %8 : vector<8x16x192xbf16> to vector<128x192xbf16>
    %10 = vector.extract_strided_slice %1 {offsets = [192, 0], sizes = [192, 128], strides = [1, 1]} : vector<576x128xbf16> to vector<192x128xbf16>
    %cst_5 = arith.constant dense<0.000000e+00> : vector<128x128xf32>
    %11 = tpu.matmul %9, %10, %cst_5 {dimension_numbers = #tpu.dot_dimension_numbers<[1], [0], [0], [1], [0, 0, 1, 1], [], []>} : vector<128x192xbf16>, vector<192x128xbf16>, vector<128x128xf32> -> vector<128x128xf32>
    %12 = arith.addf %6, %11 : vector<128x128xf32>
    %13 = vector.extract_strided_slice %0 {offsets = [0, 1, 0, 0], sizes = [1, 8, 16, 192], strides = [1, 1, 1, 1]} : vector<1x17x16x192xbf16> to vector<1x8x16x192xbf16>
    %14 = vector.shape_cast %13 : vector<1x8x16x192xbf16> to vector<8x16x192xbf16>
    %15 = vector.shape_cast %14 : vector<8x16x192xbf16> to vector<128x192xbf16>
    %16 = vector.extract_strided_slice %1 {offsets = [384, 0], sizes = [192, 128], strides = [1, 1]} : vector<576x128xbf16> to vector<192x128xbf16>
    %cst_6 = arith.constant dense<0.000000e+00> : vector<128x128xf32>
    %17 = tpu.matmul %15, %16, %cst_6 {dimension_numbers = #tpu.dot_dimension_numbers<[1], [0], [0], [1], [0, 0, 1, 1], [], []>} : vector<128x192xbf16>, vector<192x128xbf16>, vector<128x128xf32> -> vector<128x128xf32>
    %18 = arith.addf %12, %17 : vector<128x128xf32>
    %c0_7 = arith.constant 0 : index
    %c0_8 = arith.constant 0 : index
    %19 = vector.load %arg3[%c0_7, %c0_8] : memref<1x128xf32, #tpu.memory_space<vmem>>, vector<1x128xf32>
    %20 = vector.broadcast %19 : vector<1x128xf32> to vector<128x128xf32>
    %21 = arith.addf %18, %20 : vector<128x128xf32>
    %cst_9 = arith.constant 0.000000e+00 : f32
    %22 = vector.broadcast %cst_9 : f32 to vector<128x128xf32>
    %23 = arith.cmpf ogt, %21, %22 : vector<128x128xf32>
    %cst_10 = arith.constant 2.000000e-01 : f32
    %24 = vector.broadcast %cst_10 : f32 to vector<128x128xf32>
    %25 = arith.mulf %24, %21 : vector<128x128xf32>
    %26 = arith.select %23, %21, %25 : vector<128x128xi1>, vector<128x128xf32>
    %27 = vector.shape_cast %26 : vector<128x128xf32> to vector<1x128x128xf32>
    %28 = arith.truncf %27 : vector<1x128x128xf32> to vector<1x128x128xbf16>
    %c0_11 = arith.constant 0 : index
    %c0_12 = arith.constant 0 : index
    %c0_13 = arith.constant 0 : index
    %29 = vector.load %arg4[%c0_11, %c0_12, %c0_13] : memref<1x128x128xbf16, #tpu.memory_space<vmem>>, vector<1x128x128xbf16>
    tpu.vector_store %arg4[%c0_11, %c0_12, %c0_13], %28 {strides = array<i32>} : memref<1x128x128xbf16, #tpu.memory_space<vmem>>, vector<1x128x128xbf16>,
    return
  }
  func.func @transform_0(%arg0: i32) -> (i32, i32, i32, i32) {
    %c0_i32 = arith.constant 0 : i32
    %c0_i32_0 = arith.constant 0 : i32
    %c0_i32_1 = arith.constant 0 : i32
    %c0_i32_2 = arith.constant 0 : i32
    return %arg0, %c0_i32, %c0_i32_0, %c0_i32_1 : i32, i32, i32, i32
  }
  func.func @transform_1(%arg0: i32) -> (i32, i32) {
    %c0_i32 = arith.constant 0 : i32
    %c0_i32_0 = arith.constant 0 : i32
    %c0_i32_1 = arith.constant 0 : i32
    return %c0_i32, %c0_i32_0 : i32, i32
  }
  func.func @transform_2(%arg0: i32) -> (i32, i32) {
    %c0_i32 = arith.constant 0 : i32
    %c0_i32_0 = arith.constant 0 : i32
    %c0_i32_1 = arith.constant 0 : i32
    return %c0_i32, %c0_i32_0 : i32, i32
  }
  func.func @transform_3(%arg0: i32) -> (i32, i32, i32) {
    %c0_i32 = arith.constant 0 : i32
    %c0_i32_0 = arith.constant 0 : i32
    %c0_i32_1 = arith.constant 0 : i32
    return %arg0, %c0_i32, %c0_i32_0 : i32, i32, i32
  }
}

module attributes {stable_mosaic.version = 11 : i64} {
  func.func @_conv3x3s2_kernel(%arg0: i32, %arg1: memref<1x9x16x384xbf16, #tpu.memory_space<vmem>>, %arg2: memref<1152x384xbf16, #tpu.memory_space<vmem>>, %arg3: memref<1x384xf32, #tpu.memory_space<vmem>>, %arg4: memref<1x64x384xbf16, #tpu.memory_space<vmem>>) attributes {dimension_semantics = [#tpu.dimension_semantics<parallel>], iteration_bounds = array<i64: 2>, scalar_prefetch = 0 : i64, scratch_operands = 0 : i64, tpu.core_type = #tpu.core_type<tc>, window_params = [{transform_indices = @transform_0, window_bounds = array<i64: 1, 9, 16, 384>}, {pipeline_mode = #tpu.pipeline_mode<synchronous>, transform_indices = @transform_1, window_bounds = array<i64: 1152, 384>}, {pipeline_mode = #tpu.pipeline_mode<synchronous>, transform_indices = @transform_2, window_bounds = array<i64: 1, 384>}, {transform_indices = @transform_3, window_bounds = array<i64: 1, 64, 384>}]} {
    %c0 = arith.constant 0 : index
    %c0_0 = arith.constant 0 : index
    %c0_1 = arith.constant 0 : index
    %c0_2 = arith.constant 0 : index
    %0 = vector.load %arg1[%c0, %c0_0, %c0_1, %c0_2] : memref<1x9x16x384xbf16, #tpu.memory_space<vmem>>, vector<1x9x16x384xbf16>
    %c0_3 = arith.constant 0 : index
    %c0_4 = arith.constant 0 : index
    %1 = vector.load %arg2[%c0_3, %c0_4] : memref<1152x384xbf16, #tpu.memory_space<vmem>>, vector<1152x384xbf16>
    %2 = vector.extract_strided_slice %0 {offsets = [0, 0, 0, 0], sizes = [1, 4, 16, 384], strides = [1, 1, 1, 1]} : vector<1x9x16x384xbf16> to vector<1x4x16x384xbf16>
    %3 = vector.shape_cast %2 : vector<1x4x16x384xbf16> to vector<4x16x384xbf16>
    %4 = vector.shape_cast %3 : vector<4x16x384xbf16> to vector<64x384xbf16>
    %5 = vector.extract_strided_slice %1 {offsets = [0, 0], sizes = [384, 384], strides = [1, 1]} : vector<1152x384xbf16> to vector<384x384xbf16>
    %cst = arith.constant dense<0.000000e+00> : vector<64x384xf32>
    %6 = tpu.matmul %4, %5, %cst {dimension_numbers = #tpu.dot_dimension_numbers<[1], [0], [0], [1], [0, 0, 1, 1], [], []>} : vector<64x384xbf16>, vector<384x384xbf16>, vector<64x384xf32> -> vector<64x384xf32>
    %7 = vector.extract_strided_slice %0 {offsets = [0, 5, 0, 0], sizes = [1, 4, 16, 384], strides = [1, 1, 1, 1]} : vector<1x9x16x384xbf16> to vector<1x4x16x384xbf16>
    %8 = vector.shape_cast %7 : vector<1x4x16x384xbf16> to vector<4x16x384xbf16>
    %9 = vector.shape_cast %8 : vector<4x16x384xbf16> to vector<64x384xbf16>
    %10 = vector.extract_strided_slice %1 {offsets = [384, 0], sizes = [384, 384], strides = [1, 1]} : vector<1152x384xbf16> to vector<384x384xbf16>
    %cst_5 = arith.constant dense<0.000000e+00> : vector<64x384xf32>
    %11 = tpu.matmul %9, %10, %cst_5 {dimension_numbers = #tpu.dot_dimension_numbers<[1], [0], [0], [1], [0, 0, 1, 1], [], []>} : vector<64x384xbf16>, vector<384x384xbf16>, vector<64x384xf32> -> vector<64x384xf32>
    %12 = arith.addf %6, %11 : vector<64x384xf32>
    %13 = vector.extract_strided_slice %0 {offsets = [0, 1, 0, 0], sizes = [1, 4, 16, 384], strides = [1, 1, 1, 1]} : vector<1x9x16x384xbf16> to vector<1x4x16x384xbf16>
    %14 = vector.shape_cast %13 : vector<1x4x16x384xbf16> to vector<4x16x384xbf16>
    %15 = vector.shape_cast %14 : vector<4x16x384xbf16> to vector<64x384xbf16>
    %16 = vector.extract_strided_slice %1 {offsets = [768, 0], sizes = [384, 384], strides = [1, 1]} : vector<1152x384xbf16> to vector<384x384xbf16>
    %cst_6 = arith.constant dense<0.000000e+00> : vector<64x384xf32>
    %17 = tpu.matmul %15, %16, %cst_6 {dimension_numbers = #tpu.dot_dimension_numbers<[1], [0], [0], [1], [0, 0, 1, 1], [], []>} : vector<64x384xbf16>, vector<384x384xbf16>, vector<64x384xf32> -> vector<64x384xf32>
    %18 = arith.addf %12, %17 : vector<64x384xf32>
    %c0_7 = arith.constant 0 : index
    %c0_8 = arith.constant 0 : index
    %19 = vector.load %arg3[%c0_7, %c0_8] : memref<1x384xf32, #tpu.memory_space<vmem>>, vector<1x384xf32>
    %20 = vector.broadcast %19 : vector<1x384xf32> to vector<64x384xf32>
    %21 = arith.addf %18, %20 : vector<64x384xf32>
    %cst_9 = arith.constant 0.000000e+00 : f32
    %22 = vector.broadcast %cst_9 : f32 to vector<64x384xf32>
    %23 = arith.cmpf ogt, %21, %22 : vector<64x384xf32>
    %cst_10 = arith.constant 2.000000e-01 : f32
    %24 = vector.broadcast %cst_10 : f32 to vector<64x384xf32>
    %25 = arith.mulf %24, %21 : vector<64x384xf32>
    %26 = arith.select %23, %21, %25 : vector<64x384xi1>, vector<64x384xf32>
    %27 = vector.shape_cast %26 : vector<64x384xf32> to vector<1x64x384xf32>
    %28 = arith.truncf %27 : vector<1x64x384xf32> to vector<1x64x384xbf16>
    %c0_11 = arith.constant 0 : index
    %c0_12 = arith.constant 0 : index
    %c0_13 = arith.constant 0 : index
    %29 = vector.load %arg4[%c0_11, %c0_12, %c0_13] : memref<1x64x384xbf16, #tpu.memory_space<vmem>>, vector<1x64x384xbf16>
    tpu.vector_store %arg4[%c0_11, %c0_12, %c0_13], %28 {strides = array<i32>} : memref<1x64x384xbf16, #tpu.memory_space<vmem>>, vector<1x64x384xbf16>,
    return
  }
  func.func @transform_0(%arg0: i32) -> (i32, i32, i32, i32) {
    %c0_i32 = arith.constant 0 : i32
    %c0_i32_0 = arith.constant 0 : i32
    %c0_i32_1 = arith.constant 0 : i32
    %c0_i32_2 = arith.constant 0 : i32
    return %arg0, %c0_i32, %c0_i32_0, %c0_i32_1 : i32, i32, i32, i32
  }
  func.func @transform_1(%arg0: i32) -> (i32, i32) {
    %c0_i32 = arith.constant 0 : i32
    %c0_i32_0 = arith.constant 0 : i32
    %c0_i32_1 = arith.constant 0 : i32
    return %c0_i32, %c0_i32_0 : i32, i32
  }
  func.func @transform_2(%arg0: i32) -> (i32, i32) {
    %c0_i32 = arith.constant 0 : i32
    %c0_i32_0 = arith.constant 0 : i32
    %c0_i32_1 = arith.constant 0 : i32
    return %c0_i32, %c0_i32_0 : i32, i32
  }
  func.func @transform_3(%arg0: i32) -> (i32, i32, i32) {
    %c0_i32 = arith.constant 0 : i32
    %c0_i32_0 = arith.constant 0 : i32
    %c0_i32_1 = arith.constant 0 : i32
    return %arg0, %c0_i32, %c0_i32_0 : i32, i32, i32
  }
}

</mosaic_0001>

<llo_original>
// kernel: deap_forward.2
$region0: #{deap_forward.2}
  #allocation0 [shape = 'u32[]', space=smem, size = 0x4, offset = 0x4, fixed_abs, tag = 'smem constant byte address 0x4 - core index']
  #allocation1 [shape = 'u32[144,128]{1,0:T(1,128)}', space=vmem, size = 0x12000, scoped, tag = 'internal scratch']
  %s0 = inlined_call_operand.vmem [shape: bf16[2,17,16,192], index: 0, kind: input, shape index: {}]
  %s1 = inlined_call_operand.vmem [shape: bf16[576,128], index: 1, kind: input, shape index: {}]
  %s2 = inlined_call_operand.vmem [shape: f32[1,128], index: 2, kind: input, shape index: {}]
  %s3 = inlined_call_operand.vmem [shape: bf16[2,128,128], index: 3, kind: output, shape index: {}]
  %s4 = sld [smem:[#allocation0]]
  $region45: #{deap_forward.2} parent=0
    _
  %s6 = ssub.s32 1, %s4
  %s7 = scalar_select 0, %s6, %s4
  loop: start=0, step=1, limit=4
  $region2: #{deap_forward.2} parent=0 // loop_pre_header
    _
  $region3: #{deap_forward.2} parent=0 // loop_header
    %s9 = sphi 0, %s13
    %p10 = scmp.ge.s32.totalorder %s9, 4
    %s19 = sphi 0, %s21
    %s22 = sphi 0, %s19
    %s23 = sphi 0, %s22
    %s39 = sphi 0, %s23
    %s43 = sphi 0, %s43
    %s45 = sphi 0, %s43
    %s46 = sphi 0, %s45
    %s60 = sphi 0, %s46
    %s64 = sphi 0, %s64
    %s66 = sphi 0, %s64
    %s67 = sphi 0, %s66
    %s81 = sphi 0, %s67
    %s87 = sphi 0, %s89
    %s90 = sphi 0, %s87
    %s91 = sphi 0, %s90
    %s107 = sphi 0, %s91
  $region4: #{deap_forward.2} parent=0 // loop_header_branch
    %12 = sbr.rel (%p10) target = $region8
  $region5: #{deap_forward.2} parent=0 // loop_body
    %s14 = ssub.s32 %s9, 1
    %s15 = ssub.s32 %s9, 2
    %s16 = sadd.s32 %s9, 1
    %s17 = ssub.s32 %s9, %s16
    %p18 = scmp.eq.s32.totalorder %s17, 0
    %s20 = sadd.s32 %s19, 1
    %s21 = scalar_select %p18, %s19, %s20
    %p24 = pneg %p18
    %p25 = scmp.eq.s32.totalorder %s9, 1
    %p26 = por %p24, %p25
    %p27 = scmp.ne.s32.totalorder %s19, %s22
    %p28 = scmp.eq.s32.totalorder %s9, 0
    %p29 = por %p27, %p28
    %p30 = scmp.ne.s32.totalorder %s19, %s22
    %p31 = scmp.eq.s32.totalorder %s14, 1
    %p32 = por %p30, %p31
    %p33 = scmp.ne.s32.totalorder %s22, %s23
    %p34 = scmp.eq.s32.totalorder %s14, 0
    %p35 = por %p33, %p34
    %p36 = scmp.ne.s32.totalorder %s22, %s23
    %p37 = scmp.eq.s32.totalorder %s15, 1
    %p38 = por %p36, %p37
    %p40 = scmp.ne.s32.totalorder %s23, %s39
    %p41 = scmp.eq.s32.totalorder %s15, 0
    %p42 = por %p40, %p41
    %s44 = sadd.s32 %s43, 1
    %p47 = scmp.eq.s32.totalorder %s9, 1
    %p48 = scmp.ne.s32.totalorder %s43, %s45
    %p49 = scmp.eq.s32.totalorder %s9, 0
    %p50 = por %p48, %p49
    %p51 = scmp.ne.s32.totalorder %s43, %s45
    %p52 = scmp.eq.s32.totalorder %s14, 1
    %p53 = por %p51, %p52
    %p54 = scmp.ne.s32.totalorder %s45, %s46
    %p55 = scmp.eq.s32.totalorder %s14, 0
    %p56 = por %p54, %p55
    %p57 = scmp.ne.s32.totalorder %s45, %s46
    %p58 = scmp.eq.s32.totalorder %s15, 1
    %p59 = por %p57, %p58
    %p61 = scmp.ne.s32.totalorder %s46, %s60
    %p62 = scmp.eq.s32.totalorder %s15, 0
    %p63 = por %p61, %p62
    %s65 = sadd.s32 %s64, 1
    %p68 = scmp.eq.s32.totalorder %s9, 1
    %p69 = scmp.ne.s32.totalorder %s64, %s66
    %p70 = scmp.eq.s32.totalorder %s9, 0
    %p71 = por %p69, %p70
    %p72 = scmp.ne.s32.totalorder %s64, %s66
    %p73 = scmp.eq.s32.totalorder %s14, 1
    %p74 = por %p72, %p73
    %p75 = scmp.ne.s32.totalorder %s66, %s67
    %p76 = scmp.eq.s32.totalorder %s14, 0
    %p77 = por %p75, %p76
    %p78 = scmp.ne.s32.totalorder %s66, %s67
    %p79 = scmp.eq.s32.totalorder %s15, 1
    %p80 = por %p78, %p79
    %p82 = scmp.ne.s32.totalorder %s67, %s81
    %p83 = scmp.eq.s32.totalorder %s15, 0
    %p84 = por %p82, %p83
    %s85 = ssub.s32 %s9, %s16
    %p86 = scmp.eq.s32.totalorder %s85, 0
    %s88 = sadd.s32 %s87, 1
    %s89 = scalar_select %p86, %s87, %s88
    %p92 = pneg %p86
    %p93 = scmp.eq.s32.totalorder %s9, 1
    %p94 = por %p92, %p93
    %p95 = scmp.ne.s32.totalorder %s87, %s90
    %p96 = scmp.eq.s32.totalorder %s9, 0
    %p97 = por %p95, %p96
    %p98 = scmp.ne.s32.totalorder %s87, %s90
    %p99 = scmp.eq.s32.totalorder %s14, 1
    %p100 = por %p98, %p99
    %p101 = scmp.ne.s32.totalorder %s90, %s91
    %p102 = scmp.eq.s32.totalorder %s14, 0
    %p103 = por %p101, %p102
    %p104 = scmp.ne.s32.totalorder %s90, %s91
    %p105 = scmp.eq.s32.totalorder %s15, 1
    %p106 = por %p104, %p105
    %p108 = scmp.ne.s32.totalorder %s91, %s107
    %p109 = scmp.eq.s32.totalorder %s15, 0
    %p110 = por %p108, %p109
    %p111 = scmp.le.s32.totalorder 1, %s9
    %p112 = scmp.lt.s32.totalorder %s9, 3
    %p113 = pnand %p111, %p112
    %p114 = pneg %p113
    // Predicated region
    $region9: #{deap_forward.2} parent=5 // pred_check
      _
    $region10: #{deap_forward.2} parent=5 // pred_check_branch
      %116 = sbr.rel (%p113) target = $region12
    $region11: #{deap_forward.2} parent=5 // pred_region
      %s117 = ssub.s32 %s9, 1
      // Predicated region
      $region13: #{deap_forward.2} parent=11 // pred_check
        %p118 = pneg %p56
      $region14: #{deap_forward.2} parent=11 // pred_check_branch
        %120 = sbr.rel (%p118) target = $region16
      $region15: #{deap_forward.2} parent=11 // pred_region
        _
      $region16: #{deap_forward.2} parent=11 // pred_fallthru
        _
      // Predicated region
      $region17: #{deap_forward.2} parent=11 // pred_check
        %p121 = pneg %p77
      $region18: #{deap_forward.2} parent=11 // pred_check_branch
        %123 = sbr.rel (%p121) target = $region20
      $region19: #{deap_forward.2} parent=11 // pred_region
        _
      $region20: #{deap_forward.2} parent=11 // pred_fallthru
        _
    $region12: #{deap_forward.2} parent=5 // pred_fallthru
      _
    %p124 = scmp.lt.s32.totalorder %s9, 2
    // Predicated region
    $region21: #{deap_forward.2} parent=5 // pred_check
      %p125 = pneg %p124
    $region22: #{deap_forward.2} parent=5 // pred_check_branch
      %127 = sbr.rel (%p125) target = $region24
    $region23: #{deap_forward.2} parent=5 // pred_region
      // Predicated region
      $region25: #{deap_forward.2} parent=23 // pred_check
        %p128 = pneg %p29
      $region26: #{deap_forward.2} parent=23 // pred_check_branch
        %130 = sbr.rel (%p128) target = $region28
      $region27: #{deap_forward.2} parent=23 // pred_region
        %p131 = scmp.lt.s32.totalorder %s9, 1
        %s132 = scalar_select %p131, %s9, 1
        %s133 = smul.addr %s132, 68
        %s134 = smul.addr %s133, 4
        %s135 = scalar_lea.vmem %s0, %s134
      $region28: #{deap_forward.2} parent=23 // pred_fallthru
        _
    $region24: #{deap_forward.2} parent=5 // pred_fallthru
      _
    %p136 = scmp.le.s32.totalorder 1, %s9
    %p137 = scmp.lt.s32.totalorder %s9, 3
    %p138 = pnand %p136, %p137
    %p139 = pneg %p138
    // Predicated region
    $region29: #{deap_forward.2} parent=5 // pred_check
      _
    $region30: #{deap_forward.2} parent=5 // pred_check_branch
      %141 = sbr.rel (%p138) target = $region32
    $region31: #{deap_forward.2} parent=5 // pred_region
      %s142 = ssub.s32 %s9, 1
      %p143 = scmp.lt.s32.totalorder %s14, 1
      %s144 = scalar_select %p143, %s14, 1
      %s145 = smul.addr %s144, 68
      %s146 = smul.addr %s145, 4
      %s147 = scalar_lea.vmem %s0, %s146
      %p148 = pneg %p35
      %p149 = pneg %p32
      %p150 = pneg %p56
      %p151 = pneg %p53
      %p152 = pneg %p77
      %p153 = pneg %p74
      %p154 = pneg %p103
      %p155 = pneg %p100
      %p156 = scmp.lt.s32.totalorder %s14, 1
      %s157 = scalar_select %p156, %s14, 1
      %s158 = smul.addr %s157, 16
      %s159 = smul.addr %s158, 4
      %s160 = scalar_lea.vmem %s3, %s159
      %p161 = scmp.lt.s32.totalorder %s14, 1
      %s162 = scalar_select %p161, %s14, 1
      %s163 = smul.addr %s162, 68
      %s164 = smul.addr %s163, 4
      %s165 = scalar_lea.vmem %s0, %s164
      %p166 = scmp.lt.s32.totalorder %s14, 1
      %s167 = scalar_select %p166, %s14, 1
      %s168 = smul.addr %s167, 16
      %s169 = smul.addr %s168, 4
      %s170 = scalar_lea.vmem %s3, %s169
      %v172 = vld [vmem:[%s165] sm:$0xff]
      %v173 = vld [vmem:[%s165 + $0x8] sm:$0xff]
      %v174 = vld [vmem:[%s165 + $0x10] sm:$0xff]
      %v175 = vld [vmem:[%s165 + $0x18] sm:$0xff]
      %v176 = vld [vmem:[%s165 + $0x20] sm:$0xff]
      %v177 = vld [vmem:[%s165 + $0x28] sm:$0xff]
      %v178 = vld [vmem:[%s165 + $0x30] sm:$0xff]
      %v179 = vld [vmem:[%s165 + $0x38] sm:$0xff]
      %v180 = vld [vmem:[%s165 + $0x40] sm:$0xff]
      %v181 = vld [vmem:[%s165 + $0x48] sm:$0xff]
      %v182 = vld [vmem:[%s165 + $0x50] sm:$0xff]
      %v183 = vld [vmem:[%s165 + $0x58] sm:$0xff]
      %v184 = vld [vmem:[%s165 + $0x60] sm:$0xff]
      %v185 = vld [vmem:[%s165 + $0x68] sm:$0xff]
      %v186 = vld [vmem:[%s165 + $0x70] sm:$0xff]
      %v187 = vld [vmem:[%s165 + $0x78] sm:$0xff]
      %v188 = vld [vmem:[%s165 + $0x80] sm:$0xff]
      %v189 = vld [vmem:[%s165 + $0x88] sm:$0xff]
      %v190 = vld [vmem:[%s165 + $0x90] sm:$0xff]
      %v191 = vld [vmem:[%s165 + $0x98] sm:$0xff]
      %v192 = vld [vmem:[%s165 + $0xa0] sm:$0xff]
      %v193 = vld [vmem:[%s165 + $0xa8] sm:$0xff]
      %v194 = vld [vmem:[%s165 + $0xb0] sm:$0xff]
      %v195 = vld [vmem:[%s165 + $0xb8] sm:$0xff]
      %v196 = vld [vmem:[%s165 + $0xc0] sm:$0xff]
      %v197 = vld [vmem:[%s165 + $0xc8] sm:$0xff]
      %v198 = vld [vmem:[%s165 + $0xd0] sm:$0xff]
      %v199 = vld [vmem:[%s165 + $0xd8] sm:$0xff]
      %v200 = vld [vmem:[%s165 + $0xe0] sm:$0xff]
      %v201 = vld [vmem:[%s165 + $0xe8] sm:$0xff]
      %v202 = vld [vmem:[%s165 + $0xf0] sm:$0xff]
      %v203 = vld [vmem:[%s165 + $0xf8] sm:$0xff]
      %v204 = vld [vmem:[%s165 + $0x100] sm:$0xff]
      %v205 = vld [vmem:[%s165 + $0x108] sm:$0xff]
      %v206 = vld [vmem:[%s1] sm:$0xf]
      %v207 = vld [vmem:[%s1 + $0x4] sm:$0xf]
      %v208 = vld [vmem:[%s1 + $0x8] sm:$0xf]
      %v209 = vld [vmem:[%s1 + $0xc] sm:$0xf]
      %v210 = vld [vmem:[%s1 + $0x10] sm:$0xf]
      %v211 = vld [vmem:[%s1 + $0x14] sm:$0xf]
      %v212 = vld [vmem:[%s1 + $0x18] sm:$0xf]
      %v213 = vld [vmem:[%s1 + $0x1c] sm:$0xf]
      %v214 = vld [vmem:[%s1 + $0x20] sm:$0xf]
      %v215 = vld [vmem:[%s1 + $0x24] sm:$0xf]
      %v216 = vld [vmem:[%s1 + $0x28] sm:$0xf]
      %v217 = vld [vmem:[%s1 + $0x2c] sm:$0xf]
      %v218 = vld [vmem:[%s1 + $0x30] sm:$0xf]
      %v219 = vld [vmem:[%s1 + $0x34] sm:$0xf]
      %v220 = vld [vmem:[%s1 + $0x38] sm:$0xf]
      %v221 = vld [vmem:[%s1 + $0x3c] sm:$0xf]
      %v222 = vld [vmem:[%s1 + $0x40] sm:$0xf]
      %v223 = vld [vmem:[%s1 + $0x44] sm:$0xf]
      %v224 = vld [vmem:[%s1 + $0x48] sm:$0xf]
      %v225 = vld [vmem:[%s1 + $0x4c] sm:$0xf]
      %v226 = vld [vmem:[%s1 + $0x50] sm:$0xf]
      %v227 = vld [vmem:[%s1 + $0x54] sm:$0xf]
      %v228 = vld [vmem:[%s1 + $0x58] sm:$0xf]
      %v229 = vld [vmem:[%s1 + $0x5c] sm:$0xf]
      %v230 = vld [vmem:[%s1 + $0x60] sm:$0xf]
      %v231 = vld [vmem:[%s1 + $0x64] sm:$0xf]
      %v232 = vld [vmem:[%s1 + $0x68] sm:$0xf]
      %v233 = vld [vmem:[%s1 + $0x6c] sm:$0xf]
      %v234 = vld [vmem:[%s1 + $0x70] sm:$0xf]
      %v235 = vld [vmem:[%s1 + $0x74] sm:$0xf]
      %v236 = vld [vmem:[%s1 + $0x78] sm:$0xf]
      %v237 = vld [vmem:[%s1 + $0x7c] sm:$0xf]
      %v238 = vld [vmem:[%s1 + $0x80] sm:$0xf]
      %v239 = vld [vmem:[%s1 + $0x84] sm:$0xf]
      %v240 = vld [vmem:[%s1 + $0x88] sm:$0xf]
      %v241 = vld [vmem:[%s1 + $0x8c] sm:$0xf]
      %v242 = vld [vmem:[%s1 + $0x90] sm:$0xf]
      %v243 = vld [vmem:[%s1 + $0x94] sm:$0xf]
      %v244 = vld [vmem:[%s1 + $0x98] sm:$0xf]
      %v245 = vld [vmem:[%s1 + $0x9c] sm:$0xf]
      %v246 = vld [vmem:[%s1 + $0xa0] sm:$0xf]
      %v247 = vld [vmem:[%s1 + $0xa4] sm:$0xf]
      %v248 = vld [vmem:[%s1 + $0xa8] sm:$0xf]
      %v249 = vld [vmem:[%s1 + $0xac] sm:$0xf]
      %v250 = vld [vmem:[%s1 + $0xb0] sm:$0xf]
      %v251 = vld [vmem:[%s1 + $0xb4] sm:$0xf]
      %v252 = vld [vmem:[%s1 + $0xb8] sm:$0xf]
      %v253 = vld [vmem:[%s1 + $0xbc] sm:$0xf]
      %v254 = vld [vmem:[%s1 + $0xc0] sm:$0xf]
      %v255 = vld [vmem:[%s1 + $0xc4] sm:$0xf]
      %v256 = vld [vmem:[%s1 + $0xc8] sm:$0xf]
      %v257 = vld [vmem:[%s1 + $0xcc] sm:$0xf]
      %v258 = vld [vmem:[%s1 + $0xd0] sm:$0xf]
      %v259 = vld [vmem:[%s1 + $0xd4] sm:$0xf]
      %v260 = vld [vmem:[%s1 + $0xd8] sm:$0xf]
      %v261 = vld [vmem:[%s1 + $0xdc] sm:$0xf]
      %v262 = vld [vmem:[%s1 + $0xe0] sm:$0xf]
      %v263 = vld [vmem:[%s1 + $0xe4] sm:$0xf]
      %v264 = vld [vmem:[%s1 + $0xe8] sm:$0xf]
      %v265 = vld [vmem:[%s1 + $0xec] sm:$0xf]
      %v266 = vld [vmem:[%s1 + $0xf0] sm:$0xf]
      %v267 = vld [vmem:[%s1 + $0xf4] sm:$0xf]
      %v268 = vld [vmem:[%s1 + $0xf8] sm:$0xf]
      %v269 = vld [vmem:[%s1 + $0xfc] sm:$0xf]
      %v270 = vld [vmem:[%s1 + $0x100] sm:$0xf]
      %v271 = vld [vmem:[%s1 + $0x104] sm:$0xf]
      %v272 = vld [vmem:[%s1 + $0x108] sm:$0xf]
      %v273 = vld [vmem:[%s1 + $0x10c] sm:$0xf]
      %v274 = vld [vmem:[%s1 + $0x110] sm:$0xf]
      %v275 = vld [vmem:[%s1 + $0x114] sm:$0xf]
      %v276 = vld [vmem:[%s1 + $0x118] sm:$0xf]
      %v277 = vld [vmem:[%s1 + $0x11c] sm:$0xf]
      %v294 = vunpack.c.l.b16 %v190
      %v295 = vunpack.c.h.b16 %v190
      %v296 = vunpack.c.l.b16 %v191
      %v297 = vunpack.c.h.b16 %v191
      %v298 = vunpack.c.l.b16 %v192
      %v299 = vunpack.c.h.b16 %v192
      %v300 = vunpack.c.l.b16 %v193
      %v301 = vunpack.c.h.b16 %v193
      %v302 = vunpack.c.l.b16 %v194
      %v303 = vunpack.c.h.b16 %v194
      %v304 = vunpack.c.l.b16 %v195
      %v305 = vunpack.c.h.b16 %v195
      %v306 = vunpack.c.l.b16 %v196
      %v307 = vunpack.c.h.b16 %v196
      %v308 = vunpack.c.l.b16 %v197
      %v309 = vunpack.c.h.b16 %v197
      %v310 = vunpack.c.l.b16 %v198
      %v311 = vunpack.c.h.b16 %v198
      %v312 = vunpack.c.l.b16 %v199
      %v313 = vunpack.c.h.b16 %v199
      %v314 = vunpack.c.l.b16 %v200
      %v315 = vunpack.c.h.b16 %v200
      %v316 = vunpack.c.l.b16 %v201
      %v317 = vunpack.c.h.b16 %v201
      %v318 = vunpack.c.l.b16 %v202
      %v319 = vunpack.c.h.b16 %v202
      %v320 = vunpack.c.l.b16 %v203
      %v321 = vunpack.c.h.b16 %v203
      %v322 = vunpack.c.l.b16 %v204
      %v323 = vunpack.c.h.b16 %v204
      %v324 = vunpack.c.l.b16 %v205
      %v325 = vunpack.c.h.b16 %v205
      %v326 = vpack.c.b16 %v296, %v294
      %v327 = vpack.c.b16 %v297, %v295
      %v328 = vpack.c.b16 %v300, %v298
      %v329 = vpack.c.b16 %v301, %v299
      %v330 = vpack.c.b16 %v304, %v302
      %v331 = vpack.c.b16 %v305, %v303
      %v332 = vpack.c.b16 %v308, %v306
      %v333 = vpack.c.b16 %v309, %v307
      %v334 = vpack.c.b16 %v312, %v310
      %v335 = vpack.c.b16 %v313, %v311
      %v336 = vpack.c.b16 %v316, %v314
      %v337 = vpack.c.b16 %v317, %v315
      %v338 = vpack.c.b16 %v320, %v318
      %v339 = vpack.c.b16 %v321, %v319
      %v340 = vpack.c.b16 %v324, %v322
      %v341 = vpack.c.b16 %v325, %v323
      %v374 = vunpack.c.l.b16 %v230
      %v375 = vunpack.c.l.b16 %v231
      %v376 = vunpack.c.l.b16 %v232
      %v377 = vunpack.c.l.b16 %v233
      %v378 = vunpack.c.l.b16 %v234
      %v379 = vunpack.c.l.b16 %v235
      %v380 = vunpack.c.l.b16 %v236
      %v381 = vunpack.c.l.b16 %v237
      %v382 = vunpack.c.l.b16 %v238
      %v383 = vunpack.c.l.b16 %v239
      %v384 = vunpack.c.l.b16 %v240
      %v385 = vunpack.c.l.b16 %v241
      %v386 = vunpack.c.l.b16 %v242
      %v387 = vunpack.c.l.b16 %v243
      %v388 = vunpack.c.l.b16 %v244
      %v389 = vunpack.c.l.b16 %v245
      %v390 = vunpack.c.l.b16 %v246
      %v391 = vunpack.c.l.b16 %v247
      %v392 = vunpack.c.l.b16 %v248
      %v393 = vunpack.c.l.b16 %v249
      %v394 = vunpack.c.l.b16 %v250
      %v395 = vunpack.c.l.b16 %v251
      %v396 = vunpack.c.l.b16 %v252
      %v397 = vunpack.c.l.b16 %v253
      %v398 = vpack.c.b16 %v375, %v374
      %v399 = vpack.c.b16 %v377, %v376
      %v400 = vpack.c.b16 %v379, %v378
      %v401 = vpack.c.b16 %v381, %v380
      %v402 = vpack.c.b16 %v383, %v382
      %v403 = vpack.c.b16 %v385, %v384
      %v404 = vpack.c.b16 %v387, %v386
      %v405 = vpack.c.b16 %v389, %v388
      %v406 = vpack.c.b16 %v391, %v390
      %v407 = vpack.c.b16 %v393, %v392
      %v408 = vpack.c.b16 %v395, %v394
      %v409 = vpack.c.b16 %v397, %v396
      %vm422 = vcmask 523264
      %v424 = vsel %vm422, %v327, 0
      %v427 = vsel %vm422, %v329, 0
      %v430 = vsel %vm422, %v331, 0
      %v433 = vsel %vm422, %v333, 0
      %v436 = vsel %vm422, %v335, 0
      %v439 = vsel %vm422, %v337, 0
      %v442 = vsel %vm422, %v339, 0
      %v445 = vsel %vm422, %v341, 0
      %447 = vmatprep.subr.bf16.mxu0 0
      %448 = vmatpush1.bf16.msra.mxu0 %v398
      %449 = vmatprep.subr.bf16.mxu0 0
      %450 = vmatpush1.bf16.msra.mxu0 %v399
      %451 = vmatprep.subr.bf16.mxu0 0
      %452 = vmatpush1.bf16.msra.mxu0 %v400
      %453 = vmatprep.subr.bf16.mxu0 0
      %454 = vmatpush1.bf16.msra.mxu0 %v401
      %455 = vmatprep.subr.bf16.mxu0 0
      %456 = vmatpush1.bf16.msra.mxu0 %v402
      %457 = vmatprep.subr.bf16.mxu0 0
      %458 = vmatpush1.bf16.msra.mxu0 %v403
      %459 = vmatprep.subr.bf16.mxu0 0
      %460 = vmatpush1.bf16.msra.mxu0 %v404
      %461 = vmatprep.subr.bf16.mxu0 0
      %462 = vmatpush1.bf16.msra.mxu0 %v405
      %463 = vmatprep.subr.bf16.mxu0 0
      %464 = vmatpush1.bf16.msra.mxu0 %v406
      %465 = vmatprep.subr.bf16.mxu0 0
      %466 = vmatpush1.bf16.msra.mxu0 %v407
      %467 = vmatprep.subr.bf16.mxu0 0
      %468 = vmatpush1.bf16.msra.mxu0 %v408
      %469 = vmatprep.subr.bf16.mxu0 0
      %470 = vmatpush1.bf16.msra.mxu0 %v409
      %471 = vmatprep.subr.bf16.mxu0 0
      %472 = vmatpush1.bf16.msra.mxu0 0
      %473 = vmatprep.subr.bf16.mxu0 0
      %474 = vmatpush1.bf16.msra.mxu0 0
      %475 = vmatprep.subr.bf16.mxu0 0
      %476 = vmatpush1.bf16.msra.mxu0 0
      %477 = vmatprep.subr.bf16.mxu0 0
      %478 = vmatpush1.bf16.msra.mxu0 0
      %479 = vmatprep.mubr.bf16.mxu0 %v424
      %480 = vmatmul.mubr.bf16.gmra.mrb[0].mxu0 %v326
      %v481 = vpop.f32.mrb[0].mxu0
      %v482 = vadd.f32 0.0, %v481
      %v483 = vpop.f32.mrb[0].mxu0
      %v484 = vpop.f32.mrb[0].mxu0
      %v485 = vadd.f32 0.0, %v484
      %v486 = vpop.f32.mrb[0].mxu0
      %487 = vmatprep.mubr.bf16.mxu0 %v427
      %488 = vmatmul.mubr.bf16.gmra.mrb[0].mxu0 %v328
      %v489 = vpop.f32.mrb[0].mxu0
      %v490 = vadd.f32 0.0, %v489
      %v491 = vpop.f32.mrb[0].mxu0
      %v492 = vpop.f32.mrb[0].mxu0
      %v493 = vadd.f32 0.0, %v492
      %v494 = vpop.f32.mrb[0].mxu0
      %495 = vmatprep.mubr.bf16.mxu0 %v430
      %496 = vmatmul.mubr.bf16.gmra.mrb[0].mxu0 %v330
      %v497 = vpop.f32.mrb[0].mxu0
      %v498 = vadd.f32 0.0, %v497
      %v499 = vpop.f32.mrb[0].mxu0
      %v500 = vpop.f32.mrb[0].mxu0
      %v501 = vadd.f32 0.0, %v500
      %v502 = vpop.f32.mrb[0].mxu0
      %503 = vmatprep.mubr.bf16.mxu0 %v433
      %504 = vmatmul.mubr.bf16.gmra.mrb[0].mxu0 %v332
      %v505 = vpop.f32.mrb[0].mxu0
      %v506 = vadd.f32 0.0, %v505
      %v507 = vpop.f32.mrb[0].mxu0
      %v508 = vpop.f32.mrb[0].mxu0
      %v509 = vadd.f32 0.0, %v508
      %v510 = vpop.f32.mrb[0].mxu0
      %511 = vmatprep.mubr.bf16.mxu0 %v436
      %512 = vmatmul.mubr.bf16.gmra.mrb[0].mxu0 %v334
      %v513 = vpop.f32.mrb[0].mxu0
      %v514 = vadd.f32 0.0, %v513
      %v515 = vpop.f32.mrb[0].mxu0
      %v516 = vpop.f32.mrb[0].mxu0
      %v517 = vadd.f32 0.0, %v516
      %v518 = vpop.f32.mrb[0].mxu0
      %519 = vmatprep.mubr.bf16.mxu0 %v439
      %520 = vmatmul.mubr.bf16.gmra.mrb[0].mxu0 %v336
      %v521 = vpop.f32.mrb[0].mxu0
      %v522 = vadd.f32 0.0, %v521
      %v523 = vpop.f32.mrb[0].mxu0
      %v524 = vpop.f32.mrb[0].mxu0
      %v525 = vadd.f32 0.0, %v524
      %v526 = vpop.f32.mrb[0].mxu0
      %527 = vmatprep.mubr.bf16.mxu0 %v442
      %528 = vmatmul.mubr.bf16.gmra.mrb[0].mxu0 %v338
      %v529 = vpop.f32.mrb[0].mxu0
      %v530 = vadd.f32 0.0, %v529
      %v531 = vpop.f32.mrb[0].mxu0
      %v532 = vpop.f32.mrb[0].mxu0
      %v533 = vadd.f32 0.0, %v532
      %v534 = vpop.f32.mrb[0].mxu0
      %535 = vmatprep.mubr.bf16.mxu0 %v445
      %536 = vmatmul.mubr.bf16.gmra.mrb[0].mxu0 %v340
      %v537 = vpop.f32.mrb[0].mxu0
      %v538 = vadd.f32 0.0, %v537
      %v539 = vpop.f32.mrb[0].mxu0
      %v540 = vpop.f32.mrb[0].mxu0
      %v541 = vadd.f32 0.0, %v540
      %v542 = vpop.f32.mrb[0].mxu0
      %543 = vdwg.mxu0
      %v560 = vunpack.c.l.b16 %v172
      %v561 = vunpack.c.h.b16 %v172
      %v562 = vunpack.c.l.b16 %v173
      %v563 = vunpack.c.h.b16 %v173
      %v564 = vunpack.c.l.b16 %v174
      %v565 = vunpack.c.h.b16 %v174
      %v566 = vunpack.c.l.b16 %v175
      %v567 = vunpack.c.h.b16 %v175
      %v568 = vunpack.c.l.b16 %v176
      %v569 = vunpack.c.h.b16 %v176
      %v570 = vunpack.c.l.b16 %v177
      %v571 = vunpack.c.h.b16 %v177
      %v572 = vunpack.c.l.b16 %v178
      %v573 = vunpack.c.h.b16 %v178
      %v574 = vunpack.c.l.b16 %v179
      %v575 = vunpack.c.h.b16 %v179
      %v576 = vunpack.c.l.b16 %v180
      %v577 = vunpack.c.h.b16 %v180
      %v578 = vunpack.c.l.b16 %v181
      %v579 = vunpack.c.h.b16 %v181
      %v580 = vunpack.c.l.b16 %v182
      %v581 = vunpack.c.h.b16 %v182
      %v582 = vunpack.c.l.b16 %v183
      %v583 = vunpack.c.h.b16 %v183
      %v584 = vunpack.c.l.b16 %v184
      %v585 = vunpack.c.h.b16 %v184
      %v586 = vunpack.c.l.b16 %v185
      %v587 = vunpack.c.h.b16 %v185
      %v588 = vunpack.c.l.b16 %v186
      %v589 = vunpack.c.h.b16 %v186
      %v590 = vunpack.c.l.b16 %v187
      %v591 = vunpack.c.h.b16 %v187
      %v592 = vpack.c.b16 %v562, %v560
      %v593 = vpack.c.b16 %v563, %v561
      %v594 = vpack.c.b16 %v566, %v564
      %v595 = vpack.c.b16 %v567, %v565
      %v596 = vpack.c.b16 %v570, %v568
      %v597 = vpack.c.b16 %v571, %v569
      %v598 = vpack.c.b16 %v574, %v572
      %v599 = vpack.c.b16 %v575, %v573
      %v600 = vpack.c.b16 %v578, %v576
      %v601 = vpack.c.b16 %v579, %v577
      %v602 = vpack.c.b16 %v582, %v580
      %v603 = vpack.c.b16 %v583, %v581
      %v604 = vpack.c.b16 %v586, %v584
      %v605 = vpack.c.b16 %v587, %v585
      %v606 = vpack.c.b16 %v590, %v588
      %v607 = vpack.c.b16 %v591, %v589
      %v640 = vunpack.c.l.b16 %v206
      %v641 = vunpack.c.l.b16 %v207
      %v642 = vunpack.c.l.b16 %v208
      %v643 = vunpack.c.l.b16 %v209
      %v644 = vunpack.c.l.b16 %v210
      %v645 = vunpack.c.l.b16 %v211
      %v646 = vunpack.c.l.b16 %v212
      %v647 = vunpack.c.l.b16 %v213
      %v648 = vunpack.c.l.b16 %v214
      %v649 = vunpack.c.l.b16 %v215
      %v650 = vunpack.c.l.b16 %v216
      %v651 = vunpack.c.l.b16 %v217
      %v652 = vunpack.c.l.b16 %v218
      %v653 = vunpack.c.l.b16 %v219
      %v654 = vunpack.c.l.b16 %v220
      %v655 = vunpack.c.l.b16 %v221
      %v656 = vunpack.c.l.b16 %v222
      %v657 = vunpack.c.l.b16 %v223
      %v658 = vunpack.c.l.b16 %v224
      %v659 = vunpack.c.l.b16 %v225
      %v660 = vunpack.c.l.b16 %v226
      %v661 = vunpack.c.l.b16 %v227
      %v662 = vunpack.c.l.b16 %v228
      %v663 = vunpack.c.l.b16 %v229
      %v664 = vpack.c.b16 %v641, %v640
      %v665 = vpack.c.b16 %v643, %v642
      %v666 = vpack.c.b16 %v645, %v644
      %v667 = vpack.c.b16 %v647, %v646
      %v668 = vpack.c.b16 %v649, %v648
      %v669 = vpack.c.b16 %v651, %v650
      %v670 = vpack.c.b16 %v653, %v652
      %v671 = vpack.c.b16 %v655, %v654
      %v672 = vpack.c.b16 %v657, %v656
      %v673 = vpack.c.b16 %v659, %v658
      %v674 = vpack.c.b16 %v661, %v660
      %v675 = vpack.c.b16 %v663, %v662
      %v689 = vsel %vm422, %v593, 0
      %v692 = vsel %vm422, %v595, 0
      %v695 = vsel %vm422, %v597, 0
      %v698 = vsel %vm422, %v599, 0
      %v701 = vsel %vm422, %v601, 0
      %v704 = vsel %vm422, %v603, 0
      %v707 = vsel %vm422, %v605, 0
      %v710 = vsel %vm422, %v607, 0
      %712 = vmatprep.subr.bf16.mxu0 0
      %713 = vmatpush1.bf16.msra.mxu0 %v664
      %714 = vmatprep.subr.bf16.mxu0 0
      %715 = vmatpush1.bf16.msra.mxu0 %v665
      %716 = vmatprep.subr.bf16.mxu0 0
      %717 = vmatpush1.bf16.msra.mxu0 %v666
      %718 = vmatprep.subr.bf16.mxu0 0
      %719 = vmatpush1.bf16.msra.mxu0 %v667
      %720 = vmatprep.subr.bf16.mxu0 0
      %721 = vmatpush1.bf16.msra.mxu0 %v668
      %722 = vmatprep.subr.bf16.mxu0 0
      %723 = vmatpush1.bf16.msra.mxu0 %v669
      %724 = vmatprep.subr.bf16.mxu0 0
      %725 = vmatpush1.bf16.msra.mxu0 %v670
      %726 = vmatprep.subr.bf16.mxu0 0
      %727 = vmatpush1.bf16.msra.mxu0 %v671
      %728 = vmatprep.subr.bf16.mxu0 0
      %729 = vmatpush1.bf16.msra.mxu0 %v672
      %730 = vmatprep.subr.bf16.mxu0 0
      %731 = vmatpush1.bf16.msra.mxu0 %v673
      %732 = vmatprep.subr.bf16.mxu0 0
      %733 = vmatpush1.bf16.msra.mxu0 %v674
      %734 = vmatprep.subr.bf16.mxu0 0
      %735 = vmatpush1.bf16.msra.mxu0 %v675
      %736 = vmatprep.subr.bf16.mxu0 0
      %737 = vmatpush1.bf16.msra.mxu0 0
      %738 = vmatprep.subr.bf16.mxu0 0
      %739 = vmatpush1.bf16.msra.mxu0 0
      %740 = vmatprep.subr.bf16.mxu0 0
      %741 = vmatpush1.bf16.msra.mxu0 0
      %742 = vmatprep.subr.bf16.mxu0 0
      %743 = vmatpush1.bf16.msra.mxu0 0
      %744 = vmatprep.mubr.bf16.mxu0 %v689
      %745 = vmatmul.mubr.bf16.gmra.mrb[0].mxu0 %v592
      %v746 = vpop.f32.mrb[0].mxu0
      %v747 = vadd.f32 %v482, %v746
      %v748 = vpop.f32.mrb[0].mxu0
      %v749 = vpop.f32.mrb[0].mxu0
      %v750 = vadd.f32 %v485, %v749
      %v751 = vpop.f32.mrb[0].mxu0
      %752 = vmatprep.mubr.bf16.mxu0 %v692
      %753 = vmatmul.mubr.bf16.gmra.mrb[0].mxu0 %v594
      %v754 = vpop.f32.mrb[0].mxu0
      %v755 = vadd.f32 %v490, %v754
      %v756 = vpop.f32.mrb[0].mxu0
      %v757 = vpop.f32.mrb[0].mxu0
      %v758 = vadd.f32 %v493, %v757
      %v759 = vpop.f32.mrb[0].mxu0
      %760 = vmatprep.mubr.bf16.mxu0 %v695
      %761 = vmatmul.mubr.bf16.gmra.mrb[0].mxu0 %v596
      %v762 = vpop.f32.mrb[0].mxu0
      %v763 = vadd.f32 %v498, %v762
      %v764 = vpop.f32.mrb[0].mxu0
      %v765 = vpop.f32.mrb[0].mxu0
      %v766 = vadd.f32 %v501, %v765
      %v767 = vpop.f32.mrb[0].mxu0
      %768 = vmatprep.mubr.bf16.mxu0 %v698
      %769 = vmatmul.mubr.bf16.gmra.mrb[0].mxu0 %v598
      %v770 = vpop.f32.mrb[0].mxu0
      %v771 = vadd.f32 %v506, %v770
      %v772 = vpop.f32.mrb[0].mxu0
      %v773 = vpop.f32.mrb[0].mxu0
      %v774 = vadd.f32 %v509, %v773
      %v775 = vpop.f32.mrb[0].mxu0
      %776 = vmatprep.mubr.bf16.mxu0 %v701
      %777 = vmatmul.mubr.bf16.gmra.mrb[0].mxu0 %v600
      %v778 = vpop.f32.mrb[0].mxu0
      %v779 = vadd.f32 %v514, %v778
      %v780 = vpop.f32.mrb[0].mxu0
      %v781 = vpop.f32.mrb[0].mxu0
      %v782 = vadd.f32 %v517, %v781
      %v783 = vpop.f32.mrb[0].mxu0
      %784 = vmatprep.mubr.bf16.mxu0 %v704
      %785 = vmatmul.mubr.bf16.gmra.mrb[0].mxu0 %v602
      %v786 = vpop.f32.mrb[0].mxu0
      %v787 = vadd.f32 %v522, %v786
      %v788 = vpop.f32.mrb[0].mxu0
      %v789 = vpop.f32.mrb[0].mxu0
      %v790 = vadd.f32 %v525, %v789
      %v791 = vpop.f32.mrb[0].mxu0
      %792 = vmatprep.mubr.bf16.mxu0 %v707
      %793 = vmatmul.mubr.bf16.gmra.mrb[0].mxu0 %v604
      %v794 = vpop.f32.mrb[0].mxu0
      %v795 = vadd.f32 %v530, %v794
      %v796 = vpop.f32.mrb[0].mxu0
      %v797 = vpop.f32.mrb[0].mxu0
      %v798 = vadd.f32 %v533, %v797
      %v799 = vpop.f32.mrb[0].mxu0
      %800 = vmatprep.mubr.bf16.mxu0 %v710
      %801 = vmatmul.mubr.bf16.gmra.mrb[0].mxu0 %v606
      %v802 = vpop.f32.mrb[0].mxu0
      %v803 = vadd.f32 %v538, %v802
      %v804 = vpop.f32.mrb[0].mxu0
      %v805 = vpop.f32.mrb[0].mxu0
      %v806 = vadd.f32 %v541, %v805
      %v807 = vpop.f32.mrb[0].mxu0
      %808 = vdwg.mxu0
      %v811 = vunpack.c.l.b16 %v188
      %v812 = vunpack.c.h.b16 %v188
      %v813 = vunpack.c.l.b16 %v189
      %v814 = vunpack.c.h.b16 %v189
      %v815 = vpack.c.b16 %v813, %v811
      %v816 = vpack.c.b16 %v814, %v812
      %v842 = vunpack.c.l.b16 %v254
      %v843 = vunpack.c.l.b16 %v255
      %v844 = vunpack.c.l.b16 %v256
      %v845 = vunpack.c.l.b16 %v257
      %v846 = vunpack.c.l.b16 %v258
      %v847 = vunpack.c.l.b16 %v259
      %v848 = vunpack.c.l.b16 %v260
      %v849 = vunpack.c.l.b16 %v261
      %v850 = vunpack.c.l.b16 %v262
      %v851 = vunpack.c.l.b16 %v263
      %v852 = vunpack.c.l.b16 %v264
      %v853 = vunpack.c.l.b16 %v265
      %v854 = vunpack.c.l.b16 %v266
      %v855 = vunpack.c.l.b16 %v267
      %v856 = vunpack.c.l.b16 %v268
      %v857 = vunpack.c.l.b16 %v269
      %v858 = vunpack.c.l.b16 %v270
      %v859 = vunpack.c.l.b16 %v271
      %v860 = vunpack.c.l.b16 %v272
      %v861 = vunpack.c.l.b16 %v273
      %v862 = vunpack.c.l.b16 %v274
      %v863 = vunpack.c.l.b16 %v275
      %v864 = vunpack.c.l.b16 %v276
      %v865 = vunpack.c.l.b16 %v277
      %v866 = vpack.c.b16 %v843, %v842
      %v867 = vpack.c.b16 %v845, %v844
      %v868 = vpack.c.b16 %v847, %v846
      %v869 = vpack.c.b16 %v849, %v848
      %v870 = vpack.c.b16 %v851, %v850
      %v871 = vpack.c.b16 %v853, %v852
      %v872 = vpack.c.b16 %v855, %v854
      %v873 = vpack.c.b16 %v857, %v856
      %v874 = vpack.c.b16 %v859, %v858
      %v875 = vpack.c.b16 %v861, %v860
      %v876 = vpack.c.b16 %v863, %v862
      %v877 = vpack.c.b16 %v865, %v864
      %v891 = vsel %vm422, %v816, 0
      %893 = vmatprep.subr.bf16.mxu0 0
      %894 = vmatpush1.bf16.msra.mxu0 %v866
      %895 = vmatprep.subr.bf16.mxu0 0
      %896 = vmatpush1.bf16.msra.mxu0 %v867
      %897 = vmatprep.subr.bf16.mxu0 0
      %898 = vmatpush1.bf16.msra.mxu0 %v868
      %899 = vmatprep.subr.bf16.mxu0 0
      %900 = vmatpush1.bf16.msra.mxu0 %v869
      %901 = vmatprep.subr.bf16.mxu0 0
      %902 = vmatpush1.bf16.msra.mxu0 %v870
      %903 = vmatprep.subr.bf16.mxu0 0
      %904 = vmatpush1.bf16.msra.mxu0 %v871
      %905 = vmatprep.subr.bf16.mxu0 0
      %906 = vmatpush1.bf16.msra.mxu0 %v872
      %907 = vmatprep.subr.bf16.mxu0 0
      %908 = vmatpush1.bf16.msra.mxu0 %v873
      %909 = vmatprep.subr.bf16.mxu0 0
      %910 = vmatpush1.bf16.msra.mxu0 %v874
      %911 = vmatprep.subr.bf16.mxu0 0
      %912 = vmatpush1.bf16.msra.mxu0 %v875
      %913 = vmatprep.subr.bf16.mxu0 0
      %914 = vmatpush1.bf16.msra.mxu0 %v876
      %915 = vmatprep.subr.bf16.mxu0 0
      %916 = vmatpush1.bf16.msra.mxu0 %v877
      %917 = vmatprep.subr.bf16.mxu0 0
      %918 = vmatpush1.bf16.msra.mxu0 0
      %919 = vmatprep.subr.bf16.mxu0 0
      %920 = vmatpush1.bf16.msra.mxu0 0
      %921 = vmatprep.subr.bf16.mxu0 0
      %922 = vmatpush1.bf16.msra.mxu0 0
      %923 = vmatprep.subr.bf16.mxu0 0
      %924 = vmatpush1.bf16.msra.mxu0 0
      %925 = vmatprep.mubr.bf16.mxu0 %v692
      %926 = vmatmul.mubr.bf16.gmra.mrb[0].mxu0 %v594
      %v927 = vpop.f32.mrb[0].mxu0
      %v928 = vadd.f32 0.0, %v927
      %v929 = vpop.f32.mrb[0].mxu0
      %v930 = vpop.f32.mrb[0].mxu0
      %v931 = vadd.f32 0.0, %v930
      %v932 = vpop.f32.mrb[0].mxu0
      %933 = vmatprep.mubr.bf16.mxu0 %v695
      %934 = vmatmul.mubr.bf16.gmra.mrb[0].mxu0 %v596
      %v935 = vpop.f32.mrb[0].mxu0
      %v936 = vadd.f32 0.0, %v935
      %v937 = vpop.f32.mrb[0].mxu0
      %v938 = vpop.f32.mrb[0].mxu0
      %v939 = vadd.f32 0.0, %v938
      %v940 = vpop.f32.mrb[0].mxu0
      %941 = vmatprep.mubr.bf16.mxu0 %v698
      %942 = vmatmul.mubr.bf16.gmra.mrb[0].mxu0 %v598
      %v943 = vpop.f32.mrb[0].mxu0
      %v944 = vadd.f32 0.0, %v943
      %v945 = vpop.f32.mrb[0].mxu0
      %v946 = vpop.f32.mrb[0].mxu0
      %v947 = vadd.f32 0.0, %v946
      %v948 = vpop.f32.mrb[0].mxu0
      %949 = vmatprep.mubr.bf16.mxu0 %v701
      %950 = vmatmul.mubr.bf16.gmra.mrb[0].mxu0 %v600
      %v951 = vpop.f32.mrb[0].mxu0
      %v952 = vadd.f32 0.0, %v951
      %v953 = vpop.f32.mrb[0].mxu0
      %v954 = vpop.f32.mrb[0].mxu0
      %v955 = vadd.f32 0.0, %v954
      %v956 = vpop.f32.mrb[0].mxu0
      %957 = vmatprep.mubr.bf16.mxu0 %v704
      %958 = vmatmul.mubr.bf16.gmra.mrb[0].mxu0 %v602
      %v959 = vpop.f32.mrb[0].mxu0
      %v960 = vadd.f32 0.0, %v959
      %v961 = vpop.f32.mrb[0].mxu0
      %v962 = vpop.f32.mrb[0].mxu0
      %v963 = vadd.f32 0.0, %v962
      %v964 = vpop.f32.mrb[0].mxu0
      %965 = vmatprep.mubr.bf16.mxu0 %v707
      %966 = vmatmul.mubr.bf16.gmra.mrb[0].mxu0 %v604
      %v967 = vpop.f32.mrb[0].mxu0
      %v968 = vadd.f32 0.0, %v967
      %v969 = vpop.f32.mrb[0].mxu0
      %v970 = vpop.f32.mrb[0].mxu0
      %v971 = vadd.f32 0.0, %v970
      %v972 = vpop.f32.mrb[0].mxu0
      %973 = vmatprep.mubr.bf16.mxu0 %v710
      %974 = vmatmul.mubr.bf16.gmra.mrb[0].mxu0 %v606
      %v975 = vpop.f32.mrb[0].mxu0
      %v976 = vadd.f32 0.0, %v975
      %v977 = vpop.f32.mrb[0].mxu0
      %v978 = vpop.f32.mrb[0].mxu0
      %v979 = vadd.f32 0.0, %v978
      %v980 = vpop.f32.mrb[0].mxu0
      %981 = vmatprep.mubr.bf16.mxu0 %v891
      %982 = vmatmul.mubr.bf16.gmra.mrb[0].mxu0 %v815
      %v983 = vpop.f32.mrb[0].mxu0
      %v984 = vadd.f32 0.0, %v983
      %v985 = vpop.f32.mrb[0].mxu0
      %v986 = vpop.f32.mrb[0].mxu0
      %v987 = vadd.f32 0.0, %v986
      %v988 = vpop.f32.mrb[0].mxu0
      %989 = vdwg.mxu0
      %v990 = vadd.f32 %v747, %v928
      %v991 = vadd.f32 %v750, %v931
      %v992 = vadd.f32 %v755, %v936
      %v993 = vadd.f32 %v758, %v939
      %v994 = vadd.f32 %v763, %v944
      %v995 = vadd.f32 %v766, %v947
      %v996 = vadd.f32 %v771, %v952
      %v997 = vadd.f32 %v774, %v955
      %v998 = vadd.f32 %v779, %v960
      %v999 = vadd.f32 %v782, %v963
      %v1000 = vadd.f32 %v787, %v968
      %v1001 = vadd.f32 %v790, %v971
      %v1002 = vadd.f32 %v795, %v976
      %v1003 = vadd.f32 %v798, %v979
      %v1004 = vadd.f32 %v803, %v984
      %v1005 = vadd.f32 %v806, %v987
      %v1006 = vld [vmem:[%s2] sm:$0x1]
      %v1008 = vlaneseq
      %v1009 = vshrl.u32 %v1008, 7
      %v1010 = vsub.s32 0, %v1009
      %v1011 = vrot.slane %v1006, %v1010
      %v1013 = vadd.f32 %v990, %v1011
      %v1014 = vadd.f32 %v991, %v1011
      %v1015 = vadd.f32 %v992, %v1011
      %v1016 = vadd.f32 %v993, %v1011
      %v1017 = vadd.f32 %v994, %v1011
      %v1018 = vadd.f32 %v995, %v1011
      %v1019 = vadd.f32 %v996, %v1011
      %v1020 = vadd.f32 %v997, %v1011
      %v1021 = vadd.f32 %v998, %v1011
      %v1022 = vadd.f32 %v999, %v1011
      %v1023 = vadd.f32 %v1000, %v1011
      %v1024 = vadd.f32 %v1001, %v1011
      %v1025 = vadd.f32 %v1002, %v1011
      %v1026 = vadd.f32 %v1003, %v1011
      %v1027 = vadd.f32 %v1004, %v1011
      %v1028 = vadd.f32 %v1005, %v1011
      %vm1029 = vcmp.gt.f32.partialorder %v1013, 0.0
      %vm1030 = vcmp.gt.f32.partialorder %v1014, 0.0
      %vm1031 = vcmp.gt.f32.partialorder %v1015, 0.0
      %vm1032 = vcmp.gt.f32.partialorder %v1016, 0.0
      %vm1033 = vcmp.gt.f32.partialorder %v1017, 0.0
      %vm1034 = vcmp.gt.f32.partialorder %v1018, 0.0
      %vm1035 = vcmp.gt.f32.partialorder %v1019, 0.0
      %vm1036 = vcmp.gt.f32.partialorder %v1020, 0.0
      %vm1037 = vcmp.gt.f32.partialorder %v1021, 0.0
      %vm1038 = vcmp.gt.f32.partialorder %v1022, 0.0
      %vm1039 = vcmp.gt.f32.partialorder %v1023, 0.0
      %vm1040 = vcmp.gt.f32.partialorder %v1024, 0.0
      %vm1041 = vcmp.gt.f32.partialorder %v1025, 0.0
      %vm1042 = vcmp.gt.f32.partialorder %v1026, 0.0
      %vm1043 = vcmp.gt.f32.partialorder %v1027, 0.0
      %vm1044 = vcmp.gt.f32.partialorder %v1028, 0.0
      %v1045 = vmul.f32 %v1013, 0.2
      %v1046 = vmul.f32 %v1014, 0.2
      %v1047 = vmul.f32 %v1015, 0.2
      %v1048 = vmul.f32 %v1016, 0.2
      %v1049 = vmul.f32 %v1017, 0.2
      %v1050 = vmul.f32 %v1018, 0.2
      %v1051 = vmul.f32 %v1019, 0.2
      %v1052 = vmul.f32 %v1020, 0.2
      %v1053 = vmul.f32 %v1021, 0.2
      %v1054 = vmul.f32 %v1022, 0.2
      %v1055 = vmul.f32 %v1023, 0.2
      %v1056 = vmul.f32 %v1024, 0.2
      %v1057 = vmul.f32 %v1025, 0.2
      %v1058 = vmul.f32 %v1026, 0.2
      %v1059 = vmul.f32 %v1027, 0.2
      %v1060 = vmul.f32 %v1028, 0.2
      %v1061 = vsel %vm1029, %v1013, %v1045
      %v1062 = vsel %vm1030, %v1014, %v1046
      %v1063 = vsel %vm1031, %v1015, %v1047
      %v1064 = vsel %vm1032, %v1016, %v1048
      %v1065 = vsel %vm1033, %v1017, %v1049
      %v1066 = vsel %vm1034, %v1018, %v1050
      %v1067 = vsel %vm1035, %v1019, %v1051
      %v1068 = vsel %vm1036, %v1020, %v1052
      %v1069 = vsel %vm1037, %v1021, %v1053
      %v1070 = vsel %vm1038, %v1022, %v1054
      %v1071 = vsel %vm1039, %v1023, %v1055
      %v1072 = vsel %vm1040, %v1024, %v1056
      %v1073 = vsel %vm1041, %v1025, %v1057
      %v1074 = vsel %vm1042, %v1026, %v1058
      %v1075 = vsel %vm1043, %v1027, %v1059
      %v1076 = vsel %vm1044, %v1028, %v1060
      %v1077 = vpack.c.bf16 %v1062, %v1061
      %v1078 = vpack.c.bf16 %v1064, %v1063
      %v1079 = vpack.c.bf16 %v1066, %v1065
      %v1080 = vpack.c.bf16 %v1068, %v1067
      %v1081 = vpack.c.bf16 %v1070, %v1069
      %v1082 = vpack.c.bf16 %v1072, %v1071
      %v1083 = vpack.c.bf16 %v1074, %v1073
      %v1084 = vpack.c.bf16 %v1076, %v1075
      %v1093 = vunpack.c.l.b16 %v1077
      %v1094 = vunpack.c.h.b16 %v1077
      %v1095 = vunpack.c.l.b16 %v1078
      %v1096 = vunpack.c.h.b16 %v1078
      %v1097 = vunpack.c.l.b16 %v1079
      %v1098 = vunpack.c.h.b16 %v1079
      %v1099 = vunpack.c.l.b16 %v1080
      %v1100 = vunpack.c.h.b16 %v1080
      %v1101 = vunpack.c.l.b16 %v1081
      %v1102 = vunpack.c.h.b16 %v1081
      %v1103 = vunpack.c.l.b16 %v1082
      %v1104 = vunpack.c.h.b16 %v1082
      %v1105 = vunpack.c.l.b16 %v1083
      %v1106 = vunpack.c.h.b16 %v1083
      %v1107 = vunpack.c.l.b16 %v1084
      %v1108 = vunpack.c.h.b16 %v1084
      %v1109 = vpack.c.b16 %v1093, %v1093
      %v1110 = vpack.c.b16 %v1094, %v1094
      %v1111 = vpack.c.b16 %v1095, %v1095
      %v1112 = vpack.c.b16 %v1096, %v1096
      %v1113 = vpack.c.b16 %v1097, %v1097
      %v1114 = vpack.c.b16 %v1098, %v1098
      %v1115 = vpack.c.b16 %v1099, %v1099
      %v1116 = vpack.c.b16 %v1100, %v1100
      %v1117 = vpack.c.b16 %v1101, %v1101
      %v1118 = vpack.c.b16 %v1102, %v1102
      %v1119 = vpack.c.b16 %v1103, %v1103
      %v1120 = vpack.c.b16 %v1104, %v1104
      %v1121 = vpack.c.b16 %v1105, %v1105
      %v1122 = vpack.c.b16 %v1106, %v1106
      %v1123 = vpack.c.b16 %v1107, %v1107
      %v1124 = vpack.c.b16 %v1108, %v1108
      %1141 = vst [vmem:[%s170] sm:$0xf] %v1109
      %1142 = vst [vmem:[%s170 + $0x4] sm:$0xf] %v1110
      %1143 = vst [vmem:[%s170 + $0x8] sm:$0xf] %v1111
      %1144 = vst [vmem:[%s170 + $0xc] sm:$0xf] %v1112
      %1145 = vst [vmem:[%s170 + $0x10] sm:$0xf] %v1113
      %1146 = vst [vmem:[%s170 + $0x14] sm:$0xf] %v1114
      %1147 = vst [vmem:[%s170 + $0x18] sm:$0xf] %v1115
      %1148 = vst [vmem:[%s170 + $0x1c] sm:$0xf] %v1116
      %1149 = vst [vmem:[%s170 + $0x20] sm:$0xf] %v1117
      %1150 = vst [vmem:[%s170 + $0x24] sm:$0xf] %v1118
      %1151 = vst [vmem:[%s170 + $0x28] sm:$0xf] %v1119
      %1152 = vst [vmem:[%s170 + $0x2c] sm:$0xf] %v1120
      %1153 = vst [vmem:[%s170 + $0x30] sm:$0xf] %v1121
      %1154 = vst [vmem:[%s170 + $0x34] sm:$0xf] %v1122
      %1155 = vst [vmem:[%s170 + $0x38] sm:$0xf] %v1123
      %1156 = vst [vmem:[%s170 + $0x3c] sm:$0xf] %v1124
      %p1157 = scmp.lt.s32.totalorder %s14, 1
      %s1158 = scalar_select %p1157, %s14, 1
      %s1159 = smul.addr %s1158, 16
      %s1160 = smul.addr %s1159, 4
      %s1161 = scalar_lea.vmem %s3, %s1160
      // Predicated region
      $region33: #{deap_forward.2} parent=31 // pred_check
        %p1162 = pneg %p100
      $region34: #{deap_forward.2} parent=31 // pred_check_branch
        %1164 = sbr.rel (%p1162) target = $region36
      $region35: #{deap_forward.2} parent=31 // pred_region
        _
      $region36: #{deap_forward.2} parent=31 // pred_fallthru
        _
    $region32: #{deap_forward.2} parent=5 // pred_fallthru
      _
    %p1165 = scmp.le.s32.totalorder 2, %s9
    // Predicated region
    $region37: #{deap_forward.2} parent=5 // pred_check
      %p1166 = pneg %p1165
    $region38: #{deap_forward.2} parent=5 // pred_check_branch
      %1168 = sbr.rel (%p1166) target = $region40
    $region39: #{deap_forward.2} parent=5 // pred_region
      %s1169 = ssub.s32 %s9, 2
      // Predicated region
      $region41: #{deap_forward.2} parent=39 // pred_check
        %p1170 = pneg %p106
      $region42: #{deap_forward.2} parent=39 // pred_check_branch
        %1172 = sbr.rel (%p1170) target = $region44
      $region43: #{deap_forward.2} parent=39 // pred_region
        %p1173 = scmp.lt.s32.totalorder %s15, 1
        %s1174 = scalar_select %p1173, %s15, 1
        %s1175 = smul.addr %s1174, 16
        %s1176 = smul.addr %s1175, 4
        %s1177 = scalar_lea.vmem %s3, %s1176
      $region44: #{deap_forward.2} parent=39 // pred_fallthru
        _
    $region40: #{deap_forward.2} parent=5 // pred_fallthru
      _
  $region6: #{deap_forward.2} parent=0 // loop_footer
    %s13 = sadd.s32 1, %s9
  $region7: #{deap_forward.2} parent=0 // loop_footer_branch
    %8 = sbr.rel target = $region3
  $region8: #{deap_forward.2} parent=0 // loop_exit
    _

// kernel: deap_forward.3
$region0: #{deap_forward.3}
  #allocation0 [shape = 'u32[]', space=smem, size = 0x4, offset = 0x4, fixed_abs, tag = 'smem constant byte address 0x4 - core index']
  #allocation1 [shape = 'u32[144,128]{1,0:T(1,128)}', space=vmem, size = 0x12000, scoped, tag = 'internal scratch']
  %s0 = inlined_call_operand.vmem [shape: bf16[2,9,16,384], index: 0, kind: input, shape index: {}]
  %s1 = inlined_call_operand.vmem [shape: bf16[1152,384], index: 1, kind: input, shape index: {}]
  %s2 = inlined_call_operand.vmem [shape: f32[1,384], index: 2, kind: input, shape index: {}]
  %s3 = inlined_call_operand.vmem [shape: bf16[2,64,384], index: 3, kind: output, shape index: {}]
  %s4 = sld [smem:[#allocation0]]
  $region45: #{deap_forward.3} parent=0
    _
  %s6 = ssub.s32 1, %s4
  %s7 = scalar_select 0, %s6, %s4
  loop: start=0, step=1, limit=4
  $region2: #{deap_forward.3} parent=0 // loop_pre_header
    _
  $region3: #{deap_forward.3} parent=0 // loop_header
    %s9 = sphi 0, %s13
    %p10 = scmp.ge.s32.totalorder %s9, 4
    %s19 = sphi 0, %s21
    %s22 = sphi 0, %s19
    %s23 = sphi 0, %s22
    %s39 = sphi 0, %s23
    %s43 = sphi 0, %s43
    %s45 = sphi 0, %s43
    %s46 = sphi 0, %s45
    %s60 = sphi 0, %s46
    %s64 = sphi 0, %s64
    %s66 = sphi 0, %s64
    %s67 = sphi 0, %s66
    %s81 = sphi 0, %s67
    %s87 = sphi 0, %s89
    %s90 = sphi 0, %s87
    %s91 = sphi 0, %s90
    %s107 = sphi 0, %s91
  $region4: #{deap_forward.3} parent=0 // loop_header_branch
    %12 = sbr.rel (%p10) target = $region8
  $region5: #{deap_forward.3} parent=0 // loop_body
    %s14 = ssub.s32 %s9, 1
    %s15 = ssub.s32 %s9, 2
    %s16 = sadd.s32 %s9, 1
    %s17 = ssub.s32 %s9, %s16
    %p18 = scmp.eq.s32.totalorder %s17, 0
    %s20 = sadd.s32 %s19, 1
    %s21 = scalar_select %p18, %s19, %s20
    %p24 = pneg %p18
    %p25 = scmp.eq.s32.totalorder %s9, 1
    %p26 = por %p24, %p25
    %p27 = scmp.ne.s32.totalorder %s19, %s22
    %p28 = scmp.eq.s32.totalorder %s9, 0
    %p29 = por %p27, %p28
    %p30 = scmp.ne.s32.totalorder %s19, %s22
    %p31 = scmp.eq.s32.totalorder %s14, 1
    %p32 = por %p30, %p31
    %p33 = scmp.ne.s32.totalorder %s22, %s23
    %p34 = scmp.eq.s32.totalorder %s14, 0
    %p35 = por %p33, %p34
    %p36 = scmp.ne.s32.totalorder %s22, %s23
    %p37 = scmp.eq.s32.totalorder %s15, 1
    %p38 = por %p36, %p37
    %p40 = scmp.ne.s32.totalorder %s23, %s39
    %p41 = scmp.eq.s32.totalorder %s15, 0
    %p42 = por %p40, %p41
    %s44 = sadd.s32 %s43, 1
    %p47 = scmp.eq.s32.totalorder %s9, 1
    %p48 = scmp.ne.s32.totalorder %s43, %s45
    %p49 = scmp.eq.s32.totalorder %s9, 0
    %p50 = por %p48, %p49
    %p51 = scmp.ne.s32.totalorder %s43, %s45
    %p52 = scmp.eq.s32.totalorder %s14, 1
    %p53 = por %p51, %p52
    %p54 = scmp.ne.s32.totalorder %s45, %s46
    %p55 = scmp.eq.s32.totalorder %s14, 0
    %p56 = por %p54, %p55
    %p57 = scmp.ne.s32.totalorder %s45, %s46
    %p58 = scmp.eq.s32.totalorder %s15, 1
    %p59 = por %p57, %p58
    %p61 = scmp.ne.s32.totalorder %s46, %s60
    %p62 = scmp.eq.s32.totalorder %s15, 0
    %p63 = por %p61, %p62
    %s65 = sadd.s32 %s64, 1
    %p68 = scmp.eq.s32.totalorder %s9, 1
    %p69 = scmp.ne.s32.totalorder %s64, %s66
    %p70 = scmp.eq.s32.totalorder %s9, 0
    %p71 = por %p69, %p70
    %p72 = scmp.ne.s32.totalorder %s64, %s66
    %p73 = scmp.eq.s32.totalorder %s14, 1
    %p74 = por %p72, %p73
    %p75 = scmp.ne.s32.totalorder %s66, %s67
    %p76 = scmp.eq.s32.totalorder %s14, 0
    %p77 = por %p75, %p76
    %p78 = scmp.ne.s32.totalorder %s66, %s67
    %p79 = scmp.eq.s32.totalorder %s15, 1
    %p80 = por %p78, %p79
    %p82 = scmp.ne.s32.totalorder %s67, %s81
    %p83 = scmp.eq.s32.totalorder %s15, 0
    %p84 = por %p82, %p83
    %s85 = ssub.s32 %s9, %s16
    %p86 = scmp.eq.s32.totalorder %s85, 0
    %s88 = sadd.s32 %s87, 1
    %s89 = scalar_select %p86, %s87, %s88
    %p92 = pneg %p86
    %p93 = scmp.eq.s32.totalorder %s9, 1
    %p94 = por %p92, %p93
    %p95 = scmp.ne.s32.totalorder %s87, %s90
    %p96 = scmp.eq.s32.totalorder %s9, 0
    %p97 = por %p95, %p96
    %p98 = scmp.ne.s32.totalorder %s87, %s90
    %p99 = scmp.eq.s32.totalorder %s14, 1
    %p100 = por %p98, %p99
    %p101 = scmp.ne.s32.totalorder %s90, %s91
    %p102 = scmp.eq.s32.totalorder %s14, 0
    %p103 = por %p101, %p102
    %p104 = scmp.ne.s32.totalorder %s90, %s91
    %p105 = scmp.eq.s32.totalorder %s15, 1
    %p106 = por %p104, %p105
    %p108 = scmp.ne.s32.totalorder %s91, %s107
    %p109 = scmp.eq.s32.totalorder %s15, 0
    %p110 = por %p108, %p109
    %p111 = scmp.le.s32.totalorder 1, %s9
    %p112 = scmp.lt.s32.totalorder %s9, 3
    %p113 = pnand %p111, %p112
    %p114 = pneg %p113
    // Predicated region
    $region9: #{deap_forward.3} parent=5 // pred_check
      _
    $region10: #{deap_forward.3} parent=5 // pred_check_branch
      %116 = sbr.rel (%p113) target = $region12
    $region11: #{deap_forward.3} parent=5 // pred_region
      %s117 = ssub.s32 %s9, 1
      // Predicated region
      $region13: #{deap_forward.3} parent=11 // pred_check
        %p118 = pneg %p56
      $region14: #{deap_forward.3} parent=11 // pred_check_branch
        %120 = sbr.rel (%p118) target = $region16
      $region15: #{deap_forward.3} parent=11 // pred_region
        _
      $region16: #{deap_forward.3} parent=11 // pred_fallthru
        _
      // Predicated region
      $region17: #{deap_forward.3} parent=11 // pred_check
        %p121 = pneg %p77
      $region18: #{deap_forward.3} parent=11 // pred_check_branch
        %123 = sbr.rel (%p121) target = $region20
      $region19: #{deap_forward.3} parent=11 // pred_region
        _
      $region20: #{deap_forward.3} parent=11 // pred_fallthru
        _
    $region12: #{deap_forward.3} parent=5 // pred_fallthru
      _
    %p124 = scmp.lt.s32.totalorder %s9, 2
    // Predicated region
    $region21: #{deap_forward.3} parent=5 // pred_check
      %p125 = pneg %p124
    $region22: #{deap_forward.3} parent=5 // pred_check_branch
      %127 = sbr.rel (%p125) target = $region24
    $region23: #{deap_forward.3} parent=5 // pred_region
      // Predicated region
      $region25: #{deap_forward.3} parent=23 // pred_check
        %p128 = pneg %p29
      $region26: #{deap_forward.3} parent=23 // pred_check_branch
        %130 = sbr.rel (%p128) target = $region28
      $region27: #{deap_forward.3} parent=23 // pred_region
        %p131 = scmp.lt.s32.totalorder %s9, 1
        %s132 = scalar_select %p131, %s9, 1
        %s133 = smul.addr %s132, 54
        %s134 = smul.addr %s133, 4
        %s135 = scalar_lea.vmem %s0, %s134
      $region28: #{deap_forward.3} parent=23 // pred_fallthru
        _
    $region24: #{deap_forward.3} parent=5 // pred_fallthru
      _
    %p136 = scmp.le.s32.totalorder 1, %s9
    %p137 = scmp.lt.s32.totalorder %s9, 3
    %p138 = pnand %p136, %p137
    %p139 = pneg %p138
    // Predicated region
    $region29: #{deap_forward.3} parent=5 // pred_check
      _
    $region30: #{deap_forward.3} parent=5 // pred_check_branch
      %141 = sbr.rel (%p138) target = $region32
    $region31: #{deap_forward.3} parent=5 // pred_region
      %s142 = ssub.s32 %s9, 1
      %p143 = scmp.lt.s32.totalorder %s14, 1
      %s144 = scalar_select %p143, %s14, 1
      %s145 = smul.addr %s144, 54
      %s146 = smul.addr %s145, 4
      %s147 = scalar_lea.vmem %s0, %s146
      %p148 = pneg %p35
      %p149 = pneg %p32
      %p150 = pneg %p56
      %p151 = pneg %p53
      %p152 = pneg %p77
      %p153 = pneg %p74
      %p154 = pneg %p103
      %p155 = pneg %p100
      %p156 = scmp.lt.s32.totalorder %s14, 1
      %s157 = scalar_select %p156, %s14, 1
      %s158 = smul.addr %s157, 24
      %s159 = smul.addr %s158, 4
      %s160 = scalar_lea.vmem %s3, %s159
      %p161 = scmp.lt.s32.totalorder %s14, 1
      %s162 = scalar_select %p161, %s14, 1
      %s163 = smul.addr %s162, 54
      %s164 = smul.addr %s163, 4
      %s165 = scalar_lea.vmem %s0, %s164
      %p166 = scmp.lt.s32.totalorder %s14, 1
      %s167 = scalar_select %p166, %s14, 1
      %s168 = smul.addr %s167, 24
      %s169 = smul.addr %s168, 4
      %s170 = scalar_lea.vmem %s3, %s169
      %v172 = vld [vmem:[%s165] sm:$0xff]
      %v173 = vld [vmem:[%s165 + $0x8] sm:$0xf]
      %v174 = vld [vmem:[%s165 + $0xc] sm:$0xff]
      %v175 = vld [vmem:[%s165 + $0x14] sm:$0xf]
      %v176 = vld [vmem:[%s165 + $0x18] sm:$0xff]
      %v177 = vld [vmem:[%s165 + $0x20] sm:$0xf]
      %v178 = vld [vmem:[%s165 + $0x24] sm:$0xff]
      %v179 = vld [vmem:[%s165 + $0x2c] sm:$0xf]
      %v180 = vld [vmem:[%s165 + $0x30] sm:$0xff]
      %v181 = vld [vmem:[%s165 + $0x38] sm:$0xf]
      %v182 = vld [vmem:[%s165 + $0x3c] sm:$0xff]
      %v183 = vld [vmem:[%s165 + $0x44] sm:$0xf]
      %v184 = vld [vmem:[%s165 + $0x48] sm:$0xff]
      %v185 = vld [vmem:[%s165 + $0x50] sm:$0xf]
      %v186 = vld [vmem:[%s165 + $0x54] sm:$0xff]
      %v187 = vld [vmem:[%s165 + $0x5c] sm:$0xf]
      %v188 = vld [vmem:[%s165 + $0x60] sm:$0xff]
      %v189 = vld [vmem:[%s165 + $0x68] sm:$0xf]
      %v190 = vld [vmem:[%s165 + $0x6c] sm:$0xff]
      %v191 = vld [vmem:[%s165 + $0x74] sm:$0xf]
      %v192 = vld [vmem:[%s165 + $0x78] sm:$0xff]
      %v193 = vld [vmem:[%s165 + $0x80] sm:$0xf]
      %v194 = vld [vmem:[%s165 + $0x84] sm:$0xff]
      %v195 = vld [vmem:[%s165 + $0x8c] sm:$0xf]
      %v196 = vld [vmem:[%s165 + $0x90] sm:$0xff]
      %v197 = vld [vmem:[%s165 + $0x98] sm:$0xf]
      %v198 = vld [vmem:[%s165 + $0x9c] sm:$0xff]
      %v199 = vld [vmem:[%s165 + $0xa4] sm:$0xf]
      %v200 = vld [vmem:[%s165 + $0xa8] sm:$0xff]
      %v201 = vld [vmem:[%s165 + $0xb0] sm:$0xf]
      %v202 = vld [vmem:[%s165 + $0xb4] sm:$0xff]
      %v203 = vld [vmem:[%s165 + $0xbc] sm:$0xf]
      %v204 = vld [vmem:[%s165 + $0xc0] sm:$0xff]
      %v205 = vld [vmem:[%s165 + $0xc8] sm:$0xf]
      %v206 = vld [vmem:[%s165 + $0xcc] sm:$0xff]
      %v207 = vld [vmem:[%s165 + $0xd4] sm:$0xf]
      %v208 = vld [vmem:[%s1] sm:$0xff]
      %v209 = vld [vmem:[%s1 + $0x8] sm:$0xf]
      %v210 = vld [vmem:[%s1 + $0xc] sm:$0xff]
      %v211 = vld [vmem:[%s1 + $0x14] sm:$0xf]
      %v212 = vld [vmem:[%s1 + $0x18] sm:$0xff]
      %v213 = vld [vmem:[%s1 + $0x20] sm:$0xf]
      %v214 = vld [vmem:[%s1 + $0x24] sm:$0xff]
      %v215 = vld [vmem:[%s1 + $0x2c] sm:$0xf]
      %v216 = vld [vmem:[%s1 + $0x30] sm:$0xff]
      %v217 = vld [vmem:[%s1 + $0x38] sm:$0xf]
      %v218 = vld [vmem:[%s1 + $0x3c] sm:$0xff]
      %v219 = vld [vmem:[%s1 + $0x44] sm:$0xf]
      %v220 = vld [vmem:[%s1 + $0x48] sm:$0xff]
      %v221 = vld [vmem:[%s1 + $0x50] sm:$0xf]
      %v222 = vld [vmem:[%s1 + $0x54] sm:$0xff]
      %v223 = vld [vmem:[%s1 + $0x5c] sm:$0xf]
      %v224 = vld [vmem:[%s1 + $0x60] sm:$0xff]
      %v225 = vld [vmem:[%s1 + $0x68] sm:$0xf]
      %v226 = vld [vmem:[%s1 + $0x6c] sm:$0xff]
      %v227 = vld [vmem:[%s1 + $0x74] sm:$0xf]
      %v228 = vld [vmem:[%s1 + $0x78] sm:$0xff]
      %v229 = vld [vmem:[%s1 + $0x80] sm:$0xf]
      %v230 = vld [vmem:[%s1 + $0x84] sm:$0xff]
      %v231 = vld [vmem:[%s1 + $0x8c] sm:$0xf]
      %v232 = vld [vmem:[%s1 + $0x90] sm:$0xff]
      %v233 = vld [vmem:[%s1 + $0x98] sm:$0xf]
      %v234 = vld [vmem:[%s1 + $0x9c] sm:$0xff]
      %v235 = vld [vmem:[%s1 + $0xa4] sm:$0xf]
      %v236 = vld [vmem:[%s1 + $0xa8] sm:$0xff]
      %v237 = vld [vmem:[%s1 + $0xb0] sm:$0xf]
      %v238 = vld [vmem:[%s1 + $0xb4] sm:$0xff]
      %v239 = vld [vmem:[%s1 + $0xbc] sm:$0xf]
      %v240 = vld [vmem:[%s1 + $0xc0] sm:$0xff]
      %v241 = vld [vmem:[%s1 + $0xc8] sm:$0xf]
      %v242 = vld [vmem:[%s1 + $0xcc] sm:$0xff]
      %v243 = vld [vmem:[%s1 + $0xd4] sm:$0xf]
      %v244 = vld [vmem:[%s1 + $0xd8] sm:$0xff]
      %v245 = vld [vmem:[%s1 + $0xe0] sm:$0xf]
      %v246 = vld [vmem:[%s1 + $0xe4] sm:$0xff]
      %v247 = vld [vmem:[%s1 + $0xec] sm:$0xf]
      %v248 = vld [vmem:[%s1 + $0xf0] sm:$0xff]
      %v249 = vld [vmem:[%s1 + $0xf8] sm:$0xf]
      %v250 = vld [vmem:[%s1 + $0xfc] sm:$0xff]
      %v251 = vld [vmem:[%s1 + $0x104] sm:$0xf]
      %v252 = vld [vmem:[%s1 + $0x108] sm:$0xff]
      %v253 = vld [vmem:[%s1 + $0x110] sm:$0xf]
      %v254 = vld [vmem:[%s1 + $0x114] sm:$0xff]
      %v255 = vld [vmem:[%s1 + $0x11c] sm:$0xf]
      %v256 = vld [vmem:[%s1 + $0x120] sm:$0xff]
      %v257 = vld [vmem:[%s1 + $0x128] sm:$0xf]
      %v258 = vld [vmem:[%s1 + $0x12c] sm:$0xff]
      %v259 = vld [vmem:[%s1 + $0x134] sm:$0xf]
      %v260 = vld [vmem:[%s1 + $0x138] sm:$0xff]
      %v261 = vld [vmem:[%s1 + $0x140] sm:$0xf]
      %v262 = vld [vmem:[%s1 + $0x144] sm:$0xff]
      %v263 = vld [vmem:[%s1 + $0x14c] sm:$0xf]
      %v264 = vld [vmem:[%s1 + $0x150] sm:$0xff]
      %v265 = vld [vmem:[%s1 + $0x158] sm:$0xf]
      %v266 = vld [vmem:[%s1 + $0x15c] sm:$0xff]
      %v267 = vld [vmem:[%s1 + $0x164] sm:$0xf]
      %v268 = vld [vmem:[%s1 + $0x168] sm:$0xff]
      %v269 = vld [vmem:[%s1 + $0x170] sm:$0xf]
      %v270 = vld [vmem:[%s1 + $0x174] sm:$0xff]
      %v271 = vld [vmem:[%s1 + $0x17c] sm:$0xf]
      %v272 = vld [vmem:[%s1 + $0x180] sm:$0xff]
      %v273 = vld [vmem:[%s1 + $0x188] sm:$0xf]
      %v274 = vld [vmem:[%s1 + $0x18c] sm:$0xff]
      %v275 = vld [vmem:[%s1 + $0x194] sm:$0xf]
      %v276 = vld [vmem:[%s1 + $0x198] sm:$0xff]
      %v277 = vld [vmem:[%s1 + $0x1a0] sm:$0xf]
      %v278 = vld [vmem:[%s1 + $0x1a4] sm:$0xff]
      %v279 = vld [vmem:[%s1 + $0x1ac] sm:$0xf]
      %v280 = vld [vmem:[%s1 + $0x1b0] sm:$0xff]
      %v281 = vld [vmem:[%s1 + $0x1b8] sm:$0xf]
      %v282 = vld [vmem:[%s1 + $0x1bc] sm:$0xff]
      %v283 = vld [vmem:[%s1 + $0x1c4] sm:$0xf]
      %v284 = vld [vmem:[%s1 + $0x1c8] sm:$0xff]
      %v285 = vld [vmem:[%s1 + $0x1d0] sm:$0xf]
      %v286 = vld [vmem:[%s1 + $0x1d4] sm:$0xff]
      %v287 = vld [vmem:[%s1 + $0x1dc] sm:$0xf]
      %v288 = vld [vmem:[%s1 + $0x1e0] sm:$0xff]
      %v289 = vld [vmem:[%s1 + $0x1e8] sm:$0xf]
      %v290 = vld [vmem:[%s1 + $0x1ec] sm:$0xff]
      %v291 = vld [vmem:[%s1 + $0x1f4] sm:$0xf]
      %v292 = vld [vmem:[%s1 + $0x1f8] sm:$0xff]
      %v293 = vld [vmem:[%s1 + $0x200] sm:$0xf]
      %v294 = vld [vmem:[%s1 + $0x204] sm:$0xff]
      %v295 = vld [vmem:[%s1 + $0x20c] sm:$0xf]
      %v296 = vld [vmem:[%s1 + $0x210] sm:$0xff]
      %v297 = vld [vmem:[%s1 + $0x218] sm:$0xf]
      %v298 = vld [vmem:[%s1 + $0x21c] sm:$0xff]
      %v299 = vld [vmem:[%s1 + $0x224] sm:$0xf]
      %v300 = vld [vmem:[%s1 + $0x228] sm:$0xff]
      %v301 = vld [vmem:[%s1 + $0x230] sm:$0xf]
      %v302 = vld [vmem:[%s1 + $0x234] sm:$0xff]
      %v303 = vld [vmem:[%s1 + $0x23c] sm:$0xf]
      %v304 = vld [vmem:[%s1 + $0x240] sm:$0xff]
      %v305 = vld [vmem:[%s1 + $0x248] sm:$0xf]
      %v306 = vld [vmem:[%s1 + $0x24c] sm:$0xff]
      %v307 = vld [vmem:[%s1 + $0x254] sm:$0xf]
      %v308 = vld [vmem:[%s1 + $0x258] sm:$0xff]
      %v309 = vld [vmem:[%s1 + $0x260] sm:$0xf]
      %v310 = vld [vmem:[%s1 + $0x264] sm:$0xff]
      %v311 = vld [vmem:[%s1 + $0x26c] sm:$0xf]
      %v312 = vld [vmem:[%s1 + $0x270] sm:$0xff]
      %v313 = vld [vmem:[%s1 + $0x278] sm:$0xf]
      %v314 = vld [vmem:[%s1 + $0x27c] sm:$0xff]
      %v315 = vld [vmem:[%s1 + $0x284] sm:$0xf]
      %v316 = vld [vmem:[%s1 + $0x288] sm:$0xff]
      %v317 = vld [vmem:[%s1 + $0x290] sm:$0xf]
      %v318 = vld [vmem:[%s1 + $0x294] sm:$0xff]
      %v319 = vld [vmem:[%s1 + $0x29c] sm:$0xf]
      %v320 = vld [vmem:[%s1 + $0x2a0] sm:$0xff]
      %v321 = vld [vmem:[%s1 + $0x2a8] sm:$0xf]
      %v322 = vld [vmem:[%s1 + $0x2ac] sm:$0xff]
      %v323 = vld [vmem:[%s1 + $0x2b4] sm:$0xf]
      %v324 = vld [vmem:[%s1 + $0x2b8] sm:$0xff]
      %v325 = vld [vmem:[%s1 + $0x2c0] sm:$0xf]
      %v326 = vld [vmem:[%s1 + $0x2c4] sm:$0xff]
      %v327 = vld [vmem:[%s1 + $0x2cc] sm:$0xf]
      %v328 = vld [vmem:[%s1 + $0x2d0] sm:$0xff]
      %v329 = vld [vmem:[%s1 + $0x2d8] sm:$0xf]
      %v330 = vld [vmem:[%s1 + $0x2dc] sm:$0xff]
      %v331 = vld [vmem:[%s1 + $0x2e4] sm:$0xf]
      %v332 = vld [vmem:[%s1 + $0x2e8] sm:$0xff]
      %v333 = vld [vmem:[%s1 + $0x2f0] sm:$0xf]
      %v334 = vld [vmem:[%s1 + $0x2f4] sm:$0xff]
      %v335 = vld [vmem:[%s1 + $0x2fc] sm:$0xf]
      %v336 = vld [vmem:[%s1 + $0x300] sm:$0xff]
      %v337 = vld [vmem:[%s1 + $0x308] sm:$0xf]
      %v338 = vld [vmem:[%s1 + $0x30c] sm:$0xff]
      %v339 = vld [vmem:[%s1 + $0x314] sm:$0xf]
      %v340 = vld [vmem:[%s1 + $0x318] sm:$0xff]
      %v341 = vld [vmem:[%s1 + $0x320] sm:$0xf]
      %v342 = vld [vmem:[%s1 + $0x324] sm:$0xff]
      %v343 = vld [vmem:[%s1 + $0x32c] sm:$0xf]
      %v344 = vld [vmem:[%s1 + $0x330] sm:$0xff]
      %v345 = vld [vmem:[%s1 + $0x338] sm:$0xf]
      %v346 = vld [vmem:[%s1 + $0x33c] sm:$0xff]
      %v347 = vld [vmem:[%s1 + $0x344] sm:$0xf]
      %v348 = vld [vmem:[%s1 + $0x348] sm:$0xff]
      %v349 = vld [vmem:[%s1 + $0x350] sm:$0xf]
      %v350 = vld [vmem:[%s1 + $0x354] sm:$0xff]
      %v351 = vld [vmem:[%s1 + $0x35c] sm:$0xf]
      %v352 = vld [vmem:[%s1 + $0x360] sm:$0xff]
      %v353 = vld [vmem:[%s1 + $0x368] sm:$0xf]
      %v354 = vld [vmem:[%s1 + $0x36c] sm:$0xff]
      %v355 = vld [vmem:[%s1 + $0x374] sm:$0xf]
      %v356 = vld [vmem:[%s1 + $0x378] sm:$0xff]
      %v357 = vld [vmem:[%s1 + $0x380] sm:$0xf]
      %v358 = vld [vmem:[%s1 + $0x384] sm:$0xff]
      %v359 = vld [vmem:[%s1 + $0x38c] sm:$0xf]
      %v360 = vld [vmem:[%s1 + $0x390] sm:$0xff]
      %v361 = vld [vmem:[%s1 + $0x398] sm:$0xf]
      %v362 = vld [vmem:[%s1 + $0x39c] sm:$0xff]
      %v363 = vld [vmem:[%s1 + $0x3a4] sm:$0xf]
      %v364 = vld [vmem:[%s1 + $0x3a8] sm:$0xff]
      %v365 = vld [vmem:[%s1 + $0x3b0] sm:$0xf]
      %v366 = vld [vmem:[%s1 + $0x3b4] sm:$0xff]
      %v367 = vld [vmem:[%s1 + $0x3bc] sm:$0xf]
      %v368 = vld [vmem:[%s1 + $0x3c0] sm:$0xff]
      %v369 = vld [vmem:[%s1 + $0x3c8] sm:$0xf]
      %v370 = vld [vmem:[%s1 + $0x3cc] sm:$0xff]
      %v371 = vld [vmem:[%s1 + $0x3d4] sm:$0xf]
      %v372 = vld [vmem:[%s1 + $0x3d8] sm:$0xff]
      %v373 = vld [vmem:[%s1 + $0x3e0] sm:$0xf]
      %v374 = vld [vmem:[%s1 + $0x3e4] sm:$0xff]
      %v375 = vld [vmem:[%s1 + $0x3ec] sm:$0xf]
      %v376 = vld [vmem:[%s1 + $0x3f0] sm:$0xff]
      %v377 = vld [vmem:[%s1 + $0x3f8] sm:$0xf]
      %v378 = vld [vmem:[%s1 + $0x3fc] sm:$0xff]
      %v379 = vld [vmem:[%s1 + $0x404] sm:$0xf]
      %v380 = vld [vmem:[%s1 + $0x408] sm:$0xff]
      %v381 = vld [vmem:[%s1 + $0x410] sm:$0xf]
      %v382 = vld [vmem:[%s1 + $0x414] sm:$0xff]
      %v383 = vld [vmem:[%s1 + $0x41c] sm:$0xf]
      %v384 = vld [vmem:[%s1 + $0x420] sm:$0xff]
      %v385 = vld [vmem:[%s1 + $0x428] sm:$0xf]
      %v386 = vld [vmem:[%s1 + $0x42c] sm:$0xff]
      %v387 = vld [vmem:[%s1 + $0x434] sm:$0xf]
      %v388 = vld [vmem:[%s1 + $0x438] sm:$0xff]
      %v389 = vld [vmem:[%s1 + $0x440] sm:$0xf]
      %v390 = vld [vmem:[%s1 + $0x444] sm:$0xff]
      %v391 = vld [vmem:[%s1 + $0x44c] sm:$0xf]
      %v392 = vld [vmem:[%s1 + $0x450] sm:$0xff]
      %v393 = vld [vmem:[%s1 + $0x458] sm:$0xf]
      %v394 = vld [vmem:[%s1 + $0x45c] sm:$0xff]
      %v395 = vld [vmem:[%s1 + $0x464] sm:$0xf]
      %v396 = vld [vmem:[%s1 + $0x468] sm:$0xff]
      %v397 = vld [vmem:[%s1 + $0x470] sm:$0xf]
      %v398 = vld [vmem:[%s1 + $0x474] sm:$0xff]
      %v399 = vld [vmem:[%s1 + $0x47c] sm:$0xf]
      %v400 = vld [vmem:[%s1 + $0x480] sm:$0xff]
      %v401 = vld [vmem:[%s1 + $0x488] sm:$0xf]
      %v402 = vld [vmem:[%s1 + $0x48c] sm:$0xff]
      %v403 = vld [vmem:[%s1 + $0x494] sm:$0xf]
      %v404 = vld [vmem:[%s1 + $0x498] sm:$0xff]
      %v405 = vld [vmem:[%s1 + $0x4a0] sm:$0xf]
      %v406 = vld [vmem:[%s1 + $0x4a4] sm:$0xff]
      %v407 = vld [vmem:[%s1 + $0x4ac] sm:$0xf]
      %v408 = vld [vmem:[%s1 + $0x4b0] sm:$0xff]
      %v409 = vld [vmem:[%s1 + $0x4b8] sm:$0xf]
      %v410 = vld [vmem:[%s1 + $0x4bc] sm:$0xff]
      %v411 = vld [vmem:[%s1 + $0x4c4] sm:$0xf]
      %v412 = vld [vmem:[%s1 + $0x4c8] sm:$0xff]
      %v413 = vld [vmem:[%s1 + $0x4d0] sm:$0xf]
      %v414 = vld [vmem:[%s1 + $0x4d4] sm:$0xff]
      %v415 = vld [vmem:[%s1 + $0x4dc] sm:$0xf]
      %v416 = vld [vmem:[%s1 + $0x4e0] sm:$0xff]
      %v417 = vld [vmem:[%s1 + $0x4e8] sm:$0xf]
      %v418 = vld [vmem:[%s1 + $0x4ec] sm:$0xff]
      %v419 = vld [vmem:[%s1 + $0x4f4] sm:$0xf]
      %v420 = vld [vmem:[%s1 + $0x4f8] sm:$0xff]
      %v421 = vld [vmem:[%s1 + $0x500] sm:$0xf]
      %v422 = vld [vmem:[%s1 + $0x504] sm:$0xff]
      %v423 = vld [vmem:[%s1 + $0x50c] sm:$0xf]
      %v424 = vld [vmem:[%s1 + $0x510] sm:$0xff]
      %v425 = vld [vmem:[%s1 + $0x518] sm:$0xf]
      %v426 = vld [vmem:[%s1 + $0x51c] sm:$0xff]
      %v427 = vld [vmem:[%s1 + $0x524] sm:$0xf]
      %v428 = vld [vmem:[%s1 + $0x528] sm:$0xff]
      %v429 = vld [vmem:[%s1 + $0x530] sm:$0xf]
      %v430 = vld [vmem:[%s1 + $0x534] sm:$0xff]
      %v431 = vld [vmem:[%s1 + $0x53c] sm:$0xf]
      %v432 = vld [vmem:[%s1 + $0x540] sm:$0xff]
      %v433 = vld [vmem:[%s1 + $0x548] sm:$0xf]
      %v434 = vld [vmem:[%s1 + $0x54c] sm:$0xff]
      %v435 = vld [vmem:[%s1 + $0x554] sm:$0xf]
      %v436 = vld [vmem:[%s1 + $0x558] sm:$0xff]
      %v437 = vld [vmem:[%s1 + $0x560] sm:$0xf]
      %v438 = vld [vmem:[%s1 + $0x564] sm:$0xff]
      %v439 = vld [vmem:[%s1 + $0x56c] sm:$0xf]
      %v440 = vld [vmem:[%s1 + $0x570] sm:$0xff]
      %v441 = vld [vmem:[%s1 + $0x578] sm:$0xf]
      %v442 = vld [vmem:[%s1 + $0x57c] sm:$0xff]
      %v443 = vld [vmem:[%s1 + $0x584] sm:$0xf]
      %v444 = vld [vmem:[%s1 + $0x588] sm:$0xff]
      %v445 = vld [vmem:[%s1 + $0x590] sm:$0xf]
      %v446 = vld [vmem:[%s1 + $0x594] sm:$0xff]
      %v447 = vld [vmem:[%s1 + $0x59c] sm:$0xf]
      %v448 = vld [vmem:[%s1 + $0x5a0] sm:$0xff]
      %v449 = vld [vmem:[%s1 + $0x5a8] sm:$0xf]
      %v450 = vld [vmem:[%s1 + $0x5ac] sm:$0xff]
      %v451 = vld [vmem:[%s1 + $0x5b4] sm:$0xf]
      %v452 = vld [vmem:[%s1 + $0x5b8] sm:$0xff]
      %v453 = vld [vmem:[%s1 + $0x5c0] sm:$0xf]
      %v454 = vld [vmem:[%s1 + $0x5c4] sm:$0xff]
      %v455 = vld [vmem:[%s1 + $0x5cc] sm:$0xf]
      %v456 = vld [vmem:[%s1 + $0x5d0] sm:$0xff]
      %v457 = vld [vmem:[%s1 + $0x5d8] sm:$0xf]
      %v458 = vld [vmem:[%s1 + $0x5dc] sm:$0xff]
      %v459 = vld [vmem:[%s1 + $0x5e4] sm:$0xf]
      %v460 = vld [vmem:[%s1 + $0x5e8] sm:$0xff]
      %v461 = vld [vmem:[%s1 + $0x5f0] sm:$0xf]
      %v462 = vld [vmem:[%s1 + $0x5f4] sm:$0xff]
      %v463 = vld [vmem:[%s1 + $0x5fc] sm:$0xf]
      %v464 = vld [vmem:[%s1 + $0x600] sm:$0xff]
      %v465 = vld [vmem:[%s1 + $0x608] sm:$0xf]
      %v466 = vld [vmem:[%s1 + $0x60c] sm:$0xff]
      %v467 = vld [vmem:[%s1 + $0x614] sm:$0xf]
      %v468 = vld [vmem:[%s1 + $0x618] sm:$0xff]
      %v469 = vld [vmem:[%s1 + $0x620] sm:$0xf]
      %v470 = vld [vmem:[%s1 + $0x624] sm:$0xff]
      %v471 = vld [vmem:[%s1 + $0x62c] sm:$0xf]
      %v472 = vld [vmem:[%s1 + $0x630] sm:$0xff]
      %v473 = vld [vmem:[%s1 + $0x638] sm:$0xf]
      %v474 = vld [vmem:[%s1 + $0x63c] sm:$0xff]
      %v475 = vld [vmem:[%s1 + $0x644] sm:$0xf]
      %v476 = vld [vmem:[%s1 + $0x648] sm:$0xff]
      %v477 = vld [vmem:[%s1 + $0x650] sm:$0xf]
      %v478 = vld [vmem:[%s1 + $0x654] sm:$0xff]
      %v479 = vld [vmem:[%s1 + $0x65c] sm:$0xf]
      %v480 = vld [vmem:[%s1 + $0x660] sm:$0xff]
      %v481 = vld [vmem:[%s1 + $0x668] sm:$0xf]
      %v482 = vld [vmem:[%s1 + $0x66c] sm:$0xff]
      %v483 = vld [vmem:[%s1 + $0x674] sm:$0xf]
      %v484 = vld [vmem:[%s1 + $0x678] sm:$0xff]
      %v485 = vld [vmem:[%s1 + $0x680] sm:$0xf]
      %v486 = vld [vmem:[%s1 + $0x684] sm:$0xff]
      %v487 = vld [vmem:[%s1 + $0x68c] sm:$0xf]
      %v488 = vld [vmem:[%s1 + $0x690] sm:$0xff]
      %v489 = vld [vmem:[%s1 + $0x698] sm:$0xf]
      %v490 = vld [vmem:[%s1 + $0x69c] sm:$0xff]
      %v491 = vld [vmem:[%s1 + $0x6a4] sm:$0xf]
      %v492 = vld [vmem:[%s1 + $0x6a8] sm:$0xff]
      %v493 = vld [vmem:[%s1 + $0x6b0] sm:$0xf]
      %v494 = vld [vmem:[%s1 + $0x6b4] sm:$0xff]
      %v495 = vld [vmem:[%s1 + $0x6bc] sm:$0xf]
      %v512 = vunpack.c.l.b16 %v192
      %v513 = vunpack.c.h.b16 %v192
      %v514 = vunpack.c.l.b16 %v193
      %v515 = vunpack.c.l.b16 %v194
      %v516 = vunpack.c.h.b16 %v194
      %v517 = vunpack.c.l.b16 %v195
      %v518 = vunpack.c.l.b16 %v196
      %v519 = vunpack.c.h.b16 %v196
      %v520 = vunpack.c.l.b16 %v197
      %v521 = vunpack.c.l.b16 %v198
      %v522 = vunpack.c.h.b16 %v198
      %v523 = vunpack.c.l.b16 %v199
      %v524 = vunpack.c.l.b16 %v200
      %v525 = vunpack.c.h.b16 %v200
      %v526 = vunpack.c.l.b16 %v201
      %v527 = vunpack.c.l.b16 %v202
      %v528 = vunpack.c.h.b16 %v202
      %v529 = vunpack.c.l.b16 %v203
      %v530 = vunpack.c.l.b16 %v204
      %v531 = vunpack.c.h.b16 %v204
      %v532 = vunpack.c.l.b16 %v205
      %v533 = vunpack.c.l.b16 %v206
      %v534 = vunpack.c.h.b16 %v206
      %v535 = vunpack.c.l.b16 %v207
      %v536 = vpack.c.b16 %v515, %v512
      %v537 = vpack.c.b16 %v516, %v513
      %v538 = vpack.c.b16 %v517, %v514
      %v539 = vpack.c.b16 %v521, %v518
      %v540 = vpack.c.b16 %v522, %v519
      %v541 = vpack.c.b16 %v523, %v520
      %v542 = vpack.c.b16 %v527, %v524
      %v543 = vpack.c.b16 %v528, %v525
      %v544 = vpack.c.b16 %v529, %v526
      %v545 = vpack.c.b16 %v533, %v530
      %v546 = vpack.c.b16 %v534, %v531
      %v547 = vpack.c.b16 %v535, %v532
      %v656 = vunpack.c.l.b16 %v304
      %v657 = vunpack.c.h.b16 %v304
      %v658 = vunpack.c.l.b16 %v305
      %v659 = vunpack.c.l.b16 %v306
      %v660 = vunpack.c.h.b16 %v306
      %v661 = vunpack.c.l.b16 %v307
      %v662 = vunpack.c.l.b16 %v308
      %v663 = vunpack.c.h.b16 %v308
      %v664 = vunpack.c.l.b16 %v309
      %v665 = vunpack.c.l.b16 %v310
      %v666 = vunpack.c.h.b16 %v310
      %v667 = vunpack.c.l.b16 %v311
      %v668 = vunpack.c.l.b16 %v312
      %v669 = vunpack.c.h.b16 %v312
      %v670 = vunpack.c.l.b16 %v313
      %v671 = vunpack.c.l.b16 %v314
      %v672 = vunpack.c.h.b16 %v314
      %v673 = vunpack.c.l.b16 %v315
      %v674 = vunpack.c.l.b16 %v316
      %v675 = vunpack.c.h.b16 %v316
      %v676 = vunpack.c.l.b16 %v317
      %v677 = vunpack.c.l.b16 %v318
      %v678 = vunpack.c.h.b16 %v318
      %v679 = vunpack.c.l.b16 %v319
      %v680 = vunpack.c.l.b16 %v320
      %v681 = vunpack.c.h.b16 %v320
      %v682 = vunpack.c.l.b16 %v321
      %v683 = vunpack.c.l.b16 %v322
      %v684 = vunpack.c.h.b16 %v322
      %v685 = vunpack.c.l.b16 %v323
      %v686 = vunpack.c.l.b16 %v324
      %v687 = vunpack.c.h.b16 %v324
      %v688 = vunpack.c.l.b16 %v325
      %v689 = vunpack.c.l.b16 %v326
      %v690 = vunpack.c.h.b16 %v326
      %v691 = vunpack.c.l.b16 %v327
      %v692 = vunpack.c.l.b16 %v328
      %v693 = vunpack.c.h.b16 %v328
      %v694 = vunpack.c.l.b16 %v329
      %v695 = vunpack.c.l.b16 %v330
      %v696 = vunpack.c.h.b16 %v330
      %v697 = vunpack.c.l.b16 %v331
      %v698 = vunpack.c.l.b16 %v332
      %v699 = vunpack.c.h.b16 %v332
      %v700 = vunpack.c.l.b16 %v333
      %v701 = vunpack.c.l.b16 %v334
      %v702 = vunpack.c.h.b16 %v334
      %v703 = vunpack.c.l.b16 %v335
      %v704 = vunpack.c.l.b16 %v336
      %v705 = vunpack.c.h.b16 %v336
      %v706 = vunpack.c.l.b16 %v337
      %v707 = vunpack.c.l.b16 %v338
      %v708 = vunpack.c.h.b16 %v338
      %v709 = vunpack.c.l.b16 %v339
      %v710 = vunpack.c.l.b16 %v340
      %v711 = vunpack.c.h.b16 %v340
      %v712 = vunpack.c.l.b16 %v341
      %v713 = vunpack.c.l.b16 %v342
      %v714 = vunpack.c.h.b16 %v342
      %v715 = vunpack.c.l.b16 %v343
      %v716 = vunpack.c.l.b16 %v344
      %v717 = vunpack.c.h.b16 %v344
      %v718 = vunpack.c.l.b16 %v345
      %v719 = vunpack.c.l.b16 %v346
      %v720 = vunpack.c.h.b16 %v346
      %v721 = vunpack.c.l.b16 %v347
      %v722 = vunpack.c.l.b16 %v348
      %v723 = vunpack.c.h.b16 %v348
      %v724 = vunpack.c.l.b16 %v349
      %v725 = vunpack.c.l.b16 %v350
      %v726 = vunpack.c.h.b16 %v350
      %v727 = vunpack.c.l.b16 %v351
      %v728 = vunpack.c.l.b16 %v352
      %v729 = vunpack.c.h.b16 %v352
      %v730 = vunpack.c.l.b16 %v353
      %v731 = vunpack.c.l.b16 %v354
      %v732 = vunpack.c.h.b16 %v354
      %v733 = vunpack.c.l.b16 %v355
      %v734 = vunpack.c.l.b16 %v356
      %v735 = vunpack.c.h.b16 %v356
      %v736 = vunpack.c.l.b16 %v357
      %v737 = vunpack.c.l.b16 %v358
      %v738 = vunpack.c.h.b16 %v358
      %v739 = vunpack.c.l.b16 %v359
      %v740 = vunpack.c.l.b16 %v360
      %v741 = vunpack.c.h.b16 %v360
      %v742 = vunpack.c.l.b16 %v361
      %v743 = vunpack.c.l.b16 %v362
      %v744 = vunpack.c.h.b16 %v362
      %v745 = vunpack.c.l.b16 %v363
      %v746 = vunpack.c.l.b16 %v364
      %v747 = vunpack.c.h.b16 %v364
      %v748 = vunpack.c.l.b16 %v365
      %v749 = vunpack.c.l.b16 %v366
      %v750 = vunpack.c.h.b16 %v366
      %v751 = vunpack.c.l.b16 %v367
      %v752 = vunpack.c.l.b16 %v368
      %v753 = vunpack.c.h.b16 %v368
      %v754 = vunpack.c.l.b16 %v369
      %v755 = vunpack.c.l.b16 %v370
      %v756 = vunpack.c.h.b16 %v370
      %v757 = vunpack.c.l.b16 %v371
      %v758 = vunpack.c.l.b16 %v372
      %v759 = vunpack.c.h.b16 %v372
      %v760 = vunpack.c.l.b16 %v373
      %v761 = vunpack.c.l.b16 %v374
      %v762 = vunpack.c.h.b16 %v374
      %v763 = vunpack.c.l.b16 %v375
      %v764 = vunpack.c.l.b16 %v376
      %v765 = vunpack.c.h.b16 %v376
      %v766 = vunpack.c.l.b16 %v377
      %v767 = vunpack.c.l.b16 %v378
      %v768 = vunpack.c.h.b16 %v378
      %v769 = vunpack.c.l.b16 %v379
      %v770 = vunpack.c.l.b16 %v380
      %v771 = vunpack.c.h.b16 %v380
      %v772 = vunpack.c.l.b16 %v381
      %v773 = vunpack.c.l.b16 %v382
      %v774 = vunpack.c.h.b16 %v382
      %v775 = vunpack.c.l.b16 %v383
      %v776 = vunpack.c.l.b16 %v384
      %v777 = vunpack.c.h.b16 %v384
      %v778 = vunpack.c.l.b16 %v385
      %v779 = vunpack.c.l.b16 %v386
      %v780 = vunpack.c.h.b16 %v386
      %v781 = vunpack.c.l.b16 %v387
      %v782 = vunpack.c.l.b16 %v388
      %v783 = vunpack.c.h.b16 %v388
      %v784 = vunpack.c.l.b16 %v389
      %v785 = vunpack.c.l.b16 %v390
      %v786 = vunpack.c.h.b16 %v390
      %v787 = vunpack.c.l.b16 %v391
      %v788 = vunpack.c.l.b16 %v392
      %v789 = vunpack.c.h.b16 %v392
      %v790 = vunpack.c.l.b16 %v393
      %v791 = vunpack.c.l.b16 %v394
      %v792 = vunpack.c.h.b16 %v394
      %v793 = vunpack.c.l.b16 %v395
      %v794 = vunpack.c.l.b16 %v396
      %v795 = vunpack.c.h.b16 %v396
      %v796 = vunpack.c.l.b16 %v397
      %v797 = vunpack.c.l.b16 %v398
      %v798 = vunpack.c.h.b16 %v398
      %v799 = vunpack.c.l.b16 %v399
      %v800 = vpack.c.b16 %v659, %v656
      %v801 = vpack.c.b16 %v660, %v657
      %v802 = vpack.c.b16 %v661, %v658
      %v803 = vpack.c.b16 %v665, %v662
      %v804 = vpack.c.b16 %v666, %v663
      %v805 = vpack.c.b16 %v667, %v664
      %v806 = vpack.c.b16 %v671, %v668
      %v807 = vpack.c.b16 %v672, %v669
      %v808 = vpack.c.b16 %v673, %v670
      %v809 = vpack.c.b16 %v677, %v674
      %v810 = vpack.c.b16 %v678, %v675
      %v811 = vpack.c.b16 %v679, %v676
      %v812 = vpack.c.b16 %v683, %v680
      %v813 = vpack.c.b16 %v684, %v681
      %v814 = vpack.c.b16 %v685, %v682
      %v815 = vpack.c.b16 %v689, %v686
      %v816 = vpack.c.b16 %v690, %v687
      %v817 = vpack.c.b16 %v691, %v688
      %v818 = vpack.c.b16 %v695, %v692
      %v819 = vpack.c.b16 %v696, %v693
      %v820 = vpack.c.b16 %v697, %v694
      %v821 = vpack.c.b16 %v701, %v698
      %v822 = vpack.c.b16 %v702, %v699
      %v823 = vpack.c.b16 %v703, %v700
      %v824 = vpack.c.b16 %v707, %v704
      %v825 = vpack.c.b16 %v708, %v705
      %v826 = vpack.c.b16 %v709, %v706
      %v827 = vpack.c.b16 %v713, %v710
      %v828 = vpack.c.b16 %v714, %v711
      %v829 = vpack.c.b16 %v715, %v712
      %v830 = vpack.c.b16 %v719, %v716
      %v831 = vpack.c.b16 %v720, %v717
      %v832 = vpack.c.b16 %v721, %v718
      %v833 = vpack.c.b16 %v725, %v722
      %v834 = vpack.c.b16 %v726, %v723
      %v835 = vpack.c.b16 %v727, %v724
      %v836 = vpack.c.b16 %v731, %v728
      %v837 = vpack.c.b16 %v732, %v729
      %v838 = vpack.c.b16 %v733, %v730
      %v839 = vpack.c.b16 %v737, %v734
      %v840 = vpack.c.b16 %v738, %v735
      %v841 = vpack.c.b16 %v739, %v736
      %v842 = vpack.c.b16 %v743, %v740
      %v843 = vpack.c.b16 %v744, %v741
      %v844 = vpack.c.b16 %v745, %v742
      %v845 = vpack.c.b16 %v749, %v746
      %v846 = vpack.c.b16 %v750, %v747
      %v847 = vpack.c.b16 %v751, %v748
      %v848 = vpack.c.b16 %v755, %v752
      %v849 = vpack.c.b16 %v756, %v753
      %v850 = vpack.c.b16 %v757, %v754
      %v851 = vpack.c.b16 %v761, %v758
      %v852 = vpack.c.b16 %v762, %v759
      %v853 = vpack.c.b16 %v763, %v760
      %v854 = vpack.c.b16 %v767, %v764
      %v855 = vpack.c.b16 %v768, %v765
      %v856 = vpack.c.b16 %v769, %v766
      %v857 = vpack.c.b16 %v773, %v770
      %v858 = vpack.c.b16 %v774, %v771
      %v859 = vpack.c.b16 %v775, %v772
      %v860 = vpack.c.b16 %v779, %v776
      %v861 = vpack.c.b16 %v780, %v777
      %v862 = vpack.c.b16 %v781, %v778
      %v863 = vpack.c.b16 %v785, %v782
      %v864 = vpack.c.b16 %v786, %v783
      %v865 = vpack.c.b16 %v787, %v784
      %v866 = vpack.c.b16 %v791, %v788
      %v867 = vpack.c.b16 %v792, %v789
      %v868 = vpack.c.b16 %v793, %v790
      %v869 = vpack.c.b16 %v797, %v794
      %v870 = vpack.c.b16 %v798, %v795
      %v871 = vpack.c.b16 %v799, %v796
      %944 = vmatprep.subr.bf16.mxu0 %v801
      %945 = vmatpush1.bf16.msra.mxu0 %v800
      %946 = vmatprep.subr.bf16.mxu0 %v804
      %947 = vmatpush1.bf16.msra.mxu0 %v803
      %948 = vmatprep.subr.bf16.mxu0 %v807
      %949 = vmatpush1.bf16.msra.mxu0 %v806
      %950 = vmatprep.subr.bf16.mxu0 %v810
      %951 = vmatpush1.bf16.msra.mxu0 %v809
      %952 = vmatprep.subr.bf16.mxu0 %v813
      %953 = vmatpush1.bf16.msra.mxu0 %v812
      %954 = vmatprep.subr.bf16.mxu0 %v816
      %955 = vmatpush1.bf16.msra.mxu0 %v815
      %956 = vmatprep.subr.bf16.mxu0 %v819
      %957 = vmatpush1.bf16.msra.mxu0 %v818
      %958 = vmatprep.subr.bf16.mxu0 %v822
      %959 = vmatpush1.bf16.msra.mxu0 %v821
      %960 = vmatprep.subr.bf16.mxu0 %v825
      %961 = vmatpush1.bf16.msra.mxu0 %v824
      %962 = vmatprep.subr.bf16.mxu0 %v828
      %963 = vmatpush1.bf16.msra.mxu0 %v827
      %964 = vmatprep.subr.bf16.mxu0 %v831
      %965 = vmatpush1.bf16.msra.mxu0 %v830
      %966 = vmatprep.subr.bf16.mxu0 %v834
      %967 = vmatpush1.bf16.msra.mxu0 %v833
      %968 = vmatprep.subr.bf16.mxu0 %v837
      %969 = vmatpush1.bf16.msra.mxu0 %v836
      %970 = vmatprep.subr.bf16.mxu0 %v840
      %971 = vmatpush1.bf16.msra.mxu0 %v839
      %972 = vmatprep.subr.bf16.mxu0 %v843
      %973 = vmatpush1.bf16.msra.mxu0 %v842
      %974 = vmatprep.subr.bf16.mxu0 %v846
      %975 = vmatpush1.bf16.msra.mxu0 %v845
      %976 = vmatprep.mubr.bf16.mxu0 %v537
      %977 = vmatmul.mubr.bf16.gmra.mrb[0].mxu0 %v536
      %v978 = vpop.f32.mrb[0].mxu0
      %v979 = vadd.f32 0.0, %v978
      %v980 = vpop.f32.mrb[0].mxu0
      %v981 = vadd.f32 0.0, %v980
      %v982 = vpop.f32.mrb[0].mxu0
      %v983 = vadd.f32 0.0, %v982
      %v984 = vpop.f32.mrb[0].mxu0
      %v985 = vadd.f32 0.0, %v984
      %986 = vmatprep.mubr.bf16.mxu0 %v540
      %987 = vmatmul.mubr.bf16.gmra.mrb[0].mxu0 %v539
      %v988 = vpop.f32.mrb[0].mxu0
      %v989 = vadd.f32 0.0, %v988
      %v990 = vpop.f32.mrb[0].mxu0
      %v991 = vadd.f32 0.0, %v990
      %v992 = vpop.f32.mrb[0].mxu0
      %v993 = vadd.f32 0.0, %v992
      %v994 = vpop.f32.mrb[0].mxu0
      %v995 = vadd.f32 0.0, %v994
      %996 = vmatprep.mubr.bf16.mxu0 %v543
      %997 = vmatmul.mubr.bf16.gmra.mrb[0].mxu0 %v542
      %v998 = vpop.f32.mrb[0].mxu0
      %v999 = vadd.f32 0.0, %v998
      %v1000 = vpop.f32.mrb[0].mxu0
      %v1001 = vadd.f32 0.0, %v1000
      %v1002 = vpop.f32.mrb[0].mxu0
      %v1003 = vadd.f32 0.0, %v1002
      %v1004 = vpop.f32.mrb[0].mxu0
      %v1005 = vadd.f32 0.0, %v1004
      %1006 = vmatprep.mubr.bf16.mxu0 %v546
      %1007 = vmatmul.mubr.bf16.gmra.mrb[0].mxu0 %v545
      %v1008 = vpop.f32.mrb[0].mxu0
      %v1009 = vadd.f32 0.0, %v1008
      %v1010 = vpop.f32.mrb[0].mxu0
      %v1011 = vadd.f32 0.0, %v1010
      %v1012 = vpop.f32.mrb[0].mxu0
      %v1013 = vadd.f32 0.0, %v1012
      %v1014 = vpop.f32.mrb[0].mxu0
      %v1015 = vadd.f32 0.0, %v1014
      %1016 = vdwg.mxu0
      %1017 = vmatprep.subr.bf16.mxu0 %v849
      %1018 = vmatpush1.bf16.msra.mxu0 %v848
      %1019 = vmatprep.subr.bf16.mxu0 %v852
      %1020 = vmatpush1.bf16.msra.mxu0 %v851
      %1021 = vmatprep.subr.bf16.mxu0 %v855
      %1022 = vmatpush1.bf16.msra.mxu0 %v854
      %1023 = vmatprep.subr.bf16.mxu0 %v858
      %1024 = vmatpush1.bf16.msra.mxu0 %v857
      %1025 = vmatprep.subr.bf16.mxu0 %v861
      %1026 = vmatpush1.bf16.msra.mxu0 %v860
      %1027 = vmatprep.subr.bf16.mxu0 %v864
      %1028 = vmatpush1.bf16.msra.mxu0 %v863
      %1029 = vmatprep.subr.bf16.mxu0 %v867
      %1030 = vmatpush1.bf16.msra.mxu0 %v866
      %1031 = vmatprep.subr.bf16.mxu0 %v870
      %1032 = vmatpush1.bf16.msra.mxu0 %v869
      %1033 = vmatprep.subr.bf16.mxu0 0
      %1034 = vmatpush1.bf16.msra.mxu0 0
      %1035 = vmatprep.subr.bf16.mxu0 0
      %1036 = vmatpush1.bf16.msra.mxu0 0
      %1037 = vmatprep.subr.bf16.mxu0 0
      %1038 = vmatpush1.bf16.msra.mxu0 0
      %1039 = vmatprep.subr.bf16.mxu0 0
      %1040 = vmatpush1.bf16.msra.mxu0 0
      %1041 = vmatprep.subr.bf16.mxu0 0
      %1042 = vmatpush1.bf16.msra.mxu0 0
      %1043 = vmatprep.subr.bf16.mxu0 0
      %1044 = vmatpush1.bf16.msra.mxu0 0
      %1045 = vmatprep.subr.bf16.mxu0 0
      %1046 = vmatpush1.bf16.msra.mxu0 0
      %1047 = vmatprep.subr.bf16.mxu0 0
      %1048 = vmatpush1.bf16.msra.mxu0 0
      %1049 = vmatprep.mubr.bf16.mxu0 0
      %1050 = vmatmul.mubr.bf16.gmra.mrb[0].mxu0 %v538
      %v1051 = vpop.f32.mrb[0].mxu0
      %v1052 = vadd.f32 %v979, %v1051
      %v1053 = vpop.f32.mrb[0].mxu0
      %v1054 = vadd.f32 %v981, %v1053
      %v1055 = vpop.f32.mrb[0].mxu0
      %v1056 = vadd.f32 %v983, %v1055
      %v1057 = vpop.f32.mrb[0].mxu0
      %v1058 = vadd.f32 %v985, %v1057
      %1059 = vmatprep.mubr.bf16.mxu0 0
      %1060 = vmatmul.mubr.bf16.gmra.mrb[0].mxu0 %v541
      %v1061 = vpop.f32.mrb[0].mxu0
      %v1062 = vadd.f32 %v989, %v1061
      %v1063 = vpop.f32.mrb[0].mxu0
      %v1064 = vadd.f32 %v991, %v1063
      %v1065 = vpop.f32.mrb[0].mxu0
      %v1066 = vadd.f32 %v993, %v1065
      %v1067 = vpop.f32.mrb[0].mxu0
      %v1068 = vadd.f32 %v995, %v1067
      %1069 = vmatprep.mubr.bf16.mxu0 0
      %1070 = vmatmul.mubr.bf16.gmra.mrb[0].mxu0 %v544
      %v1071 = vpop.f32.mrb[0].mxu0
      %v1072 = vadd.f32 %v999, %v1071
      %v1073 = vpop.f32.mrb[0].mxu0
      %v1074 = vadd.f32 %v1001, %v1073
      %v1075 = vpop.f32.mrb[0].mxu0
      %v1076 = vadd.f32 %v1003, %v1075
      %v1077 = vpop.f32.mrb[0].mxu0
      %v1078 = vadd.f32 %v1005, %v1077
      %1079 = vmatprep.mubr.bf16.mxu0 0
      %1080 = vmatmul.mubr.bf16.gmra.mrb[0].mxu0 %v547
      %v1081 = vpop.f32.mrb[0].mxu0
      %v1082 = vadd.f32 %v1009, %v1081
      %v1083 = vpop.f32.mrb[0].mxu0
      %v1084 = vadd.f32 %v1011, %v1083
      %v1085 = vpop.f32.mrb[0].mxu0
      %v1086 = vadd.f32 %v1013, %v1085
      %v1087 = vpop.f32.mrb[0].mxu0
      %v1088 = vadd.f32 %v1015, %v1087
      %1089 = vdwg.mxu0
      %1090 = vmatprep.subr.bf16.mxu0 0
      %1091 = vmatpush1.bf16.msra.mxu0 %v802
      %1092 = vmatprep.subr.bf16.mxu0 0
      %1093 = vmatpush1.bf16.msra.mxu0 %v805
      %1094 = vmatprep.subr.bf16.mxu0 0
      %1095 = vmatpush1.bf16.msra.mxu0 %v808
      %1096 = vmatprep.subr.bf16.mxu0 0
      %1097 = vmatpush1.bf16.msra.mxu0 %v811
      %1098 = vmatprep.subr.bf16.mxu0 0
      %1099 = vmatpush1.bf16.msra.mxu0 %v814
      %1100 = vmatprep.subr.bf16.mxu0 0
      %1101 = vmatpush1.bf16.msra.mxu0 %v817
      %1102 = vmatprep.subr.bf16.mxu0 0
      %1103 = vmatpush1.bf16.msra.mxu0 %v820
      %1104 = vmatprep.subr.bf16.mxu0 0
      %1105 = vmatpush1.bf16.msra.mxu0 %v823
      %1106 = vmatprep.subr.bf16.mxu0 0
      %1107 = vmatpush1.bf16.msra.mxu0 %v826
      %1108 = vmatprep.subr.bf16.mxu0 0
      %1109 = vmatpush1.bf16.msra.mxu0 %v829
      %1110 = vmatprep.subr.bf16.mxu0 0
      %1111 = vmatpush1.bf16.msra.mxu0 %v832
      %1112 = vmatprep.subr.bf16.mxu0 0
      %1113 = vmatpush1.bf16.msra.mxu0 %v835
      %1114 = vmatprep.subr.bf16.mxu0 0
      %1115 = vmatpush1.bf16.msra.mxu0 %v838
      %1116 = vmatprep.subr.bf16.mxu0 0
      %1117 = vmatpush1.bf16.msra.mxu0 %v841
      %1118 = vmatprep.subr.bf16.mxu0 0
      %1119 = vmatpush1.bf16.msra.mxu0 %v844
      %1120 = vmatprep.subr.bf16.mxu0 0
      %1121 = vmatpush1.bf16.msra.mxu0 %v847
      %1122 = vmatprep.mubr.bf16.mxu0 %v537
      %1123 = vmatmul.mubr.bf16.gmra.mrb[0].mxu0 %v536
      %v1124 = vpop.f32.mrb[0].mxu0
      %v1125 = vadd.f32 0.0, %v1124
      %v1126 = vpop.f32.mrb[0].mxu0
      %v1127 = vpop.f32.mrb[0].mxu0
      %v1128 = vadd.f32 0.0, %v1127
      %v1129 = vpop.f32.mrb[0].mxu0
      %1130 = vmatprep.mubr.bf16.mxu0 %v540
      %1131 = vmatmul.mubr.bf16.gmra.mrb[0].mxu0 %v539
      %v1132 = vpop.f32.mrb[0].mxu0
      %v1133 = vadd.f32 0.0, %v1132
      %v1134 = vpop.f32.mrb[0].mxu0
      %v1135 = vpop.f32.mrb[0].mxu0
      %v1136 = vadd.f32 0.0, %v1135
      %v1137 = vpop.f32.mrb[0].mxu0
      %1138 = vmatprep.mubr.bf16.mxu0 %v543
      %1139 = vmatmul.mubr.bf16.gmra.mrb[0].mxu0 %v542
      %v1140 = vpop.f32.mrb[0].mxu0
      %v1141 = vadd.f32 0.0, %v1140
      %v1142 = vpop.f32.mrb[0].mxu0
      %v1143 = vpop.f32.mrb[0].mxu0
      %v1144 = vadd.f32 0.0, %v1143
      %v1145 = vpop.f32.mrb[0].mxu0
      %1146 = vmatprep.mubr.bf16.mxu0 %v546
      %1147 = vmatmul.mubr.bf16.gmra.mrb[0].mxu0 %v545
      %v1148 = vpop.f32.mrb[0].mxu0
      %v1149 = vadd.f32 0.0, %v1148
      %v1150 = vpop.f32.mrb[0].mxu0
      %v1151 = vpop.f32.mrb[0].mxu0
      %v1152 = vadd.f32 0.0, %v1151
      %v1153 = vpop.f32.mrb[0].mxu0
      %1154 = vdwg.mxu0
      %1155 = vmatprep.subr.bf16.mxu0 0
      %1156 = vmatpush1.bf16.msra.mxu0 %v850
      %1157 = vmatprep.subr.bf16.mxu0 0
      %1158 = vmatpush1.bf16.msra.mxu0 %v853
      %1159 = vmatprep.subr.bf16.mxu0 0
      %1160 = vmatpush1.bf16.msra.mxu0 %v856
      %1161 = vmatprep.subr.bf16.mxu0 0
      %1162 = vmatpush1.bf16.msra.mxu0 %v859
      %1163 = vmatprep.subr.bf16.mxu0 0
      %1164 = vmatpush1.bf16.msra.mxu0 %v862
      %1165 = vmatprep.subr.bf16.mxu0 0
      %1166 = vmatpush1.bf16.msra.mxu0 %v865
      %1167 = vmatprep.subr.bf16.mxu0 0
      %1168 = vmatpush1.bf16.msra.mxu0 %v868
      %1169 = vmatprep.subr.bf16.mxu0 0
      %1170 = vmatpush1.bf16.msra.mxu0 %v871
      %1171 = vmatprep.subr.bf16.mxu0 0
      %1172 = vmatpush1.bf16.msra.mxu0 0
      %1173 = vmatprep.subr.bf16.mxu0 0
      %1174 = vmatpush1.bf16.msra.mxu0 0
      %1175 = vmatprep.subr.bf16.mxu0 0
      %1176 = vmatpush1.bf16.msra.mxu0 0
      %1177 = vmatprep.subr.bf16.mxu0 0
      %1178 = vmatpush1.bf16.msra.mxu0 0
      %1179 = vmatprep.subr.bf16.mxu0 0
      %1180 = vmatpush1.bf16.msra.mxu0 0
      %1181 = vmatprep.subr.bf16.mxu0 0
      %1182 = vmatpush1.bf16.msra.mxu0 0
      %1183 = vmatprep.subr.bf16.mxu0 0
      %1184 = vmatpush1.bf16.msra.mxu0 0
      %1185 = vmatprep.subr.bf16.mxu0 0
      %1186 = vmatpush1.bf16.msra.mxu0 0
      %1187 = vmatprep.mubr.bf16.mxu0 0
      %1188 = vmatmul.mubr.bf16.gmra.mrb[0].mxu0 %v538
      %v1189 = vpop.f32.mrb[0].mxu0
      %v1190 = vadd.f32 %v1125, %v1189
      %v1191 = vpop.f32.mrb[0].mxu0
      %v1192 = vpop.f32.mrb[0].mxu0
      %v1193 = vadd.f32 %v1128, %v1192
      %v1194 = vpop.f32.mrb[0].mxu0
      %1195 = vmatprep.mubr.bf16.mxu0 0
      %1196 = vmatmul.mubr.bf16.gmra.mrb[0].mxu0 %v541
      %v1197 = vpop.f32.mrb[0].mxu0
      %v1198 = vadd.f32 %v1133, %v1197
      %v1199 = vpop.f32.mrb[0].mxu0
      %v1200 = vpop.f32.mrb[0].mxu0
      %v1201 = vadd.f32 %v1136, %v1200
      %v1202 = vpop.f32.mrb[0].mxu0
      %1203 = vmatprep.mubr.bf16.mxu0 0
      %1204 = vmatmul.mubr.bf16.gmra.mrb[0].mxu0 %v544
      %v1205 = vpop.f32.mrb[0].mxu0
      %v1206 = vadd.f32 %v1141, %v1205
      %v1207 = vpop.f32.mrb[0].mxu0
      %v1208 = vpop.f32.mrb[0].mxu0
      %v1209 = vadd.f32 %v1144, %v1208
      %v1210 = vpop.f32.mrb[0].mxu0
      %1211 = vmatprep.mubr.bf16.mxu0 0
      %1212 = vmatmul.mubr.bf16.gmra.mrb[0].mxu0 %v547
      %v1213 = vpop.f32.mrb[0].mxu0
      %v1214 = vadd.f32 %v1149, %v1213
      %v1215 = vpop.f32.mrb[0].mxu0
      %v1216 = vpop.f32.mrb[0].mxu0
      %v1217 = vadd.f32 %v1152, %v1216
      %v1218 = vpop.f32.mrb[0].mxu0
      %1219 = vdwg.mxu0
      %v1236 = vunpack.c.l.b16 %v172
      %v1237 = vunpack.c.h.b16 %v172
      %v1238 = vunpack.c.l.b16 %v173
      %v1239 = vunpack.c.l.b16 %v174
      %v1240 = vunpack.c.h.b16 %v174
      %v1241 = vunpack.c.l.b16 %v175
      %v1242 = vunpack.c.l.b16 %v176
      %v1243 = vunpack.c.h.b16 %v176
      %v1244 = vunpack.c.l.b16 %v177
      %v1245 = vunpack.c.l.b16 %v178
      %v1246 = vunpack.c.h.b16 %v178
      %v1247 = vunpack.c.l.b16 %v179
      %v1248 = vunpack.c.l.b16 %v180
      %v1249 = vunpack.c.h.b16 %v180
      %v1250 = vunpack.c.l.b16 %v181
      %v1251 = vunpack.c.l.b16 %v182
      %v1252 = vunpack.c.h.b16 %v182
      %v1253 = vunpack.c.l.b16 %v183
      %v1254 = vunpack.c.l.b16 %v184
      %v1255 = vunpack.c.h.b16 %v184
      %v1256 = vunpack.c.l.b16 %v185
      %v1257 = vunpack.c.l.b16 %v186
      %v1258 = vunpack.c.h.b16 %v186
      %v1259 = vunpack.c.l.b16 %v187
      %v1260 = vpack.c.b16 %v1239, %v1236
      %v1261 = vpack.c.b16 %v1240, %v1237
      %v1262 = vpack.c.b16 %v1241, %v1238
      %v1263 = vpack.c.b16 %v1245, %v1242
      %v1264 = vpack.c.b16 %v1246, %v1243
      %v1265 = vpack.c.b16 %v1247, %v1244
      %v1266 = vpack.c.b16 %v1251, %v1248
      %v1267 = vpack.c.b16 %v1252, %v1249
      %v1268 = vpack.c.b16 %v1253, %v1250
      %v1269 = vpack.c.b16 %v1257, %v1254
      %v1270 = vpack.c.b16 %v1258, %v1255
      %v1271 = vpack.c.b16 %v1259, %v1256
      %v1380 = vunpack.c.l.b16 %v208
      %v1381 = vunpack.c.h.b16 %v208
      %v1382 = vunpack.c.l.b16 %v209
      %v1383 = vunpack.c.l.b16 %v210
      %v1384 = vunpack.c.h.b16 %v210
      %v1385 = vunpack.c.l.b16 %v211
      %v1386 = vunpack.c.l.b16 %v212
      %v1387 = vunpack.c.h.b16 %v212
      %v1388 = vunpack.c.l.b16 %v213
      %v1389 = vunpack.c.l.b16 %v214
      %v1390 = vunpack.c.h.b16 %v214
      %v1391 = vunpack.c.l.b16 %v215
      %v1392 = vunpack.c.l.b16 %v216
      %v1393 = vunpack.c.h.b16 %v216
      %v1394 = vunpack.c.l.b16 %v217
      %v1395 = vunpack.c.l.b16 %v218
      %v1396 = vunpack.c.h.b16 %v218
      %v1397 = vunpack.c.l.b16 %v219
      %v1398 = vunpack.c.l.b16 %v220
      %v1399 = vunpack.c.h.b16 %v220
      %v1400 = vunpack.c.l.b16 %v221
      %v1401 = vunpack.c.l.b16 %v222
      %v1402 = vunpack.c.h.b16 %v222
      %v1403 = vunpack.c.l.b16 %v223
      %v1404 = vunpack.c.l.b16 %v224
      %v1405 = vunpack.c.h.b16 %v224
      %v1406 = vunpack.c.l.b16 %v225
      %v1407 = vunpack.c.l.b16 %v226
      %v1408 = vunpack.c.h.b16 %v226
      %v1409 = vunpack.c.l.b16 %v227
      %v1410 = vunpack.c.l.b16 %v228
      %v1411 = vunpack.c.h.b16 %v228
      %v1412 = vunpack.c.l.b16 %v229
      %v1413 = vunpack.c.l.b16 %v230
      %v1414 = vunpack.c.h.b16 %v230
      %v1415 = vunpack.c.l.b16 %v231
      %v1416 = vunpack.c.l.b16 %v232
      %v1417 = vunpack.c.h.b16 %v232
      %v1418 = vunpack.c.l.b16 %v233
      %v1419 = vunpack.c.l.b16 %v234
      %v1420 = vunpack.c.h.b16 %v234
      %v1421 = vunpack.c.l.b16 %v235
      %v1422 = vunpack.c.l.b16 %v236
      %v1423 = vunpack.c.h.b16 %v236
      %v1424 = vunpack.c.l.b16 %v237
      %v1425 = vunpack.c.l.b16 %v238
      %v1426 = vunpack.c.h.b16 %v238
      %v1427 = vunpack.c.l.b16 %v239
      %v1428 = vunpack.c.l.b16 %v240
      %v1429 = vunpack.c.h.b16 %v240
      %v1430 = vunpack.c.l.b16 %v241
      %v1431 = vunpack.c.l.b16 %v242
      %v1432 = vunpack.c.h.b16 %v242
      %v1433 = vunpack.c.l.b16 %v243
      %v1434 = vunpack.c.l.b16 %v244
      %v1435 = vunpack.c.h.b16 %v244
      %v1436 = vunpack.c.l.b16 %v245
      %v1437 = vunpack.c.l.b16 %v246
      %v1438 = vunpack.c.h.b16 %v246
      %v1439 = vunpack.c.l.b16 %v247
      %v1440 = vunpack.c.l.b16 %v248
      %v1441 = vunpack.c.h.b16 %v248
      %v1442 = vunpack.c.l.b16 %v249
      %v1443 = vunpack.c.l.b16 %v250
      %v1444 = vunpack.c.h.b16 %v250
      %v1445 = vunpack.c.l.b16 %v251
      %v1446 = vunpack.c.l.b16 %v252
      %v1447 = vunpack.c.h.b16 %v252
      %v1448 = vunpack.c.l.b16 %v253
      %v1449 = vunpack.c.l.b16 %v254
      %v1450 = vunpack.c.h.b16 %v254
      %v1451 = vunpack.c.l.b16 %v255
      %v1452 = vunpack.c.l.b16 %v256
      %v1453 = vunpack.c.h.b16 %v256
      %v1454 = vunpack.c.l.b16 %v257
      %v1455 = vunpack.c.l.b16 %v258
      %v1456 = vunpack.c.h.b16 %v258
      %v1457 = vunpack.c.l.b16 %v259
      %v1458 = vunpack.c.l.b16 %v260
      %v1459 = vunpack.c.h.b16 %v260
      %v1460 = vunpack.c.l.b16 %v261
      %v1461 = vunpack.c.l.b16 %v262
      %v1462 = vunpack.c.h.b16 %v262
      %v1463 = vunpack.c.l.b16 %v263
      %v1464 = vunpack.c.l.b16 %v264
      %v1465 = vunpack.c.h.b16 %v264
      %v1466 = vunpack.c.l.b16 %v265
      %v1467 = vunpack.c.l.b16 %v266
      %v1468 = vunpack.c.h.b16 %v266
      %v1469 = vunpack.c.l.b16 %v267
      %v1470 = vunpack.c.l.b16 %v268
      %v1471 = vunpack.c.h.b16 %v268
      %v1472 = vunpack.c.l.b16 %v269
      %v1473 = vunpack.c.l.b16 %v270
      %v1474 = vunpack.c.h.b16 %v270
      %v1475 = vunpack.c.l.b16 %v271
      %v1476 = vunpack.c.l.b16 %v272
      %v1477 = vunpack.c.h.b16 %v272
      %v1478 = vunpack.c.l.b16 %v273
      %v1479 = vunpack.c.l.b16 %v274
      %v1480 = vunpack.c.h.b16 %v274
      %v1481 = vunpack.c.l.b16 %v275
      %v1482 = vunpack.c.l.b16 %v276
      %v1483 = vunpack.c.h.b16 %v276
      %v1484 = vunpack.c.l.b16 %v277
      %v1485 = vunpack.c.l.b16 %v278
      %v1486 = vunpack.c.h.b16 %v278
      %v1487 = vunpack.c.l.b16 %v279
      %v1488 = vunpack.c.l.b16 %v280
      %v1489 = vunpack.c.h.b16 %v280
      %v1490 = vunpack.c.l.b16 %v281
      %v1491 = vunpack.c.l.b16 %v282
      %v1492 = vunpack.c.h.b16 %v282
      %v1493 = vunpack.c.l.b16 %v283
      %v1494 = vunpack.c.l.b16 %v284
      %v1495 = vunpack.c.h.b16 %v284
      %v1496 = vunpack.c.l.b16 %v285
      %v1497 = vunpack.c.l.b16 %v286
      %v1498 = vunpack.c.h.b16 %v286
      %v1499 = vunpack.c.l.b16 %v287
      %v1500 = vunpack.c.l.b16 %v288
      %v1501 = vunpack.c.h.b16 %v288
      %v1502 = vunpack.c.l.b16 %v289
      %v1503 = vunpack.c.l.b16 %v290
      %v1504 = vunpack.c.h.b16 %v290
      %v1505 = vunpack.c.l.b16 %v291
      %v1506 = vunpack.c.l.b16 %v292
      %v1507 = vunpack.c.h.b16 %v292
      %v1508 = vunpack.c.l.b16 %v293
      %v1509 = vunpack.c.l.b16 %v294
      %v1510 = vunpack.c.h.b16 %v294
      %v1511 = vunpack.c.l.b16 %v295
      %v1512 = vunpack.c.l.b16 %v296
      %v1513 = vunpack.c.h.b16 %v296
      %v1514 = vunpack.c.l.b16 %v297
      %v1515 = vunpack.c.l.b16 %v298
      %v1516 = vunpack.c.h.b16 %v298
      %v1517 = vunpack.c.l.b16 %v299
      %v1518 = vunpack.c.l.b16 %v300
      %v1519 = vunpack.c.h.b16 %v300
      %v1520 = vunpack.c.l.b16 %v301
      %v1521 = vunpack.c.l.b16 %v302
      %v1522 = vunpack.c.h.b16 %v302
      %v1523 = vunpack.c.l.b16 %v303
      %v1524 = vpack.c.b16 %v1383, %v1380
      %v1525 = vpack.c.b16 %v1384, %v1381
      %v1526 = vpack.c.b16 %v1385, %v1382
      %v1527 = vpack.c.b16 %v1389, %v1386
      %v1528 = vpack.c.b16 %v1390, %v1387
      %v1529 = vpack.c.b16 %v1391, %v1388
      %v1530 = vpack.c.b16 %v1395, %v1392
      %v1531 = vpack.c.b16 %v1396, %v1393
      %v1532 = vpack.c.b16 %v1397, %v1394
      %v1533 = vpack.c.b16 %v1401, %v1398
      %v1534 = vpack.c.b16 %v1402, %v1399
      %v1535 = vpack.c.b16 %v1403, %v1400
      %v1536 = vpack.c.b16 %v1407, %v1404
      %v1537 = vpack.c.b16 %v1408, %v1405
      %v1538 = vpack.c.b16 %v1409, %v1406
      %v1539 = vpack.c.b16 %v1413, %v1410
      %v1540 = vpack.c.b16 %v1414, %v1411
      %v1541 = vpack.c.b16 %v1415, %v1412
      %v1542 = vpack.c.b16 %v1419, %v1416
      %v1543 = vpack.c.b16 %v1420, %v1417
      %v1544 = vpack.c.b16 %v1421, %v1418
      %v1545 = vpack.c.b16 %v1425, %v1422
      %v1546 = vpack.c.b16 %v1426, %v1423
      %v1547 = vpack.c.b16 %v1427, %v1424
      %v1548 = vpack.c.b16 %v1431, %v1428
      %v1549 = vpack.c.b16 %v1432, %v1429
      %v1550 = vpack.c.b16 %v1433, %v1430
      %v1551 = vpack.c.b16 %v1437, %v1434
      %v1552 = vpack.c.b16 %v1438, %v1435
      %v1553 = vpack.c.b16 %v1439, %v1436
      %v1554 = vpack.c.b16 %v1443, %v1440
      %v1555 = vpack.c.b16 %v1444, %v1441
      %v1556 = vpack.c.b16 %v1445, %v1442
      %v1557 = vpack.c.b16 %v1449, %v1446
      %v1558 = vpack.c.b16 %v1450, %v1447
      %v1559 = vpack.c.b16 %v1451, %v1448
      %v1560 = vpack.c.b16 %v1455, %v1452
      %v1561 = vpack.c.b16 %v1456, %v1453
      %v1562 = vpack.c.b16 %v1457, %v1454
      %v1563 = vpack.c.b16 %v1461, %v1458
      %v1564 = vpack.c.b16 %v1462, %v1459
      %v1565 = vpack.c.b16 %v1463, %v1460
      %v1566 = vpack.c.b16 %v1467, %v1464
      %v1567 = vpack.c.b16 %v1468, %v1465
      %v1568 = vpack.c.b16 %v1469, %v1466
      %v1569 = vpack.c.b16 %v1473, %v1470
      %v1570 = vpack.c.b16 %v1474, %v1471
      %v1571 = vpack.c.b16 %v1475, %v1472
      %v1572 = vpack.c.b16 %v1479, %v1476
      %v1573 = vpack.c.b16 %v1480, %v1477
      %v1574 = vpack.c.b16 %v1481, %v1478
      %v1575 = vpack.c.b16 %v1485, %v1482
      %v1576 = vpack.c.b16 %v1486, %v1483
      %v1577 = vpack.c.b16 %v1487, %v1484
      %v1578 = vpack.c.b16 %v1491, %v1488
      %v1579 = vpack.c.b16 %v1492, %v1489
      %v1580 = vpack.c.b16 %v1493, %v1490
      %v1581 = vpack.c.b16 %v1497, %v1494
      %v1582 = vpack.c.b16 %v1498, %v1495
      %v1583 = vpack.c.b16 %v1499, %v1496
      %v1584 = vpack.c.b16 %v1503, %v1500
      %v1585 = vpack.c.b16 %v1504, %v1501
      %v1586 = vpack.c.b16 %v1505, %v1502
      %v1587 = vpack.c.b16 %v1509, %v1506
      %v1588 = vpack.c.b16 %v1510, %v1507
      %v1589 = vpack.c.b16 %v1511, %v1508
      %v1590 = vpack.c.b16 %v1515, %v1512
      %v1591 = vpack.c.b16 %v1516, %v1513
      %v1592 = vpack.c.b16 %v1517, %v1514
      %v1593 = vpack.c.b16 %v1521, %v1518
      %v1594 = vpack.c.b16 %v1522, %v1519
      %v1595 = vpack.c.b16 %v1523, %v1520
      %1668 = vmatprep.subr.bf16.mxu0 %v1525
      %1669 = vmatpush1.bf16.msra.mxu0 %v1524
      %1670 = vmatprep.subr.bf16.mxu0 %v1528
      %1671 = vmatpush1.bf16.msra.mxu0 %v1527
      %1672 = vmatprep.subr.bf16.mxu0 %v1531
      %1673 = vmatpush1.bf16.msra.mxu0 %v1530
      %1674 = vmatprep.subr.bf16.mxu0 %v1534
      %1675 = vmatpush1.bf16.msra.mxu0 %v1533
      %1676 = vmatprep.subr.bf16.mxu0 %v1537
      %1677 = vmatpush1.bf16.msra.mxu0 %v1536
      %1678 = vmatprep.subr.bf16.mxu0 %v1540
      %1679 = vmatpush1.bf16.msra.mxu0 %v1539
      %1680 = vmatprep.subr.bf16.mxu0 %v1543
      %1681 = vmatpush1.bf16.msra.mxu0 %v1542
      %1682 = vmatprep.subr.bf16.mxu0 %v1546
      %1683 = vmatpush1.bf16.msra.mxu0 %v1545
      %1684 = vmatprep.subr.bf16.mxu0 %v1549
      %1685 = vmatpush1.bf16.msra.mxu0 %v1548
      %1686 = vmatprep.subr.bf16.mxu0 %v1552
      %1687 = vmatpush1.bf16.msra.mxu0 %v1551
      %1688 = vmatprep.subr.bf16.mxu0 %v1555
      %1689 = vmatpush1.bf16.msra.mxu0 %v1554
      %1690 = vmatprep.subr.bf16.mxu0 %v1558
      %1691 = vmatpush1.bf16.msra.mxu0 %v1557
      %1692 = vmatprep.subr.bf16.mxu0 %v1561
      %1693 = vmatpush1.bf16.msra.mxu0 %v1560
      %1694 = vmatprep.subr.bf16.mxu0 %v1564
      %1695 = vmatpush1.bf16.msra.mxu0 %v1563
      %1696 = vmatprep.subr.bf16.mxu0 %v1567
      %1697 = vmatpush1.bf16.msra.mxu0 %v1566
      %1698 = vmatprep.subr.bf16.mxu0 %v1570
      %1699 = vmatpush1.bf16.msra.mxu0 %v1569
      %1700 = vmatprep.mubr.bf16.mxu0 %v1261
      %1701 = vmatmul.mubr.bf16.gmra.mrb[0].mxu0 %v1260
      %v1702 = vpop.f32.mrb[0].mxu0
      %v1703 = vadd.f32 %v1052, %v1702
      %v1704 = vpop.f32.mrb[0].mxu0
      %v1705 = vadd.f32 %v1054, %v1704
      %v1706 = vpop.f32.mrb[0].mxu0
      %v1707 = vadd.f32 %v1056, %v1706
      %v1708 = vpop.f32.mrb[0].mxu0
      %v1709 = vadd.f32 %v1058, %v1708
      %1710 = vmatprep.mubr.bf16.mxu0 %v1264
      %1711 = vmatmul.mubr.bf16.gmra.mrb[0].mxu0 %v1263
      %v1712 = vpop.f32.mrb[0].mxu0
      %v1713 = vadd.f32 %v1062, %v1712
      %v1714 = vpop.f32.mrb[0].mxu0
      %v1715 = vadd.f32 %v1064, %v1714
      %v1716 = vpop.f32.mrb[0].mxu0
      %v1717 = vadd.f32 %v1066, %v1716
      %v1718 = vpop.f32.mrb[0].mxu0
      %v1719 = vadd.f32 %v1068, %v1718
      %1720 = vmatprep.mubr.bf16.mxu0 %v1267
      %1721 = vmatmul.mubr.bf16.gmra.mrb[0].mxu0 %v1266
      %v1722 = vpop.f32.mrb[0].mxu0
      %v1723 = vadd.f32 %v1072, %v1722
      %v1724 = vpop.f32.mrb[0].mxu0
      %v1725 = vadd.f32 %v1074, %v1724
      %v1726 = vpop.f32.mrb[0].mxu0
      %v1727 = vadd.f32 %v1076, %v1726
      %v1728 = vpop.f32.mrb[0].mxu0
      %v1729 = vadd.f32 %v1078, %v1728
      %1730 = vmatprep.mubr.bf16.mxu0 %v1270
      %1731 = vmatmul.mubr.bf16.gmra.mrb[0].mxu0 %v1269
      %v1732 = vpop.f32.mrb[0].mxu0
      %v1733 = vadd.f32 %v1082, %v1732
      %v1734 = vpop.f32.mrb[0].mxu0
      %v1735 = vadd.f32 %v1084, %v1734
      %v1736 = vpop.f32.mrb[0].mxu0
      %v1737 = vadd.f32 %v1086, %v1736
      %v1738 = vpop.f32.mrb[0].mxu0
      %v1739 = vadd.f32 %v1088, %v1738
      %1740 = vdwg.mxu0
      %1741 = vmatprep.subr.bf16.mxu0 %v1573
      %1742 = vmatpush1.bf16.msra.mxu0 %v1572
      %1743 = vmatprep.subr.bf16.mxu0 %v1576
      %1744 = vmatpush1.bf16.msra.mxu0 %v1575
      %1745 = vmatprep.subr.bf16.mxu0 %v1579
      %1746 = vmatpush1.bf16.msra.mxu0 %v1578
      %1747 = vmatprep.subr.bf16.mxu0 %v1582
      %1748 = vmatpush1.bf16.msra.mxu0 %v1581
      %1749 = vmatprep.subr.bf16.mxu0 %v1585
      %1750 = vmatpush1.bf16.msra.mxu0 %v1584
      %1751 = vmatprep.subr.bf16.mxu0 %v1588
      %1752 = vmatpush1.bf16.msra.mxu0 %v1587
      %1753 = vmatprep.subr.bf16.mxu0 %v1591
      %1754 = vmatpush1.bf16.msra.mxu0 %v1590
      %1755 = vmatprep.subr.bf16.mxu0 %v1594
      %1756 = vmatpush1.bf16.msra.mxu0 %v1593
      %1757 = vmatprep.subr.bf16.mxu0 0
      %1758 = vmatpush1.bf16.msra.mxu0 0
      %1759 = vmatprep.subr.bf16.mxu0 0
      %1760 = vmatpush1.bf16.msra.mxu0 0
      %1761 = vmatprep.subr.bf16.mxu0 0
      %1762 = vmatpush1.bf16.msra.mxu0 0
      %1763 = vmatprep.subr.bf16.mxu0 0
      %1764 = vmatpush1.bf16.msra.mxu0 0
      %1765 = vmatprep.subr.bf16.mxu0 0
      %1766 = vmatpush1.bf16.msra.mxu0 0
      %1767 = vmatprep.subr.bf16.mxu0 0
      %1768 = vmatpush1.bf16.msra.mxu0 0
      %1769 = vmatprep.subr.bf16.mxu0 0
      %1770 = vmatpush1.bf16.msra.mxu0 0
      %1771 = vmatprep.subr.bf16.mxu0 0
      %1772 = vmatpush1.bf16.msra.mxu0 0
      %1773 = vmatprep.mubr.bf16.mxu0 0
      %1774 = vmatmul.mubr.bf16.gmra.mrb[0].mxu0 %v1262
      %v1775 = vpop.f32.mrb[0].mxu0
      %v1776 = vadd.f32 %v1703, %v1775
      %v1777 = vpop.f32.mrb[0].mxu0
      %v1778 = vadd.f32 %v1705, %v1777
      %v1779 = vpop.f32.mrb[0].mxu0
      %v1780 = vadd.f32 %v1707, %v1779
      %v1781 = vpop.f32.mrb[0].mxu0
      %v1782 = vadd.f32 %v1709, %v1781
      %1783 = vmatprep.mubr.bf16.mxu0 0
      %1784 = vmatmul.mubr.bf16.gmra.mrb[0].mxu0 %v1265
      %v1785 = vpop.f32.mrb[0].mxu0
      %v1786 = vadd.f32 %v1713, %v1785
      %v1787 = vpop.f32.mrb[0].mxu0
      %v1788 = vadd.f32 %v1715, %v1787
      %v1789 = vpop.f32.mrb[0].mxu0
      %v1790 = vadd.f32 %v1717, %v1789
      %v1791 = vpop.f32.mrb[0].mxu0
      %v1792 = vadd.f32 %v1719, %v1791
      %1793 = vmatprep.mubr.bf16.mxu0 0
      %1794 = vmatmul.mubr.bf16.gmra.mrb[0].mxu0 %v1268
      %v1795 = vpop.f32.mrb[0].mxu0
      %v1796 = vadd.f32 %v1723, %v1795
      %v1797 = vpop.f32.mrb[0].mxu0
      %v1798 = vadd.f32 %v1725, %v1797
      %v1799 = vpop.f32.mrb[0].mxu0
      %v1800 = vadd.f32 %v1727, %v1799
      %v1801 = vpop.f32.mrb[0].mxu0
      %v1802 = vadd.f32 %v1729, %v1801
      %1803 = vmatprep.mubr.bf16.mxu0 0
      %1804 = vmatmul.mubr.bf16.gmra.mrb[0].mxu0 %v1271
      %v1805 = vpop.f32.mrb[0].mxu0
      %v1806 = vadd.f32 %v1733, %v1805
      %v1807 = vpop.f32.mrb[0].mxu0
      %v1808 = vadd.f32 %v1735, %v1807
      %v1809 = vpop.f32.mrb[0].mxu0
      %v1810 = vadd.f32 %v1737, %v1809
      %v1811 = vpop.f32.mrb[0].mxu0
      %v1812 = vadd.f32 %v1739, %v1811
      %1813 = vdwg.mxu0
      %1814 = vmatprep.subr.bf16.mxu0 0
      %1815 = vmatpush1.bf16.msra.mxu0 %v1526
      %1816 = vmatprep.subr.bf16.mxu0 0
      %1817 = vmatpush1.bf16.msra.mxu0 %v1529
      %1818 = vmatprep.subr.bf16.mxu0 0
      %1819 = vmatpush1.bf16.msra.mxu0 %v1532
      %1820 = vmatprep.subr.bf16.mxu0 0
      %1821 = vmatpush1.bf16.msra.mxu0 %v1535
      %1822 = vmatprep.subr.bf16.mxu0 0
      %1823 = vmatpush1.bf16.msra.mxu0 %v1538
      %1824 = vmatprep.subr.bf16.mxu0 0
      %1825 = vmatpush1.bf16.msra.mxu0 %v1541
      %1826 = vmatprep.subr.bf16.mxu0 0
      %1827 = vmatpush1.bf16.msra.mxu0 %v1544
      %1828 = vmatprep.subr.bf16.mxu0 0
      %1829 = vmatpush1.bf16.msra.mxu0 %v1547
      %1830 = vmatprep.subr.bf16.mxu0 0
      %1831 = vmatpush1.bf16.msra.mxu0 %v1550
      %1832 = vmatprep.subr.bf16.mxu0 0
      %1833 = vmatpush1.bf16.msra.mxu0 %v1553
      %1834 = vmatprep.subr.bf16.mxu0 0
      %1835 = vmatpush1.bf16.msra.mxu0 %v1556
      %1836 = vmatprep.subr.bf16.mxu0 0
      %1837 = vmatpush1.bf16.msra.mxu0 %v1559
      %1838 = vmatprep.subr.bf16.mxu0 0
      %1839 = vmatpush1.bf16.msra.mxu0 %v1562
      %1840 = vmatprep.subr.bf16.mxu0 0
      %1841 = vmatpush1.bf16.msra.mxu0 %v1565
      %1842 = vmatprep.subr.bf16.mxu0 0
      %1843 = vmatpush1.bf16.msra.mxu0 %v1568
      %1844 = vmatprep.subr.bf16.mxu0 0
      %1845 = vmatpush1.bf16.msra.mxu0 %v1571
      %1846 = vmatprep.mubr.bf16.mxu0 %v1261
      %1847 = vmatmul.mubr.bf16.gmra.mrb[0].mxu0 %v1260
      %v1848 = vpop.f32.mrb[0].mxu0
      %v1849 = vadd.f32 %v1190, %v1848
      %v1850 = vpop.f32.mrb[0].mxu0
      %v1851 = vpop.f32.mrb[0].mxu0
      %v1852 = vadd.f32 %v1193, %v1851
      %v1853 = vpop.f32.mrb[0].mxu0
      %1854 = vmatprep.mubr.bf16.mxu0 %v1264
      %1855 = vmatmul.mubr.bf16.gmra.mrb[0].mxu0 %v1263
      %v1856 = vpop.f32.mrb[0].mxu0
      %v1857 = vadd.f32 %v1198, %v1856
      %v1858 = vpop.f32.mrb[0].mxu0
      %v1859 = vpop.f32.mrb[0].mxu0
      %v1860 = vadd.f32 %v1201, %v1859
      %v1861 = vpop.f32.mrb[0].mxu0
      %1862 = vmatprep.mubr.bf16.mxu0 %v1267
      %1863 = vmatmul.mubr.bf16.gmra.mrb[0].mxu0 %v1266
      %v1864 = vpop.f32.mrb[0].mxu0
      %v1865 = vadd.f32 %v1206, %v1864
      %v1866 = vpop.f32.mrb[0].mxu0
      %v1867 = vpop.f32.mrb[0].mxu0
      %v1868 = vadd.f32 %v1209, %v1867
      %v1869 = vpop.f32.mrb[0].mxu0
      %1870 = vmatprep.mubr.bf16.mxu0 %v1270
      %1871 = vmatmul.mubr.bf16.gmra.mrb[0].mxu0 %v1269
      %v1872 = vpop.f32.mrb[0].mxu0
      %v1873 = vadd.f32 %v1214, %v1872
      %v1874 = vpop.f32.mrb[0].mxu0
      %v1875 = vpop.f32.mrb[0].mxu0
      %v1876 = vadd.f32 %v1217, %v1875
      %v1877 = vpop.f32.mrb[0].mxu0
      %1878 = vdwg.mxu0
      %1879 = vmatprep.subr.bf16.mxu0 0
      %1880 = vmatpush1.bf16.msra.mxu0 %v1574
      %1881 = vmatprep.subr.bf16.mxu0 0
      %1882 = vmatpush1.bf16.msra.mxu0 %v1577
      %1883 = vmatprep.subr.bf16.mxu0 0
      %1884 = vmatpush1.bf16.msra.mxu0 %v1580
      %1885 = vmatprep.subr.bf16.mxu0 0
      %1886 = vmatpush1.bf16.msra.mxu0 %v1583
      %1887 = vmatprep.subr.bf16.mxu0 0
      %1888 = vmatpush1.bf16.msra.mxu0 %v1586
      %1889 = vmatprep.subr.bf16.mxu0 0
      %1890 = vmatpush1.bf16.msra.mxu0 %v1589
      %1891 = vmatprep.subr.bf16.mxu0 0
      %1892 = vmatpush1.bf16.msra.mxu0 %v1592
      %1893 = vmatprep.subr.bf16.mxu0 0
      %1894 = vmatpush1.bf16.msra.mxu0 %v1595
      %1895 = vmatprep.subr.bf16.mxu0 0
      %1896 = vmatpush1.bf16.msra.mxu0 0
      %1897 = vmatprep.subr.bf16.mxu0 0
      %1898 = vmatpush1.bf16.msra.mxu0 0
      %1899 = vmatprep.subr.bf16.mxu0 0
      %1900 = vmatpush1.bf16.msra.mxu0 0
      %1901 = vmatprep.subr.bf16.mxu0 0
      %1902 = vmatpush1.bf16.msra.mxu0 0
      %1903 = vmatprep.subr.bf16.mxu0 0
      %1904 = vmatpush1.bf16.msra.mxu0 0
      %1905 = vmatprep.subr.bf16.mxu0 0
      %1906 = vmatpush1.bf16.msra.mxu0 0
      %1907 = vmatprep.subr.bf16.mxu0 0
      %1908 = vmatpush1.bf16.msra.mxu0 0
      %1909 = vmatprep.subr.bf16.mxu0 0
      %1910 = vmatpush1.bf16.msra.mxu0 0
      %1911 = vmatprep.mubr.bf16.mxu0 0
      %1912 = vmatmul.mubr.bf16.gmra.mrb[0].mxu0 %v1262
      %v1913 = vpop.f32.mrb[0].mxu0
      %v1914 = vadd.f32 %v1849, %v1913
      %v1915 = vpop.f32.mrb[0].mxu0
      %v1916 = vpop.f32.mrb[0].mxu0
      %v1917 = vadd.f32 %v1852, %v1916
      %v1918 = vpop.f32.mrb[0].mxu0
      %1919 = vmatprep.mubr.bf16.mxu0 0
      %1920 = vmatmul.mubr.bf16.gmra.mrb[0].mxu0 %v1265
      %v1921 = vpop.f32.mrb[0].mxu0
      %v1922 = vadd.f32 %v1857, %v1921
      %v1923 = vpop.f32.mrb[0].mxu0
      %v1924 = vpop.f32.mrb[0].mxu0
      %v1925 = vadd.f32 %v1860, %v1924
      %v1926 = vpop.f32.mrb[0].mxu0
      %1927 = vmatprep.mubr.bf16.mxu0 0
      %1928 = vmatmul.mubr.bf16.gmra.mrb[0].mxu0 %v1268
      %v1929 = vpop.f32.mrb[0].mxu0
      %v1930 = vadd.f32 %v1865, %v1929
      %v1931 = vpop.f32.mrb[0].mxu0
      %v1932 = vpop.f32.mrb[0].mxu0
      %v1933 = vadd.f32 %v1868, %v1932
      %v1934 = vpop.f32.mrb[0].mxu0
      %1935 = vmatprep.mubr.bf16.mxu0 0
      %1936 = vmatmul.mubr.bf16.gmra.mrb[0].mxu0 %v1271
      %v1937 = vpop.f32.mrb[0].mxu0
      %v1938 = vadd.f32 %v1873, %v1937
      %v1939 = vpop.f32.mrb[0].mxu0
      %v1940 = vpop.f32.mrb[0].mxu0
      %v1941 = vadd.f32 %v1876, %v1940
      %v1942 = vpop.f32.mrb[0].mxu0
      %1943 = vdwg.mxu0
      %v1948 = vunpack.c.l.b16 %v188
      %v1949 = vunpack.c.h.b16 %v188
      %v1950 = vunpack.c.l.b16 %v189
      %v1951 = vunpack.c.l.b16 %v190
      %v1952 = vunpack.c.h.b16 %v190
      %v1953 = vunpack.c.l.b16 %v191
      %v1954 = vpack.c.b16 %v1951, %v1948
      %v1955 = vpack.c.b16 %v1952, %v1949
      %v1956 = vpack.c.b16 %v1953, %v1950
      %v2056 = vunpack.c.l.b16 %v400
      %v2057 = vunpack.c.h.b16 %v400
      %v2058 = vunpack.c.l.b16 %v401
      %v2059 = vunpack.c.l.b16 %v402
      %v2060 = vunpack.c.h.b16 %v402
      %v2061 = vunpack.c.l.b16 %v403
      %v2062 = vunpack.c.l.b16 %v404
      %v2063 = vunpack.c.h.b16 %v404
      %v2064 = vunpack.c.l.b16 %v405
      %v2065 = vunpack.c.l.b16 %v406
      %v2066 = vunpack.c.h.b16 %v406
      %v2067 = vunpack.c.l.b16 %v407
      %v2068 = vunpack.c.l.b16 %v408
      %v2069 = vunpack.c.h.b16 %v408
      %v2070 = vunpack.c.l.b16 %v409
      %v2071 = vunpack.c.l.b16 %v410
      %v2072 = vunpack.c.h.b16 %v410
      %v2073 = vunpack.c.l.b16 %v411
      %v2074 = vunpack.c.l.b16 %v412
      %v2075 = vunpack.c.h.b16 %v412
      %v2076 = vunpack.c.l.b16 %v413
      %v2077 = vunpack.c.l.b16 %v414
      %v2078 = vunpack.c.h.b16 %v414
      %v2079 = vunpack.c.l.b16 %v415
      %v2080 = vunpack.c.l.b16 %v416
      %v2081 = vunpack.c.h.b16 %v416
      %v2082 = vunpack.c.l.b16 %v417
      %v2083 = vunpack.c.l.b16 %v418
      %v2084 = vunpack.c.h.b16 %v418
      %v2085 = vunpack.c.l.b16 %v419
      %v2086 = vunpack.c.l.b16 %v420
      %v2087 = vunpack.c.h.b16 %v420
      %v2088 = vunpack.c.l.b16 %v421
      %v2089 = vunpack.c.l.b16 %v422
      %v2090 = vunpack.c.h.b16 %v422
      %v2091 = vunpack.c.l.b16 %v423
      %v2092 = vunpack.c.l.b16 %v424
      %v2093 = vunpack.c.h.b16 %v424
      %v2094 = vunpack.c.l.b16 %v425
      %v2095 = vunpack.c.l.b16 %v426
      %v2096 = vunpack.c.h.b16 %v426
      %v2097 = vunpack.c.l.b16 %v427
      %v2098 = vunpack.c.l.b16 %v428
      %v2099 = vunpack.c.h.b16 %v428
      %v2100 = vunpack.c.l.b16 %v429
      %v2101 = vunpack.c.l.b16 %v430
      %v2102 = vunpack.c.h.b16 %v430
      %v2103 = vunpack.c.l.b16 %v431
      %v2104 = vunpack.c.l.b16 %v432
      %v2105 = vunpack.c.h.b16 %v432
      %v2106 = vunpack.c.l.b16 %v433
      %v2107 = vunpack.c.l.b16 %v434
      %v2108 = vunpack.c.h.b16 %v434
      %v2109 = vunpack.c.l.b16 %v435
      %v2110 = vunpack.c.l.b16 %v436
      %v2111 = vunpack.c.h.b16 %v436
      %v2112 = vunpack.c.l.b16 %v437
      %v2113 = vunpack.c.l.b16 %v438
      %v2114 = vunpack.c.h.b16 %v438
      %v2115 = vunpack.c.l.b16 %v439
      %v2116 = vunpack.c.l.b16 %v440
      %v2117 = vunpack.c.h.b16 %v440
      %v2118 = vunpack.c.l.b16 %v441
      %v2119 = vunpack.c.l.b16 %v442
      %v2120 = vunpack.c.h.b16 %v442
      %v2121 = vunpack.c.l.b16 %v443
      %v2122 = vunpack.c.l.b16 %v444
      %v2123 = vunpack.c.h.b16 %v444
      %v2124 = vunpack.c.l.b16 %v445
      %v2125 = vunpack.c.l.b16 %v446
      %v2126 = vunpack.c.h.b16 %v446
      %v2127 = vunpack.c.l.b16 %v447
      %v2128 = vunpack.c.l.b16 %v448
      %v2129 = vunpack.c.h.b16 %v448
      %v2130 = vunpack.c.l.b16 %v449
      %v2131 = vunpack.c.l.b16 %v450
      %v2132 = vunpack.c.h.b16 %v450
      %v2133 = vunpack.c.l.b16 %v451
      %v2134 = vunpack.c.l.b16 %v452
      %v2135 = vunpack.c.h.b16 %v452
      %v2136 = vunpack.c.l.b16 %v453
      %v2137 = vunpack.c.l.b16 %v454
      %v2138 = vunpack.c.h.b16 %v454
      %v2139 = vunpack.c.l.b16 %v455
      %v2140 = vunpack.c.l.b16 %v456
      %v2141 = vunpack.c.h.b16 %v456
      %v2142 = vunpack.c.l.b16 %v457
      %v2143 = vunpack.c.l.b16 %v458
      %v2144 = vunpack.c.h.b16 %v458
      %v2145 = vunpack.c.l.b16 %v459
      %v2146 = vunpack.c.l.b16 %v460
      %v2147 = vunpack.c.h.b16 %v460
      %v2148 = vunpack.c.l.b16 %v461
      %v2149 = vunpack.c.l.b16 %v462
      %v2150 = vunpack.c.h.b16 %v462
      %v2151 = vunpack.c.l.b16 %v463
      %v2152 = vunpack.c.l.b16 %v464
      %v2153 = vunpack.c.h.b16 %v464
      %v2154 = vunpack.c.l.b16 %v465
      %v2155 = vunpack.c.l.b16 %v466
      %v2156 = vunpack.c.h.b16 %v466
      %v2157 = vunpack.c.l.b16 %v467
      %v2158 = vunpack.c.l.b16 %v468
      %v2159 = vunpack.c.h.b16 %v468
      %v2160 = vunpack.c.l.b16 %v469
      %v2161 = vunpack.c.l.b16 %v470
      %v2162 = vunpack.c.h.b16 %v470
      %v2163 = vunpack.c.l.b16 %v471
      %v2164 = vunpack.c.l.b16 %v472
      %v2165 = vunpack.c.h.b16 %v472
      %v2166 = vunpack.c.l.b16 %v473
      %v2167 = vunpack.c.l.b16 %v474
      %v2168 = vunpack.c.h.b16 %v474
      %v2169 = vunpack.c.l.b16 %v475
      %v2170 = vunpack.c.l.b16 %v476
      %v2171 = vunpack.c.h.b16 %v476
      %v2172 = vunpack.c.l.b16 %v477
      %v2173 = vunpack.c.l.b16 %v478
      %v2174 = vunpack.c.h.b16 %v478
      %v2175 = vunpack.c.l.b16 %v479
      %v2176 = vunpack.c.l.b16 %v480
      %v2177 = vunpack.c.h.b16 %v480
      %v2178 = vunpack.c.l.b16 %v481
      %v2179 = vunpack.c.l.b16 %v482
      %v2180 = vunpack.c.h.b16 %v482
      %v2181 = vunpack.c.l.b16 %v483
      %v2182 = vunpack.c.l.b16 %v484
      %v2183 = vunpack.c.h.b16 %v484
      %v2184 = vunpack.c.l.b16 %v485
      %v2185 = vunpack.c.l.b16 %v486
      %v2186 = vunpack.c.h.b16 %v486
      %v2187 = vunpack.c.l.b16 %v487
      %v2188 = vunpack.c.l.b16 %v488
      %v2189 = vunpack.c.h.b16 %v488
      %v2190 = vunpack.c.l.b16 %v489
      %v2191 = vunpack.c.l.b16 %v490
      %v2192 = vunpack.c.h.b16 %v490
      %v2193 = vunpack.c.l.b16 %v491
      %v2194 = vunpack.c.l.b16 %v492
      %v2195 = vunpack.c.h.b16 %v492
      %v2196 = vunpack.c.l.b16 %v493
      %v2197 = vunpack.c.l.b16 %v494
      %v2198 = vunpack.c.h.b16 %v494
      %v2199 = vunpack.c.l.b16 %v495
      %v2200 = vpack.c.b16 %v2059, %v2056
      %v2201 = vpack.c.b16 %v2060, %v2057
      %v2202 = vpack.c.b16 %v2061, %v2058
      %v2203 = vpack.c.b16 %v2065, %v2062
      %v2204 = vpack.c.b16 %v2066, %v2063
      %v2205 = vpack.c.b16 %v2067, %v2064
      %v2206 = vpack.c.b16 %v2071, %v2068
      %v2207 = vpack.c.b16 %v2072, %v2069
      %v2208 = vpack.c.b16 %v2073, %v2070
      %v2209 = vpack.c.b16 %v2077, %v2074
      %v2210 = vpack.c.b16 %v2078, %v2075
      %v2211 = vpack.c.b16 %v2079, %v2076
      %v2212 = vpack.c.b16 %v2083, %v2080
      %v2213 = vpack.c.b16 %v2084, %v2081
      %v2214 = vpack.c.b16 %v2085, %v2082
      %v2215 = vpack.c.b16 %v2089, %v2086
      %v2216 = vpack.c.b16 %v2090, %v2087
      %v2217 = vpack.c.b16 %v2091, %v2088
      %v2218 = vpack.c.b16 %v2095, %v2092
      %v2219 = vpack.c.b16 %v2096, %v2093
      %v2220 = vpack.c.b16 %v2097, %v2094
      %v2221 = vpack.c.b16 %v2101, %v2098
      %v2222 = vpack.c.b16 %v2102, %v2099
      %v2223 = vpack.c.b16 %v2103, %v2100
      %v2224 = vpack.c.b16 %v2107, %v2104
      %v2225 = vpack.c.b16 %v2108, %v2105
      %v2226 = vpack.c.b16 %v2109, %v2106
      %v2227 = vpack.c.b16 %v2113, %v2110
      %v2228 = vpack.c.b16 %v2114, %v2111
      %v2229 = vpack.c.b16 %v2115, %v2112
      %v2230 = vpack.c.b16 %v2119, %v2116
      %v2231 = vpack.c.b16 %v2120, %v2117
      %v2232 = vpack.c.b16 %v2121, %v2118
      %v2233 = vpack.c.b16 %v2125, %v2122
      %v2234 = vpack.c.b16 %v2126, %v2123
      %v2235 = vpack.c.b16 %v2127, %v2124
      %v2236 = vpack.c.b16 %v2131, %v2128
      %v2237 = vpack.c.b16 %v2132, %v2129
      %v2238 = vpack.c.b16 %v2133, %v2130
      %v2239 = vpack.c.b16 %v2137, %v2134
      %v2240 = vpack.c.b16 %v2138, %v2135
      %v2241 = vpack.c.b16 %v2139, %v2136
      %v2242 = vpack.c.b16 %v2143, %v2140
      %v2243 = vpack.c.b16 %v2144, %v2141
      %v2244 = vpack.c.b16 %v2145, %v2142
      %v2245 = vpack.c.b16 %v2149, %v2146
      %v2246 = vpack.c.b16 %v2150, %v2147
      %v2247 = vpack.c.b16 %v2151, %v2148
      %v2248 = vpack.c.b16 %v2155, %v2152
      %v2249 = vpack.c.b16 %v2156, %v2153
      %v2250 = vpack.c.b16 %v2157, %v2154
      %v2251 = vpack.c.b16 %v2161, %v2158
      %v2252 = vpack.c.b16 %v2162, %v2159
      %v2253 = vpack.c.b16 %v2163, %v2160
      %v2254 = vpack.c.b16 %v2167, %v2164
      %v2255 = vpack.c.b16 %v2168, %v2165
      %v2256 = vpack.c.b16 %v2169, %v2166
      %v2257 = vpack.c.b16 %v2173, %v2170
      %v2258 = vpack.c.b16 %v2174, %v2171
      %v2259 = vpack.c.b16 %v2175, %v2172
      %v2260 = vpack.c.b16 %v2179, %v2176
      %v2261 = vpack.c.b16 %v2180, %v2177
      %v2262 = vpack.c.b16 %v2181, %v2178
      %v2263 = vpack.c.b16 %v2185, %v2182
      %v2264 = vpack.c.b16 %v2186, %v2183
      %v2265 = vpack.c.b16 %v2187, %v2184
      %v2266 = vpack.c.b16 %v2191, %v2188
      %v2267 = vpack.c.b16 %v2192, %v2189
      %v2268 = vpack.c.b16 %v2193, %v2190
      %v2269 = vpack.c.b16 %v2197, %v2194
      %v2270 = vpack.c.b16 %v2198, %v2195
      %v2271 = vpack.c.b16 %v2199, %v2196
      %2344 = vmatprep.subr.bf16.mxu0 %v2201
      %2345 = vmatpush1.bf16.msra.mxu0 %v2200
      %2346 = vmatprep.subr.bf16.mxu0 %v2204
      %2347 = vmatpush1.bf16.msra.mxu0 %v2203
      %2348 = vmatprep.subr.bf16.mxu0 %v2207
      %2349 = vmatpush1.bf16.msra.mxu0 %v2206
      %2350 = vmatprep.subr.bf16.mxu0 %v2210
      %2351 = vmatpush1.bf16.msra.mxu0 %v2209
      %2352 = vmatprep.subr.bf16.mxu0 %v2213
      %2353 = vmatpush1.bf16.msra.mxu0 %v2212
      %2354 = vmatprep.subr.bf16.mxu0 %v2216
      %2355 = vmatpush1.bf16.msra.mxu0 %v2215
      %2356 = vmatprep.subr.bf16.mxu0 %v2219
      %2357 = vmatpush1.bf16.msra.mxu0 %v2218
      %2358 = vmatprep.subr.bf16.mxu0 %v2222
      %2359 = vmatpush1.bf16.msra.mxu0 %v2221
      %2360 = vmatprep.subr.bf16.mxu0 %v2225
      %2361 = vmatpush1.bf16.msra.mxu0 %v2224
      %2362 = vmatprep.subr.bf16.mxu0 %v2228
      %2363 = vmatpush1.bf16.msra.mxu0 %v2227
      %2364 = vmatprep.subr.bf16.mxu0 %v2231
      %2365 = vmatpush1.bf16.msra.mxu0 %v2230
      %2366 = vmatprep.subr.bf16.mxu0 %v2234
      %2367 = vmatpush1.bf16.msra.mxu0 %v2233
      %2368 = vmatprep.subr.bf16.mxu0 %v2237
      %2369 = vmatpush1.bf16.msra.mxu0 %v2236
      %2370 = vmatprep.subr.bf16.mxu0 %v2240
      %2371 = vmatpush1.bf16.msra.mxu0 %v2239
      %2372 = vmatprep.subr.bf16.mxu0 %v2243
      %2373 = vmatpush1.bf16.msra.mxu0 %v2242
      %2374 = vmatprep.subr.bf16.mxu0 %v2246
      %2375 = vmatpush1.bf16.msra.mxu0 %v2245
      %2376 = vmatprep.mubr.bf16.mxu0 %v1264
      %2377 = vmatmul.mubr.bf16.gmra.mrb[0].mxu0 %v1263
      %v2378 = vpop.f32.mrb[0].mxu0
      %v2379 = vadd.f32 0.0, %v2378
      %v2380 = vpop.f32.mrb[0].mxu0
      %v2381 = vadd.f32 0.0, %v2380
      %v2382 = vpop.f32.mrb[0].mxu0
      %v2383 = vadd.f32 0.0, %v2382
      %v2384 = vpop.f32.mrb[0].mxu0
      %v2385 = vadd.f32 0.0, %v2384
      %2386 = vmatprep.mubr.bf16.mxu0 %v1267
      %2387 = vmatmul.mubr.bf16.gmra.mrb[0].mxu0 %v1266
      %v2388 = vpop.f32.mrb[0].mxu0
      %v2389 = vadd.f32 0.0, %v2388
      %v2390 = vpop.f32.mrb[0].mxu0
      %v2391 = vadd.f32 0.0, %v2390
      %v2392 = vpop.f32.mrb[0].mxu0
      %v2393 = vadd.f32 0.0, %v2392
      %v2394 = vpop.f32.mrb[0].mxu0
      %v2395 = vadd.f32 0.0, %v2394
      %2396 = vmatprep.mubr.bf16.mxu0 %v1270
      %2397 = vmatmul.mubr.bf16.gmra.mrb[0].mxu0 %v1269
      %v2398 = vpop.f32.mrb[0].mxu0
      %v2399 = vadd.f32 0.0, %v2398
      %v2400 = vpop.f32.mrb[0].mxu0
      %v2401 = vadd.f32 0.0, %v2400
      %v2402 = vpop.f32.mrb[0].mxu0
      %v2403 = vadd.f32 0.0, %v2402
      %v2404 = vpop.f32.mrb[0].mxu0
      %v2405 = vadd.f32 0.0, %v2404
      %2406 = vmatprep.mubr.bf16.mxu0 %v1955
      %2407 = vmatmul.mubr.bf16.gmra.mrb[0].mxu0 %v1954
      %v2408 = vpop.f32.mrb[0].mxu0
      %v2409 = vadd.f32 0.0, %v2408
      %v2410 = vpop.f32.mrb[0].mxu0
      %v2411 = vadd.f32 0.0, %v2410
      %v2412 = vpop.f32.mrb[0].mxu0
      %v2413 = vadd.f32 0.0, %v2412
      %v2414 = vpop.f32.mrb[0].mxu0
      %v2415 = vadd.f32 0.0, %v2414
      %2416 = vdwg.mxu0
      %2417 = vmatprep.subr.bf16.mxu0 %v2249
      %2418 = vmatpush1.bf16.msra.mxu0 %v2248
      %2419 = vmatprep.subr.bf16.mxu0 %v2252
      %2420 = vmatpush1.bf16.msra.mxu0 %v2251
      %2421 = vmatprep.subr.bf16.mxu0 %v2255
      %2422 = vmatpush1.bf16.msra.mxu0 %v2254
      %2423 = vmatprep.subr.bf16.mxu0 %v2258
      %2424 = vmatpush1.bf16.msra.mxu0 %v2257
      %2425 = vmatprep.subr.bf16.mxu0 %v2261
      %2426 = vmatpush1.bf16.msra.mxu0 %v2260
      %2427 = vmatprep.subr.bf16.mxu0 %v2264
      %2428 = vmatpush1.bf16.msra.mxu0 %v2263
      %2429 = vmatprep.subr.bf16.mxu0 %v2267
      %2430 = vmatpush1.bf16.msra.mxu0 %v2266
      %2431 = vmatprep.subr.bf16.mxu0 %v2270
      %2432 = vmatpush1.bf16.msra.mxu0 %v2269
      %2433 = vmatprep.subr.bf16.mxu0 0
      %2434 = vmatpush1.bf16.msra.mxu0 0
      %2435 = vmatprep.subr.bf16.mxu0 0
      %2436 = vmatpush1.bf16.msra.mxu0 0
      %2437 = vmatprep.subr.bf16.mxu0 0
      %2438 = vmatpush1.bf16.msra.mxu0 0
      %2439 = vmatprep.subr.bf16.mxu0 0
      %2440 = vmatpush1.bf16.msra.mxu0 0
      %2441 = vmatprep.subr.bf16.mxu0 0
      %2442 = vmatpush1.bf16.msra.mxu0 0
      %2443 = vmatprep.subr.bf16.mxu0 0
      %2444 = vmatpush1.bf16.msra.mxu0 0
      %2445 = vmatprep.subr.bf16.mxu0 0
      %2446 = vmatpush1.bf16.msra.mxu0 0
      %2447 = vmatprep.subr.bf16.mxu0 0
      %2448 = vmatpush1.bf16.msra.mxu0 0
      %2449 = vmatprep.mubr.bf16.mxu0 0
      %2450 = vmatmul.mubr.bf16.gmra.mrb[0].mxu0 %v1265
      %v2451 = vpop.f32.mrb[0].mxu0
      %v2452 = vadd.f32 %v2379, %v2451
      %v2453 = vpop.f32.mrb[0].mxu0
      %v2454 = vadd.f32 %v2381, %v2453
      %v2455 = vpop.f32.mrb[0].mxu0
      %v2456 = vadd.f32 %v2383, %v2455
      %v2457 = vpop.f32.mrb[0].mxu0
      %v2458 = vadd.f32 %v2385, %v2457
      %2459 = vmatprep.mubr.bf16.mxu0 0
      %2460 = vmatmul.mubr.bf16.gmra.mrb[0].mxu0 %v1268
      %v2461 = vpop.f32.mrb[0].mxu0
      %v2462 = vadd.f32 %v2389, %v2461
      %v2463 = vpop.f32.mrb[0].mxu0
      %v2464 = vadd.f32 %v2391, %v2463
      %v2465 = vpop.f32.mrb[0].mxu0
      %v2466 = vadd.f32 %v2393, %v2465
      %v2467 = vpop.f32.mrb[0].mxu0
      %v2468 = vadd.f32 %v2395, %v2467
      %2469 = vmatprep.mubr.bf16.mxu0 0
      %2470 = vmatmul.mubr.bf16.gmra.mrb[0].mxu0 %v1271
      %v2471 = vpop.f32.mrb[0].mxu0
      %v2472 = vadd.f32 %v2399, %v2471
      %v2473 = vpop.f32.mrb[0].mxu0
      %v2474 = vadd.f32 %v2401, %v2473
      %v2475 = vpop.f32.mrb[0].mxu0
      %v2476 = vadd.f32 %v2403, %v2475
      %v2477 = vpop.f32.mrb[0].mxu0
      %v2478 = vadd.f32 %v2405, %v2477
      %2479 = vmatprep.mubr.bf16.mxu0 0
      %2480 = vmatmul.mubr.bf16.gmra.mrb[0].mxu0 %v1956
      %v2481 = vpop.f32.mrb[0].mxu0
      %v2482 = vadd.f32 %v2409, %v2481
      %v2483 = vpop.f32.mrb[0].mxu0
      %v2484 = vadd.f32 %v2411, %v2483
      %v2485 = vpop.f32.mrb[0].mxu0
      %v2486 = vadd.f32 %v2413, %v2485
      %v2487 = vpop.f32.mrb[0].mxu0
      %v2488 = vadd.f32 %v2415, %v2487
      %2489 = vdwg.mxu0
      %2490 = vmatprep.subr.bf16.mxu0 0
      %2491 = vmatpush1.bf16.msra.mxu0 %v2202
      %2492 = vmatprep.subr.bf16.mxu0 0
      %2493 = vmatpush1.bf16.msra.mxu0 %v2205
      %2494 = vmatprep.subr.bf16.mxu0 0
      %2495 = vmatpush1.bf16.msra.mxu0 %v2208
      %2496 = vmatprep.subr.bf16.mxu0 0
      %2497 = vmatpush1.bf16.msra.mxu0 %v2211
      %2498 = vmatprep.subr.bf16.mxu0 0
      %2499 = vmatpush1.bf16.msra.mxu0 %v2214
      %2500 = vmatprep.subr.bf16.mxu0 0
      %2501 = vmatpush1.bf16.msra.mxu0 %v2217
      %2502 = vmatprep.subr.bf16.mxu0 0
      %2503 = vmatpush1.bf16.msra.mxu0 %v2220
      %2504 = vmatprep.subr.bf16.mxu0 0
      %2505 = vmatpush1.bf16.msra.mxu0 %v2223
      %2506 = vmatprep.subr.bf16.mxu0 0
      %2507 = vmatpush1.bf16.msra.mxu0 %v2226
      %2508 = vmatprep.subr.bf16.mxu0 0
      %2509 = vmatpush1.bf16.msra.mxu0 %v2229
      %2510 = vmatprep.subr.bf16.mxu0 0
      %2511 = vmatpush1.bf16.msra.mxu0 %v2232
      %2512 = vmatprep.subr.bf16.mxu0 0
      %2513 = vmatpush1.bf16.msra.mxu0 %v2235
      %2514 = vmatprep.subr.bf16.mxu0 0
      %2515 = vmatpush1.bf16.msra.mxu0 %v2238
      %2516 = vmatprep.subr.bf16.mxu0 0
      %2517 = vmatpush1.bf16.msra.mxu0 %v2241
      %2518 = vmatprep.subr.bf16.mxu0 0
      %2519 = vmatpush1.bf16.msra.mxu0 %v2244
      %2520 = vmatprep.subr.bf16.mxu0 0
      %2521 = vmatpush1.bf16.msra.mxu0 %v2247
      %2522 = vmatprep.mubr.bf16.mxu0 %v1264
      %2523 = vmatmul.mubr.bf16.gmra.mrb[0].mxu0 %v1263
      %v2524 = vpop.f32.mrb[0].mxu0
      %v2525 = vadd.f32 0.0, %v2524
      %v2526 = vpop.f32.mrb[0].mxu0
      %v2527 = vpop.f32.mrb[0].mxu0
      %v2528 = vadd.f32 0.0, %v2527
      %v2529 = vpop.f32.mrb[0].mxu0
      %2530 = vmatprep.mubr.bf16.mxu0 %v1267
      %2531 = vmatmul.mubr.bf16.gmra.mrb[0].mxu0 %v1266
      %v2532 = vpop.f32.mrb[0].mxu0
      %v2533 = vadd.f32 0.0, %v2532
      %v2534 = vpop.f32.mrb[0].mxu0
      %v2535 = vpop.f32.mrb[0].mxu0
      %v2536 = vadd.f32 0.0, %v2535
      %v2537 = vpop.f32.mrb[0].mxu0
      %2538 = vmatprep.mubr.bf16.mxu0 %v1270
      %2539 = vmatmul.mubr.bf16.gmra.mrb[0].mxu0 %v1269
      %v2540 = vpop.f32.mrb[0].mxu0
      %v2541 = vadd.f32 0.0, %v2540
      %v2542 = vpop.f32.mrb[0].mxu0
      %v2543 = vpop.f32.mrb[0].mxu0
      %v2544 = vadd.f32 0.0, %v2543
      %v2545 = vpop.f32.mrb[0].mxu0
      %2546 = vmatprep.mubr.bf16.mxu0 %v1955
      %2547 = vmatmul.mubr.bf16.gmra.mrb[0].mxu0 %v1954
      %v2548 = vpop.f32.mrb[0].mxu0
      %v2549 = vadd.f32 0.0, %v2548
      %v2550 = vpop.f32.mrb[0].mxu0
      %v2551 = vpop.f32.mrb[0].mxu0
      %v2552 = vadd.f32 0.0, %v2551
      %v2553 = vpop.f32.mrb[0].mxu0
      %2554 = vdwg.mxu0
      %2555 = vmatprep.subr.bf16.mxu0 0
      %2556 = vmatpush1.bf16.msra.mxu0 %v2250
      %2557 = vmatprep.subr.bf16.mxu0 0
      %2558 = vmatpush1.bf16.msra.mxu0 %v2253
      %2559 = vmatprep.subr.bf16.mxu0 0
      %2560 = vmatpush1.bf16.msra.mxu0 %v2256
      %2561 = vmatprep.subr.bf16.mxu0 0
      %2562 = vmatpush1.bf16.msra.mxu0 %v2259
      %2563 = vmatprep.subr.bf16.mxu0 0
      %2564 = vmatpush1.bf16.msra.mxu0 %v2262
      %2565 = vmatprep.subr.bf16.mxu0 0
      %2566 = vmatpush1.bf16.msra.mxu0 %v2265
      %2567 = vmatprep.subr.bf16.mxu0 0
      %2568 = vmatpush1.bf16.msra.mxu0 %v2268
      %2569 = vmatprep.subr.bf16.mxu0 0
      %2570 = vmatpush1.bf16.msra.mxu0 %v2271
      %2571 = vmatprep.subr.bf16.mxu0 0
      %2572 = vmatpush1.bf16.msra.mxu0 0
      %2573 = vmatprep.subr.bf16.mxu0 0
      %2574 = vmatpush1.bf16.msra.mxu0 0
      %2575 = vmatprep.subr.bf16.mxu0 0
      %2576 = vmatpush1.bf16.msra.mxu0 0
      %2577 = vmatprep.subr.bf16.mxu0 0
      %2578 = vmatpush1.bf16.msra.mxu0 0
      %2579 = vmatprep.subr.bf16.mxu0 0
      %2580 = vmatpush1.bf16.msra.mxu0 0
      %2581 = vmatprep.subr.bf16.mxu0 0
      %2582 = vmatpush1.bf16.msra.mxu0 0
      %2583 = vmatprep.subr.bf16.mxu0 0
      %2584 = vmatpush1.bf16.msra.mxu0 0
      %2585 = vmatprep.subr.bf16.mxu0 0
      %2586 = vmatpush1.bf16.msra.mxu0 0
      %2587 = vmatprep.mubr.bf16.mxu0 0
      %2588 = vmatmul.mubr.bf16.gmra.mrb[0].mxu0 %v1265
      %v2589 = vpop.f32.mrb[0].mxu0
      %v2590 = vadd.f32 %v2525, %v2589
      %v2591 = vpop.f32.mrb[0].mxu0
      %v2592 = vpop.f32.mrb[0].mxu0
      %v2593 = vadd.f32 %v2528, %v2592
      %v2594 = vpop.f32.mrb[0].mxu0
      %2595 = vmatprep.mubr.bf16.mxu0 0
      %2596 = vmatmul.mubr.bf16.gmra.mrb[0].mxu0 %v1268
      %v2597 = vpop.f32.mrb[0].mxu0
      %v2598 = vadd.f32 %v2533, %v2597
      %v2599 = vpop.f32.mrb[0].mxu0
      %v2600 = vpop.f32.mrb[0].mxu0
      %v2601 = vadd.f32 %v2536, %v2600
      %v2602 = vpop.f32.mrb[0].mxu0
      %2603 = vmatprep.mubr.bf16.mxu0 0
      %2604 = vmatmul.mubr.bf16.gmra.mrb[0].mxu0 %v1271
      %v2605 = vpop.f32.mrb[0].mxu0
      %v2606 = vadd.f32 %v2541, %v2605
      %v2607 = vpop.f32.mrb[0].mxu0
      %v2608 = vpop.f32.mrb[0].mxu0
      %v2609 = vadd.f32 %v2544, %v2608
      %v2610 = vpop.f32.mrb[0].mxu0
      %2611 = vmatprep.mubr.bf16.mxu0 0
      %2612 = vmatmul.mubr.bf16.gmra.mrb[0].mxu0 %v1956
      %v2613 = vpop.f32.mrb[0].mxu0
      %v2614 = vadd.f32 %v2549, %v2613
      %v2615 = vpop.f32.mrb[0].mxu0
      %v2616 = vpop.f32.mrb[0].mxu0
      %v2617 = vadd.f32 %v2552, %v2616
      %v2618 = vpop.f32.mrb[0].mxu0
      %2619 = vdwg.mxu0
      %v2620 = vadd.f32 %v1776, %v2452
      %v2621 = vadd.f32 %v1778, %v2454
      %v2622 = vadd.f32 %v1914, %v2590
      %v2623 = vadd.f32 %v1780, %v2456
      %v2624 = vadd.f32 %v1782, %v2458
      %v2625 = vadd.f32 %v1917, %v2593
      %v2626 = vadd.f32 %v1786, %v2462
      %v2627 = vadd.f32 %v1788, %v2464
      %v2628 = vadd.f32 %v1922, %v2598
      %v2629 = vadd.f32 %v1790, %v2466
      %v2630 = vadd.f32 %v1792, %v2468
      %v2631 = vadd.f32 %v1925, %v2601
      %v2632 = vadd.f32 %v1796, %v2472
      %v2633 = vadd.f32 %v1798, %v2474
      %v2634 = vadd.f32 %v1930, %v2606
      %v2635 = vadd.f32 %v1800, %v2476
      %v2636 = vadd.f32 %v1802, %v2478
      %v2637 = vadd.f32 %v1933, %v2609
      %v2638 = vadd.f32 %v1806, %v2482
      %v2639 = vadd.f32 %v1808, %v2484
      %v2640 = vadd.f32 %v1938, %v2614
      %v2641 = vadd.f32 %v1810, %v2486
      %v2642 = vadd.f32 %v1812, %v2488
      %v2643 = vadd.f32 %v1941, %v2617
      %v2644 = vld [vmem:[%s2] sm:$0x7]
      %v2646 = vlaneseq
      %v2647 = vshrl.u32 %v2646, 7
      %v2648 = vsub.s32 0, %v2647
      %v2649 = vrot.slane %v2644, %v2648
      %v2650 = vlaneseq
      %v2651 = vshrl.u32 %v2650, 7
      %v2652 = vsub.s32 1, %v2651
      %v2653 = vrot.slane %v2644, %v2652
      %v2654 = vlaneseq
      %v2655 = vshrl.u32 %v2654, 7
      %v2656 = vsub.s32 2, %v2655
      %v2657 = vrot.slane %v2644, %v2656
      %v2661 = vadd.f32 %v2620, %v2649
      %v2662 = vadd.f32 %v2621, %v2653
      %v2663 = vadd.f32 %v2622, %v2657
      %v2664 = vadd.f32 %v2623, %v2649
      %v2665 = vadd.f32 %v2624, %v2653
      %v2666 = vadd.f32 %v2625, %v2657
      %v2667 = vadd.f32 %v2626, %v2649
      %v2668 = vadd.f32 %v2627, %v2653
      %v2669 = vadd.f32 %v2628, %v2657
      %v2670 = vadd.f32 %v2629, %v2649
      %v2671 = vadd.f32 %v2630, %v2653
      %v2672 = vadd.f32 %v2631, %v2657
      %v2673 = vadd.f32 %v2632, %v2649
      %v2674 = vadd.f32 %v2633, %v2653
      %v2675 = vadd.f32 %v2634, %v2657
      %v2676 = vadd.f32 %v2635, %v2649
      %v2677 = vadd.f32 %v2636, %v2653
      %v2678 = vadd.f32 %v2637, %v2657
      %v2679 = vadd.f32 %v2638, %v2649
      %v2680 = vadd.f32 %v2639, %v2653
      %v2681 = vadd.f32 %v2640, %v2657
      %v2682 = vadd.f32 %v2641, %v2649
      %v2683 = vadd.f32 %v2642, %v2653
      %v2684 = vadd.f32 %v2643, %v2657
      %vm2685 = vcmp.gt.f32.partialorder %v2661, 0.0
      %vm2686 = vcmp.gt.f32.partialorder %v2662, 0.0
      %vm2687 = vcmp.gt.f32.partialorder %v2663, 0.0
      %vm2688 = vcmp.gt.f32.partialorder %v2664, 0.0
      %vm2689 = vcmp.gt.f32.partialorder %v2665, 0.0
      %vm2690 = vcmp.gt.f32.partialorder %v2666, 0.0
      %vm2691 = vcmp.gt.f32.partialorder %v2667, 0.0
      %vm2692 = vcmp.gt.f32.partialorder %v2668, 0.0
      %vm2693 = vcmp.gt.f32.partialorder %v2669, 0.0
      %vm2694 = vcmp.gt.f32.partialorder %v2670, 0.0
      %vm2695 = vcmp.gt.f32.partialorder %v2671, 0.0
      %vm2696 = vcmp.gt.f32.partialorder %v2672, 0.0
      %vm2697 = vcmp.gt.f32.partialorder %v2673, 0.0
      %vm2698 = vcmp.gt.f32.partialorder %v2674, 0.0
      %vm2699 = vcmp.gt.f32.partialorder %v2675, 0.0
      %vm2700 = vcmp.gt.f32.partialorder %v2676, 0.0
      %vm2701 = vcmp.gt.f32.partialorder %v2677, 0.0
      %vm2702 = vcmp.gt.f32.partialorder %v2678, 0.0
      %vm2703 = vcmp.gt.f32.partialorder %v2679, 0.0
      %vm2704 = vcmp.gt.f32.partialorder %v2680, 0.0
      %vm2705 = vcmp.gt.f32.partialorder %v2681, 0.0
      %vm2706 = vcmp.gt.f32.partialorder %v2682, 0.0
      %vm2707 = vcmp.gt.f32.partialorder %v2683, 0.0
      %vm2708 = vcmp.gt.f32.partialorder %v2684, 0.0
      %v2709 = vmul.f32 %v2661, 0.2
      %v2710 = vmul.f32 %v2662, 0.2
      %v2711 = vmul.f32 %v2663, 0.2
      %v2712 = vmul.f32 %v2664, 0.2
      %v2713 = vmul.f32 %v2665, 0.2
      %v2714 = vmul.f32 %v2666, 0.2
      %v2715 = vmul.f32 %v2667, 0.2
      %v2716 = vmul.f32 %v2668, 0.2
      %v2717 = vmul.f32 %v2669, 0.2
      %v2718 = vmul.f32 %v2670, 0.2
      %v2719 = vmul.f32 %v2671, 0.2
      %v2720 = vmul.f32 %v2672, 0.2
      %v2721 = vmul.f32 %v2673, 0.2
      %v2722 = vmul.f32 %v2674, 0.2
      %v2723 = vmul.f32 %v2675, 0.2
      %v2724 = vmul.f32 %v2676, 0.2
      %v2725 = vmul.f32 %v2677, 0.2
      %v2726 = vmul.f32 %v2678, 0.2
      %v2727 = vmul.f32 %v2679, 0.2
      %v2728 = vmul.f32 %v2680, 0.2
      %v2729 = vmul.f32 %v2681, 0.2
      %v2730 = vmul.f32 %v2682, 0.2
      %v2731 = vmul.f32 %v2683, 0.2
      %v2732 = vmul.f32 %v2684, 0.2
      %v2733 = vsel %vm2685, %v2661, %v2709
      %v2734 = vsel %vm2686, %v2662, %v2710
      %v2735 = vsel %vm2687, %v2663, %v2711
      %v2736 = vsel %vm2688, %v2664, %v2712
      %v2737 = vsel %vm2689, %v2665, %v2713
      %v2738 = vsel %vm2690, %v2666, %v2714
      %v2739 = vsel %vm2691, %v2667, %v2715
      %v2740 = vsel %vm2692, %v2668, %v2716
      %v2741 = vsel %vm2693, %v2669, %v2717
      %v2742 = vsel %vm2694, %v2670, %v2718
      %v2743 = vsel %vm2695, %v2671, %v2719
      %v2744 = vsel %vm2696, %v2672, %v2720
      %v2745 = vsel %vm2697, %v2673, %v2721
      %v2746 = vsel %vm2698, %v2674, %v2722
      %v2747 = vsel %vm2699, %v2675, %v2723
      %v2748 = vsel %vm2700, %v2676, %v2724
      %v2749 = vsel %vm2701, %v2677, %v2725
      %v2750 = vsel %vm2702, %v2678, %v2726
      %v2751 = vsel %vm2703, %v2679, %v2727
      %v2752 = vsel %vm2704, %v2680, %v2728
      %v2753 = vsel %vm2705, %v2681, %v2729
      %v2754 = vsel %vm2706, %v2682, %v2730
      %v2755 = vsel %vm2707, %v2683, %v2731
      %v2756 = vsel %vm2708, %v2684, %v2732
      %v2757 = vpack.c.bf16 %v2736, %v2733
      %v2758 = vpack.c.bf16 %v2737, %v2734
      %v2759 = vpack.c.bf16 %v2738, %v2735
      %v2760 = vpack.c.bf16 %v2742, %v2739
      %v2761 = vpack.c.bf16 %v2743, %v2740
      %v2762 = vpack.c.bf16 %v2744, %v2741
      %v2763 = vpack.c.bf16 %v2748, %v2745
      %v2764 = vpack.c.bf16 %v2749, %v2746
      %v2765 = vpack.c.bf16 %v2750, %v2747
      %v2766 = vpack.c.bf16 %v2754, %v2751
      %v2767 = vpack.c.bf16 %v2755, %v2752
      %v2768 = vpack.c.bf16 %v2756, %v2753
      %v2781 = vunpack.c.l.b16 %v2757
      %v2782 = vunpack.c.l.b16 %v2758
      %v2783 = vunpack.c.l.b16 %v2759
      %v2784 = vunpack.c.h.b16 %v2757
      %v2785 = vunpack.c.h.b16 %v2758
      %v2786 = vunpack.c.h.b16 %v2759
      %v2787 = vunpack.c.l.b16 %v2760
      %v2788 = vunpack.c.l.b16 %v2761
      %v2789 = vunpack.c.l.b16 %v2762
      %v2790 = vunpack.c.h.b16 %v2760
      %v2791 = vunpack.c.h.b16 %v2761
      %v2792 = vunpack.c.h.b16 %v2762
      %v2793 = vunpack.c.l.b16 %v2763
      %v2794 = vunpack.c.l.b16 %v2764
      %v2795 = vunpack.c.l.b16 %v2765
      %v2796 = vunpack.c.h.b16 %v2763
      %v2797 = vunpack.c.h.b16 %v2764
      %v2798 = vunpack.c.h.b16 %v2765
      %v2799 = vunpack.c.l.b16 %v2766
      %v2800 = vunpack.c.l.b16 %v2767
      %v2801 = vunpack.c.l.b16 %v2768
      %v2802 = vunpack.c.h.b16 %v2766
      %v2803 = vunpack.c.h.b16 %v2767
      %v2804 = vunpack.c.h.b16 %v2768
      %v2805 = vpack.c.b16 %v2782, %v2781
      %v2806 = vpack.c.b16 %v2783, %v2783
      %v2807 = vpack.c.b16 %v2785, %v2784
      %v2808 = vpack.c.b16 %v2786, %v2786
      %v2809 = vpack.c.b16 %v2788, %v2787
      %v2810 = vpack.c.b16 %v2789, %v2789
      %v2811 = vpack.c.b16 %v2791, %v2790
      %v2812 = vpack.c.b16 %v2792, %v2792
      %v2813 = vpack.c.b16 %v2794, %v2793
      %v2814 = vpack.c.b16 %v2795, %v2795
      %v2815 = vpack.c.b16 %v2797, %v2796
      %v2816 = vpack.c.b16 %v2798, %v2798
      %v2817 = vpack.c.b16 %v2800, %v2799
      %v2818 = vpack.c.b16 %v2801, %v2801
      %v2819 = vpack.c.b16 %v2803, %v2802
      %v2820 = vpack.c.b16 %v2804, %v2804
      %2837 = vst [vmem:[%s170] sm:$0xff] %v2805
      %2838 = vst [vmem:[%s170 + $0x8] sm:$0xf] %v2806
      %2839 = vst [vmem:[%s170 + $0xc] sm:$0xff] %v2807
      %2840 = vst [vmem:[%s170 + $0x14] sm:$0xf] %v2808
      %2841 = vst [vmem:[%s170 + $0x18] sm:$0xff] %v2809
      %2842 = vst [vmem:[%s170 + $0x20] sm:$0xf] %v2810
      %2843 = vst [vmem:[%s170 + $0x24] sm:$0xff] %v2811
      %2844 = vst [vmem:[%s170 + $0x2c] sm:$0xf] %v2812
      %2845 = vst [vmem:[%s170 + $0x30] sm:$0xff] %v2813
      %2846 = vst [vmem:[%s170 + $0x38] sm:$0xf] %v2814
      %2847 = vst [vmem:[%s170 + $0x3c] sm:$0xff] %v2815
      %2848 = vst [vmem:[%s170 + $0x44] sm:$0xf] %v2816
      %2849 = vst [vmem:[%s170 + $0x48] sm:$0xff] %v2817
      %2850 = vst [vmem:[%s170 + $0x50] sm:$0xf] %v2818
      %2851 = vst [vmem:[%s170 + $0x54] sm:$0xff] %v2819
      %2852 = vst [vmem:[%s170 + $0x5c] sm:$0xf] %v2820
      %p2853 = scmp.lt.s32.totalorder %s14, 1
      %s2854 = scalar_select %p2853, %s14, 1
      %s2855 = smul.addr %s2854, 24
      %s2856 = smul.addr %s2855, 4
      %s2857 = scalar_lea.vmem %s3, %s2856
      // Predicated region
      $region33: #{deap_forward.3} parent=31 // pred_check
        %p2858 = pneg %p100
      $region34: #{deap_forward.3} parent=31 // pred_check_branch
        %2860 = sbr.rel (%p2858) target = $region36
      $region35: #{deap_forward.3} parent=31 // pred_region
        _
      $region36: #{deap_forward.3} parent=31 // pred_fallthru
        _
    $region32: #{deap_forward.3} parent=5 // pred_fallthru
      _
    %p2861 = scmp.le.s32.totalorder 2, %s9
    // Predicated region
    $region37: #{deap_forward.3} parent=5 // pred_check
      %p2862 = pneg %p2861
    $region38: #{deap_forward.3} parent=5 // pred_check_branch
      %2864 = sbr.rel (%p2862) target = $region40
    $region39: #{deap_forward.3} parent=5 // pred_region
      %s2865 = ssub.s32 %s9, 2
      // Predicated region
      $region41: #{deap_forward.3} parent=39 // pred_check
        %p2866 = pneg %p106
      $region42: #{deap_forward.3} parent=39 // pred_check_branch
        %2868 = sbr.rel (%p2866) target = $region44
      $region43: #{deap_forward.3} parent=39 // pred_region
        %p2869 = scmp.lt.s32.totalorder %s15, 1
        %s2870 = scalar_select %p2869, %s15, 1
        %s2871 = smul.addr %s2870, 24
        %s2872 = smul.addr %s2871, 4
        %s2873 = scalar_lea.vmem %s3, %s2872
      $region44: #{deap_forward.3} parent=39 // pred_fallthru
        _
    $region40: #{deap_forward.3} parent=5 // pred_fallthru
      _
  $region6: #{deap_forward.3} parent=0 // loop_footer
    %s13 = sadd.s32 1, %s9
  $region7: #{deap_forward.3} parent=0 // loop_footer_branch
    %8 = sbr.rel target = $region3
  $region8: #{deap_forward.3} parent=0 // loop_exit
    _

</llo_original>
